<compile_context>
chip_gen: v7x
topology: tpu7x:2x2x1
jax: 0.10.0
libtpu: 0.0.40
codegen_flags: <defaults>
</compile_context>

<pallas_src>
import functools

import jax
import jax.numpy as jnp
from jax import lax
from jax.experimental import pallas as pl
from jax.experimental.pallas import tpu as pltpu


def _round_up(x, m):
    return (x + m - 1) // m * m


# ----------------------------------------------------------------------------
# Fused multi-layer LSTM kernel (single gridless invocation, VMEM resident).
# Gate order follows PyTorch: [i, f, g, o]; each gate slice is Hp wide
# (a multiple of 128) so slicing is lane-group aligned.
#
# Layout: x_ref (T*Bp, Ep), y_ref (T*Bp, Hp)  -> timestep t lives at rows
# [t*Bp, (t+1)*Bp), i.e. aligned 8-sublane windows.
# ----------------------------------------------------------------------------
def _lstm_stack_kernel(x_ref, wih0_ref, wihr_ref, whh_ref, b_ref,
                       h0_ref, c0_ref, y_ref, hn_ref, cn_ref, gates_ref,
                       *, num_layers, seq_len, unroll):
    Bp = h0_ref.shape[1]
    Hp = h0_ref.shape[2]

    for l in range(num_layers):                  # static unroll over layers
        # ---- Input projection for ALL timesteps in one MXU matmul, bias
        #      folded in, hoisted out of the sequential recurrence. --------
        if l == 0:
            xin = x_ref[...]                     # (T*Bp, Ep)  embedded input
            w_ih = wih0_ref[...]                 # (Ep, 4Hp)
        else:
            xin = y_ref[...]                     # (T*Bp, Hp)  prev layer out
            w_ih = wihr_ref[l - 1]               # (Hp, 4Hp)
        gates_ref[...] = (jnp.dot(xin, w_ih,
                                  preferred_element_type=jnp.float32)
                          + b_ref[l])            # (T*Bp, 4Hp)

        w_hh = whh_ref[l]                        # (Hp, 4Hp)

        def step(t, carry, w_hh=w_hh):
            h, c = carry
            row = pl.multiple_of(t * Bp, Bp)     # aligned 8-sublane window
            gates = (gates_ref[pl.ds(row, Bp), :]
                     + jnp.dot(h, w_hh, preferred_element_type=jnp.float32))
            i_g = jax.nn.sigmoid(gates[:, 0 * Hp:1 * Hp])
            f_g = jax.nn.sigmoid(gates[:, 1 * Hp:2 * Hp])
            g_g = jnp.tanh(gates[:, 2 * Hp:3 * Hp])
            o_g = jax.nn.sigmoid(gates[:, 3 * Hp:4 * Hp])
            c = f_g * c + i_g * g_g
            h = o_g * jnp.tanh(c)
            y_ref[pl.ds(row, Bp), :] = h         # layer l out / layer l+1 in
            return h, c

        h_fin, c_fin = lax.fori_loop(0, seq_len, step,
                                     (h0_ref[l], c0_ref[l]), unroll=unroll)
        hn_ref[l] = h_fin
        cn_ref[l] = c_fin


def lstm_stack(x, w_ih0, w_ih_rest, w_hh, bias, h0, c0):
    """x: (T*Bp, Ep); w_ih0: (Ep, 4Hp); w_ih_rest: (max(L-1,1), Hp, 4Hp);
       w_hh: (L, Hp, 4Hp); bias: (L, 1, 4Hp); h0/c0: (L, Bp, Hp).
       Returns (y: (T*Bp, Hp), hN: (L, Bp, Hp), cN: (L, Bp, Hp))."""
    TB, _ = x.shape
    L, Bp, Hp = h0.shape
    T = TB // Bp

    kernel = functools.partial(_lstm_stack_kernel, num_layers=L, seq_len=T,
                               unroll=bool(T <= 8))
    vmem = lambda: pl.BlockSpec(memory_space=pltpu.MemorySpace.VMEM)

    return pl.pallas_call(
        kernel,
        in_specs=[vmem() for _ in range(7)],
        out_specs=(vmem(), vmem(), vmem()),
        out_shape=(
            jax.ShapeDtypeStruct((TB, Hp), jnp.float32),
            jax.ShapeDtypeStruct((L, Bp, Hp), jnp.float32),
            jax.ShapeDtypeStruct((L, Bp, Hp), jnp.float32),
        ),
        scratch_shapes=[pltpu.VMEM((TB, 4 * Hp), jnp.float32)],
    )(x, w_ih0, w_ih_rest, w_hh, bias, h0, c0)


# ----------------------------------------------------------------------------
# Final Linear (fc) kernel: tiled (N, Hp) @ (Hp, Vp) + (1, Vp).
# Lane-dense 128-multiple V tiles, parallel grid (pipelines / megacore).
# ----------------------------------------------------------------------------
def _fc_kernel(x_ref, w_ref, b_ref, o_ref):
    o_ref[...] = (jnp.dot(x_ref[...], w_ref[...],
                          preferred_element_type=jnp.float32)
                  + b_ref[...]).astype(o_ref.dtype)


def fc_tiled(x, w, b):
    """x: (N, Hp), w: (Hp, Vp), b: (1, Vp) -> (N, Vp). Vp is a multiple of
       the V tile size by construction (see pack_params)."""
    N, Hp = x.shape
    Vp = w.shape[1]

    tn = N if N <= 256 else 256
    n_pad = _round_up(N, tn)
    if n_pad != N:
        x = jnp.pad(x, ((0, n_pad - N), (0, 0)))
    tv = Vp if Vp <= 512 else 512

    out = pl.pallas_call(
        _fc_kernel,
        grid=(n_pad // tn, Vp // tv),
        in_specs=[
            pl.BlockSpec((tn, Hp), lambda i, j: (i, 0)),
            pl.BlockSpec((Hp, tv), lambda i, j: (0, j)),
            pl.BlockSpec((1, tv), lambda i, j: (0, j)),
        ],
        out_specs=pl.BlockSpec((tn, tv), lambda i, j: (i, j)),
        out_shape=jax.ShapeDtypeStruct((n_pad, Vp), jnp.float32),
        compiler_params=pltpu.CompilerParams(
            dimension_semantics=("parallel", "parallel")),
    )(x, w, b)
    return out[:N] if n_pad != N else out


# ----------------------------------------------------------------------------
# One-time parameter packing: transpose to (in, 4H), pad each gate to a full
# 128-lane group, pad input dims to multiples of 128, pad vocab to the V tile.
# ----------------------------------------------------------------------------
def pack_params(params, num_layers, embed_dim, hidden_dim, vocab_size):
    Ep = _round_up(embed_dim, 128)
    Hp = _round_up(hidden_dim, 128)
    Vp = _round_up(vocab_size, 128)
    if Vp > 512:
        Vp = _round_up(vocab_size, 512)

    def pad_gates(w, in_dim, in_pad):
        # PyTorch layout (4H, in) -> (in_pad, 4*Hp); gates padded independently
        # so [i|f|g|o] slices stay on 128-lane boundaries.
        w = w.T.reshape(in_dim, 4, hidden_dim)
        w = jnp.pad(w, ((0, in_pad - in_dim), (0, 0), (0, Hp - hidden_dim)))
        return w.reshape(in_pad, 4 * Hp)

    def pad_bias(b):
        b = b.reshape(4, hidden_dim)
        b = jnp.pad(b, ((0, 0), (0, Hp - hidden_dim)))
        return b.reshape(1, 4 * Hp)

    packed = {}
    packed["embedding"] = jnp.pad(params["embedding"],
                                  ((0, 0), (0, Ep - embed_dim)))

    packed["w_ih0"] = pad_gates(params["w_ih_0"], embed_dim, Ep)
    if num_layers > 1:
        packed["w_ih_rest"] = jnp.stack(
            [pad_gates(params[f"w_ih_{l}"], hidden_dim, Hp)
             for l in range(1, num_layers)], axis=0)
    else:  # dummy (unused) so the kernel signature is static
        packed["w_ih_rest"] = jnp.zeros((1, Hp, 4 * Hp), jnp.float32)
    packed["w_hh"] = jnp.stack(
        [pad_gates(params[f"w_hh_{l}"], hidden_dim, Hp)
         for l in range(num_layers)], axis=0)
    packed["bias"] = jnp.stack(
        [pad_bias(params[f"b_ih_{l}"] + params[f"b_hh_{l}"])
         for l in range(num_layers)], axis=0)

    packed["w_fc"] = jnp.pad(params["w_fc"].T,
                             ((0, Hp - hidden_dim), (0, Vp - vocab_size)))
    packed["b_fc"] = jnp.pad(params["b_fc"],
                             (0, Vp - vocab_size)).reshape(1, Vp)
    return packed


# ----------------------------------------------------------------------------
# Decoder forward (matches PyTorch Decoder.forward semantics)
# ----------------------------------------------------------------------------
def decoder_forward(trg, hidden, packed):
    """trg: int32 (B, T); hidden = (h0, c0), each (L, B, H).
       Returns (predictions: (B, T, V), (hN, cN) each (L, B, H))."""
    h0, c0 = hidden
    L, B, H = h0.shape
    T = trg.shape[1]
    V = packed["embedding"].shape[0]
    Ep = packed["embedding"].shape[1]
    Hp = packed["w_hh"].shape[1]
    Bp = _round_up(B, 8)

    # TODO(synk): embedding gather (nn.Embedding lookup) stays as plain-JAX
    # glue; padding_idx is handled by zeroing that row at init time.
    emb = jnp.take(packed["embedding"], trg, axis=0)       # (B, T, Ep)
    x = jnp.transpose(emb, (1, 0, 2))                      # time-major (T,B,Ep)
    x = jnp.pad(x, ((0, 0), (0, Bp - B), (0, 0)))          # pad batch sublanes
    x = x.reshape(T * Bp, Ep)                              # flat row layout

    h0p = jnp.pad(h0, ((0, 0), (0, Bp - B), (0, Hp - H)))
    c0p = jnp.pad(c0, ((0, 0), (0, Bp - B), (0, Hp - H)))

    y, hn, cn = lstm_stack(x, packed["w_ih0"], packed["w_ih_rest"],
                           packed["w_hh"], packed["bias"], h0p, c0p)

    logits = fc_tiled(y, packed["w_fc"], packed["b_fc"])   # (T*Bp, Vp)
    logits = logits.reshape(T, Bp, -1)[:, :B, :V]
    predictions = jnp.transpose(logits, (1, 0, 2))         # (B, T, V)
    return predictions, (hn[:, :B, :H], cn[:, :B, :H])


# ----------------------------------------------------------------------------
# Deterministic parameter init (shapes follow nn.Embedding / nn.LSTM / nn.Linear)
# ----------------------------------------------------------------------------
def init_params(key, vocab_size, embed_dim, hidden_dim, num_layers, pad_idx):
    ks = iter(jax.random.split(key, 4 * num_layers + 3))
    params = {}
    emb = jax.random.normal(next(ks), (vocab_size, embed_dim), jnp.float32)
    params["embedding"] = emb.at[pad_idx].set(0.0)   # padding_idx row zeroed

    k = 1.0 / jnp.sqrt(hidden_dim)
    for l in range(num_layers):
        in_dim = embed_dim if l == 0 else hidden_dim
        params[f"w_ih_{l}"] = jax.random.uniform(
            next(ks), (4 * hidden_dim, in_dim), jnp.float32, -k, k)
        params[f"w_hh_{l}"] = jax.random.uniform(
            next(ks), (4 * hidden_dim, hidden_dim), jnp.float32, -k, k)
        params[f"b_ih_{l}"] = jax.random.uniform(
            next(ks), (4 * hidden_dim,), jnp.float32, -k, k)
        params[f"b_hh_{l}"] = jax.random.uniform(
            next(ks), (4 * hidden_dim,), jnp.float32, -k, k)

    params["w_fc"] = jax.random.uniform(
        next(ks), (vocab_size, hidden_dim), jnp.float32, -k, k)
    params["b_fc"] = jax.random.uniform(
        next(ks), (vocab_size,), jnp.float32, -k, k)
    return params


# ----------------------------------------------------------------------------
# Pure-JAX reference (correctness check; highest-precision matmuls)
# ----------------------------------------------------------------------------
def reference_forward(trg, hidden, params, num_layers):
    hi = jax.lax.Precision.HIGHEST
    h0, c0 = hidden
    x = params["embedding"][trg]                   # (B, T, E)
    B, T, _ = x.shape
    H = h0.shape[-1]
    hs, cs = [], []
    for l in range(num_layers):
        w_ih, w_hh = params[f"w_ih_{l}"], params[f"w_hh_{l}"]
        b = params[f"b_ih_{l}"] + params[f"b_hh_{l}"]
        h, c = h0[l], c0[l]
        outs = []
        for t in range(T):
            gates = (jnp.dot(x[:, t], w_ih.T, precision=hi)
                     + jnp.dot(h, w_hh.T, precision=hi) + b)
            i_g = jax.nn.sigmoid(gates[:, 0 * H:1 * H])
            f_g = jax.nn.sigmoid(gates[:, 1 * H:2 * H])
            g_g = jnp.tanh(gates[:, 2 * H:3 * H])
            o_g = jax.nn.sigmoid(gates[:, 3 * H:4 * H])
            c = f_g * c + i_g * g_g
            h = o_g * jnp.tanh(c)
            outs.append(h)
        x = jnp.stack(outs, axis=1)
        hs.append(h)
        cs.append(c)
    preds = jnp.dot(x, params["w_fc"].T, precision=hi) + params["b_fc"]
    return preds, (jnp.stack(hs, 0), jnp.stack(cs, 0))


if __name__ == "__main__":
    VOCAB, EMBED, HIDDEN, LAYERS, PAD = 50, 32, 32, 2, 0
    B, T = 2, 8

    key = jax.random.PRNGKey(0)
    k_par, k_trg, k_h, k_c = jax.random.split(key, 4)

    params = init_params(k_par, VOCAB, EMBED, HIDDEN, LAYERS, PAD)
    packed = jax.block_until_ready(
        pack_params(params, LAYERS, EMBED, HIDDEN, VOCAB))   # packed once

    trg = jax.random.randint(k_trg, (B, T), 0, VOCAB, dtype=jnp.int32)
    h0 = jax.random.normal(k_h, (LAYERS, B, HIDDEN), jnp.float32)
    c0 = jax.random.normal(k_c, (LAYERS, B, HIDDEN), jnp.float32)

    fwd = jax.jit(decoder_forward)
    preds, (h_n, c_n) = fwd(trg, (h0, c0), packed)
    jax.block_until_ready((preds, h_n, c_n))

    assert preds.shape == (B, T, VOCAB)
    assert h_n.shape == (LAYERS, B, HIDDEN) and c_n.shape == (LAYERS, B, HIDDEN)

    ref_p, (ref_h, ref_c) = reference_forward(trg, (h0, c0), params, LAYERS)
    # f32 end-to-end; typically agrees to ~1e-5 — tolerance leaves margin for
    # MXU f32 pass-decomposition differences.
    assert jnp.allclose(preds, ref_p, atol=5e-3, rtol=5e-3)
    assert jnp.allclose(h_n, ref_h, atol=5e-3, rtol=5e-3)
    assert jnp.allclose(c_n, ref_c, atol=5e-3, rtol=5e-3)

    print("KERNEL_OK")
</pallas_src>

<mosaic_0001>
module attributes {stable_mosaic.version = 11 : i64} {
  func.func @_fc_kernel(%arg0: i32, %arg1: i32, %arg2: memref<64x128xf32, #tpu.memory_space<vmem>>, %arg3: memref<128x128xf32, #tpu.memory_space<vmem>>, %arg4: memref<1x128xf32, #tpu.memory_space<vmem>>, %arg5: memref<64x128xf32, #tpu.memory_space<vmem>>) attributes {dimension_semantics = [#tpu.dimension_semantics<parallel>, #tpu.dimension_semantics<parallel>], iteration_bounds = array<i64: 1, 1>, scalar_prefetch = 0 : i64, scratch_operands = 0 : i64, tpu.core_type = #tpu.core_type<tc>, window_params = [{transform_indices = @transform_0, window_bounds = array<i64: 64, 128>}, {transform_indices = @transform_1, window_bounds = array<i64: 128, 128>}, {transform_indices = @transform_2, window_bounds = array<i64: 1, 128>}, {transform_indices = @transform_3, window_bounds = array<i64: 64, 128>}]} {
    %c0 = arith.constant 0 : index
    %c0_0 = arith.constant 0 : index
    %0 = vector.load %arg2[%c0, %c0_0] : memref<64x128xf32, #tpu.memory_space<vmem>>, vector<64x128xf32>
    %c0_1 = arith.constant 0 : index
    %c0_2 = arith.constant 0 : index
    %1 = vector.load %arg3[%c0_1, %c0_2] : memref<128x128xf32, #tpu.memory_space<vmem>>, vector<128x128xf32>
    %cst = arith.constant dense<0.000000e+00> : vector<64x128xf32>
    %2 = tpu.matmul %0, %1, %cst {dimension_numbers = #tpu.dot_dimension_numbers<[1], [0], [0], [1], [0, 0, 1, 1], [], []>} : vector<64x128xf32>, vector<128x128xf32>, vector<64x128xf32> -> vector<64x128xf32>
    %c0_3 = arith.constant 0 : index
    %c0_4 = arith.constant 0 : index
    %3 = vector.load %arg4[%c0_3, %c0_4] : memref<1x128xf32, #tpu.memory_space<vmem>>, vector<1x128xf32>
    %4 = vector.broadcast %3 : vector<1x128xf32> to vector<64x128xf32>
    %5 = arith.addf %2, %4 : vector<64x128xf32>
    %c0_5 = arith.constant 0 : index
    %c0_6 = arith.constant 0 : index
    %6 = vector.load %arg5[%c0_5, %c0_6] : memref<64x128xf32, #tpu.memory_space<vmem>>, vector<64x128xf32>
    tpu.vector_store %arg5[%c0_5, %c0_6], %5 {strides = array<i32>} : memref<64x128xf32, #tpu.memory_space<vmem>>, vector<64x128xf32>,
    return
  }
  func.func @transform_0(%arg0: i32, %arg1: i32) -> (i32, i32) {
    %c0_i32 = arith.constant 0 : i32
    %c0_i32_0 = arith.constant 0 : i32
    return %arg0, %c0_i32 : i32, i32
  }
  func.func @transform_1(%arg0: i32, %arg1: i32) -> (i32, i32) {
    %c0_i32 = arith.constant 0 : i32
    %c0_i32_0 = arith.constant 0 : i32
    return %c0_i32, %arg1 : i32, i32
  }
  func.func @transform_2(%arg0: i32, %arg1: i32) -> (i32, i32) {
    %c0_i32 = arith.constant 0 : i32
    %c0_i32_0 = arith.constant 0 : i32
    return %c0_i32, %arg1 : i32, i32
  }
  func.func @transform_3(%arg0: i32, %arg1: i32) -> (i32, i32) {
    %c0_i32 = arith.constant 0 : i32
    return %arg0, %arg1 : i32, i32
  }
}

module attributes {stable_mosaic.version = 11 : i64} {
  func.func @_lstm_stack_kernel(%arg0: memref<64x128xf32, #tpu.memory_space<vmem>>, %arg1: memref<128x512xf32, #tpu.memory_space<vmem>>, %arg2: memref<1x128x512xf32, #tpu.memory_space<vmem>>, %arg3: memref<2x128x512xf32, #tpu.memory_space<vmem>>, %arg4: memref<2x1x512xf32, #tpu.memory_space<vmem>>, %arg5: memref<2x8x128xf32, #tpu.memory_space<vmem>>, %arg6: memref<2x8x128xf32, #tpu.memory_space<vmem>>, %arg7: memref<64x128xf32, #tpu.memory_space<vmem>>, %arg8: memref<2x8x128xf32, #tpu.memory_space<vmem>>, %arg9: memref<2x8x128xf32, #tpu.memory_space<vmem>>, %arg10: memref<64x512xf32, #tpu.memory_space<vmem>>) attributes {dimension_semantics = [], scalar_prefetch = 0 : i64, scratch_operands = 1 : i64, tpu.core_type = #tpu.core_type<tc>} {
    %c0 = arith.constant 0 : index
    %c0_0 = arith.constant 0 : index
    %0 = vector.load %arg0[%c0, %c0_0] : memref<64x128xf32, #tpu.memory_space<vmem>>, vector<64x128xf32>
    %c0_1 = arith.constant 0 : index
    %c0_2 = arith.constant 0 : index
    %1 = vector.load %arg1[%c0_1, %c0_2] : memref<128x512xf32, #tpu.memory_space<vmem>>, vector<128x512xf32>
    %cst = arith.constant dense<0.000000e+00> : vector<64x512xf32>
    %2 = tpu.matmul %0, %1, %cst {dimension_numbers = #tpu.dot_dimension_numbers<[1], [0], [0], [1], [0, 0, 1, 1], [], []>} : vector<64x128xf32>, vector<128x512xf32>, vector<64x512xf32> -> vector<64x512xf32>
    %c0_3 = arith.constant 0 : index
    %c0_4 = arith.constant 0 : index
    %c0_5 = arith.constant 0 : index
    %3 = vector.load %arg4[%c0_3, %c0_4, %c0_5] : memref<2x1x512xf32, #tpu.memory_space<vmem>>, vector<1x1x512xf32>
    %4 = vector.shape_cast %3 : vector<1x1x512xf32> to vector<1x512xf32>
    %5 = vector.broadcast %4 : vector<1x512xf32> to vector<64x512xf32>
    %6 = arith.addf %2, %5 : vector<64x512xf32>
    %c0_6 = arith.constant 0 : index
    %c0_7 = arith.constant 0 : index
    %7 = vector.load %arg10[%c0_6, %c0_7] : memref<64x512xf32, #tpu.memory_space<vmem>>, vector<64x512xf32>
    tpu.vector_store %arg10[%c0_6, %c0_7], %6 {strides = array<i32>} : memref<64x512xf32, #tpu.memory_space<vmem>>, vector<64x512xf32>,
    %c0_8 = arith.constant 0 : index
    %c0_9 = arith.constant 0 : index
    %c0_10 = arith.constant 0 : index
    %8 = vector.load %arg3[%c0_8, %c0_9, %c0_10] : memref<2x128x512xf32, #tpu.memory_space<vmem>>, vector<1x128x512xf32>
    %9 = vector.shape_cast %8 : vector<1x128x512xf32> to vector<128x512xf32>
    %c0_11 = arith.constant 0 : index
    %c0_12 = arith.constant 0 : index
    %c0_13 = arith.constant 0 : index
    %10 = vector.load %arg5[%c0_11, %c0_12, %c0_13] : memref<2x8x128xf32, #tpu.memory_space<vmem>>, vector<1x8x128xf32>
    %11 = vector.shape_cast %10 : vector<1x8x128xf32> to vector<8x128xf32>
    %c0_14 = arith.constant 0 : index
    %c0_15 = arith.constant 0 : index
    %c0_16 = arith.constant 0 : index
    %12 = vector.load %arg6[%c0_14, %c0_15, %c0_16] : memref<2x8x128xf32, #tpu.memory_space<vmem>>, vector<1x8x128xf32>
    %13 = vector.shape_cast %12 : vector<1x8x128xf32> to vector<8x128xf32>
    %c0_i32 = arith.constant 0 : i32
    %c8_i32 = arith.constant 8 : i32
    %14 = arith.muli %c0_i32, %c8_i32 : i32
    %15 = tpu.assume_multiple %14, 8 : i32
    %16 = arith.index_cast %15 : i32 to index
    %c0_17 = arith.constant 0 : index
    %17 = vector.load %arg10[%16, %c0_17] : memref<64x512xf32, #tpu.memory_space<vmem>>, vector<8x512xf32>
    %cst_18 = arith.constant dense<0.000000e+00> : vector<8x512xf32>
    %18 = tpu.matmul %11, %9, %cst_18 {dimension_numbers = #tpu.dot_dimension_numbers<[1], [0], [0], [1], [0, 0, 1, 1], [], []>} : vector<8x128xf32>, vector<128x512xf32>, vector<8x512xf32> -> vector<8x512xf32>
    %19 = arith.addf %17, %18 : vector<8x512xf32>
    %20 = vector.extract_strided_slice %19 {offsets = [0, 0], sizes = [8, 128], strides = [1, 1]} : vector<8x512xf32> to vector<8x128xf32>
    %21 = arith.negf %20 : vector<8x128xf32>
    %22 = math.exp %21 : vector<8x128xf32>
    %cst_19 = arith.constant 1.000000e+00 : f32
    %23 = vector.broadcast %cst_19 : f32 to vector<8x128xf32>
    %24 = arith.addf %23, %22 : vector<8x128xf32>
    %25 = arith.divf %23, %24 : vector<8x128xf32>
    %26 = vector.extract_strided_slice %19 {offsets = [0, 128], sizes = [8, 128], strides = [1, 1]} : vector<8x512xf32> to vector<8x128xf32>
    %27 = arith.negf %26 : vector<8x128xf32>
    %28 = math.exp %27 : vector<8x128xf32>
    %cst_20 = arith.constant 1.000000e+00 : f32
    %29 = vector.broadcast %cst_20 : f32 to vector<8x128xf32>
    %30 = arith.addf %29, %28 : vector<8x128xf32>
    %31 = arith.divf %29, %30 : vector<8x128xf32>
    %32 = vector.extract_strided_slice %19 {offsets = [0, 256], sizes = [8, 128], strides = [1, 1]} : vector<8x512xf32> to vector<8x128xf32>
    %33 = math.tanh %32 : vector<8x128xf32>
    %34 = vector.extract_strided_slice %19 {offsets = [0, 384], sizes = [8, 128], strides = [1, 1]} : vector<8x512xf32> to vector<8x128xf32>
    %35 = arith.negf %34 : vector<8x128xf32>
    %36 = math.exp %35 : vector<8x128xf32>
    %cst_21 = arith.constant 1.000000e+00 : f32
    %37 = vector.broadcast %cst_21 : f32 to vector<8x128xf32>
    %38 = arith.addf %37, %36 : vector<8x128xf32>
    %39 = arith.divf %37, %38 : vector<8x128xf32>
    %40 = arith.mulf %31, %13 : vector<8x128xf32>
    %41 = arith.mulf %25, %33 : vector<8x128xf32>
    %42 = arith.addf %40, %41 : vector<8x128xf32>
    %43 = math.tanh %42 : vector<8x128xf32>
    %44 = arith.mulf %39, %43 : vector<8x128xf32>
    %45 = arith.index_cast %15 : i32 to index
    %c0_22 = arith.constant 0 : index
    %46 = vector.load %arg7[%45, %c0_22] : memref<64x128xf32, #tpu.memory_space<vmem>>, vector<8x128xf32>
    tpu.vector_store %arg7[%45, %c0_22], %44 {strides = array<i32>} : memref<64x128xf32, #tpu.memory_space<vmem>>, vector<8x128xf32>,
    %c1_i32 = arith.constant 1 : i32
    %c8_i32_23 = arith.constant 8 : i32
    %47 = arith.muli %c1_i32, %c8_i32_23 : i32
    %48 = tpu.assume_multiple %47, 8 : i32
    %49 = arith.index_cast %48 : i32 to index
    %c0_24 = arith.constant 0 : index
    %50 = vector.load %arg10[%49, %c0_24] : memref<64x512xf32, #tpu.memory_space<vmem>>, vector<8x512xf32>
    %cst_25 = arith.constant dense<0.000000e+00> : vector<8x512xf32>
    %51 = tpu.matmul %44, %9, %cst_25 {dimension_numbers = #tpu.dot_dimension_numbers<[1], [0], [0], [1], [0, 0, 1, 1], [], []>} : vector<8x128xf32>, vector<128x512xf32>, vector<8x512xf32> -> vector<8x512xf32>
    %52 = arith.addf %50, %51 : vector<8x512xf32>
    %53 = vector.extract_strided_slice %52 {offsets = [0, 0], sizes = [8, 128], strides = [1, 1]} : vector<8x512xf32> to vector<8x128xf32>
    %54 = arith.negf %53 : vector<8x128xf32>
    %55 = math.exp %54 : vector<8x128xf32>
    %cst_26 = arith.constant 1.000000e+00 : f32
    %56 = vector.broadcast %cst_26 : f32 to vector<8x128xf32>
    %57 = arith.addf %56, %55 : vector<8x128xf32>
    %58 = arith.divf %56, %57 : vector<8x128xf32>
    %59 = vector.extract_strided_slice %52 {offsets = [0, 128], sizes = [8, 128], strides = [1, 1]} : vector<8x512xf32> to vector<8x128xf32>
    %60 = arith.negf %59 : vector<8x128xf32>
    %61 = math.exp %60 : vector<8x128xf32>
    %cst_27 = arith.constant 1.000000e+00 : f32
    %62 = vector.broadcast %cst_27 : f32 to vector<8x128xf32>
    %63 = arith.addf %62, %61 : vector<8x128xf32>
    %64 = arith.divf %62, %63 : vector<8x128xf32>
    %65 = vector.extract_strided_slice %52 {offsets = [0, 256], sizes = [8, 128], strides = [1, 1]} : vector<8x512xf32> to vector<8x128xf32>
    %66 = math.tanh %65 : vector<8x128xf32>
    %67 = vector.extract_strided_slice %52 {offsets = [0, 384], sizes = [8, 128], strides = [1, 1]} : vector<8x512xf32> to vector<8x128xf32>
    %68 = arith.negf %67 : vector<8x128xf32>
    %69 = math.exp %68 : vector<8x128xf32>
    %cst_28 = arith.constant 1.000000e+00 : f32
    %70 = vector.broadcast %cst_28 : f32 to vector<8x128xf32>
    %71 = arith.addf %70, %69 : vector<8x128xf32>
    %72 = arith.divf %70, %71 : vector<8x128xf32>
    %73 = arith.mulf %64, %42 : vector<8x128xf32>
    %74 = arith.mulf %58, %66 : vector<8x128xf32>
    %75 = arith.addf %73, %74 : vector<8x128xf32>
    %76 = math.tanh %75 : vector<8x128xf32>
    %77 = arith.mulf %72, %76 : vector<8x128xf32>
    %78 = arith.index_cast %48 : i32 to index
    %c0_29 = arith.constant 0 : index
    %79 = vector.load %arg7[%78, %c0_29] : memref<64x128xf32, #tpu.memory_space<vmem>>, vector<8x128xf32>
    tpu.vector_store %arg7[%78, %c0_29], %77 {strides = array<i32>} : memref<64x128xf32, #tpu.memory_space<vmem>>, vector<8x128xf32>,
    %c2_i32 = arith.constant 2 : i32
    %c8_i32_30 = arith.constant 8 : i32
    %80 = arith.muli %c2_i32, %c8_i32_30 : i32
    %81 = tpu.assume_multiple %80, 8 : i32
    %82 = arith.index_cast %81 : i32 to index
    %c0_31 = arith.constant 0 : index
    %83 = vector.load %arg10[%82, %c0_31] : memref<64x512xf32, #tpu.memory_space<vmem>>, vector<8x512xf32>
    %cst_32 = arith.constant dense<0.000000e+00> : vector<8x512xf32>
    %84 = tpu.matmul %77, %9, %cst_32 {dimension_numbers = #tpu.dot_dimension_numbers<[1], [0], [0], [1], [0, 0, 1, 1], [], []>} : vector<8x128xf32>, vector<128x512xf32>, vector<8x512xf32> -> vector<8x512xf32>
    %85 = arith.addf %83, %84 : vector<8x512xf32>
    %86 = vector.extract_strided_slice %85 {offsets = [0, 0], sizes = [8, 128], strides = [1, 1]} : vector<8x512xf32> to vector<8x128xf32>
    %87 = arith.negf %86 : vector<8x128xf32>
    %88 = math.exp %87 : vector<8x128xf32>
    %cst_33 = arith.constant 1.000000e+00 : f32
    %89 = vector.broadcast %cst_33 : f32 to vector<8x128xf32>
    %90 = arith.addf %89, %88 : vector<8x128xf32>
    %91 = arith.divf %89, %90 : vector<8x128xf32>
    %92 = vector.extract_strided_slice %85 {offsets = [0, 128], sizes = [8, 128], strides = [1, 1]} : vector<8x512xf32> to vector<8x128xf32>
    %93 = arith.negf %92 : vector<8x128xf32>
    %94 = math.exp %93 : vector<8x128xf32>
    %cst_34 = arith.constant 1.000000e+00 : f32
    %95 = vector.broadcast %cst_34 : f32 to vector<8x128xf32>
    %96 = arith.addf %95, %94 : vector<8x128xf32>
    %97 = arith.divf %95, %96 : vector<8x128xf32>
    %98 = vector.extract_strided_slice %85 {offsets = [0, 256], sizes = [8, 128], strides = [1, 1]} : vector<8x512xf32> to vector<8x128xf32>
    %99 = math.tanh %98 : vector<8x128xf32>
    %100 = vector.extract_strided_slice %85 {offsets = [0, 384], sizes = [8, 128], strides = [1, 1]} : vector<8x512xf32> to vector<8x128xf32>
    %101 = arith.negf %100 : vector<8x128xf32>
    %102 = math.exp %101 : vector<8x128xf32>
    %cst_35 = arith.constant 1.000000e+00 : f32
    %103 = vector.broadcast %cst_35 : f32 to vector<8x128xf32>
    %104 = arith.addf %103, %102 : vector<8x128xf32>
    %105 = arith.divf %103, %104 : vector<8x128xf32>
    %106 = arith.mulf %97, %75 : vector<8x128xf32>
    %107 = arith.mulf %91, %99 : vector<8x128xf32>
    %108 = arith.addf %106, %107 : vector<8x128xf32>
    %109 = math.tanh %108 : vector<8x128xf32>
    %110 = arith.mulf %105, %109 : vector<8x128xf32>
    %111 = arith.index_cast %81 : i32 to index
    %c0_36 = arith.constant 0 : index
    %112 = vector.load %arg7[%111, %c0_36] : memref<64x128xf32, #tpu.memory_space<vmem>>, vector<8x128xf32>
    tpu.vector_store %arg7[%111, %c0_36], %110 {strides = array<i32>} : memref<64x128xf32, #tpu.memory_space<vmem>>, vector<8x128xf32>,
    %c3_i32 = arith.constant 3 : i32
    %c8_i32_37 = arith.constant 8 : i32
    %113 = arith.muli %c3_i32, %c8_i32_37 : i32
    %114 = tpu.assume_multiple %113, 8 : i32
    %115 = arith.index_cast %114 : i32 to index
    %c0_38 = arith.constant 0 : index
    %116 = vector.load %arg10[%115, %c0_38] : memref<64x512xf32, #tpu.memory_space<vmem>>, vector<8x512xf32>
    %cst_39 = arith.constant dense<0.000000e+00> : vector<8x512xf32>
    %117 = tpu.matmul %110, %9, %cst_39 {dimension_numbers = #tpu.dot_dimension_numbers<[1], [0], [0], [1], [0, 0, 1, 1], [], []>} : vector<8x128xf32>, vector<128x512xf32>, vector<8x512xf32> -> vector<8x512xf32>
    %118 = arith.addf %116, %117 : vector<8x512xf32>
    %119 = vector.extract_strided_slice %118 {offsets = [0, 0], sizes = [8, 128], strides = [1, 1]} : vector<8x512xf32> to vector<8x128xf32>
    %120 = arith.negf %119 : vector<8x128xf32>
    %121 = math.exp %120 : vector<8x128xf32>
    %cst_40 = arith.constant 1.000000e+00 : f32
    %122 = vector.broadcast %cst_40 : f32 to vector<8x128xf32>
    %123 = arith.addf %122, %121 : vector<8x128xf32>
    %124 = arith.divf %122, %123 : vector<8x128xf32>
    %125 = vector.extract_strided_slice %118 {offsets = [0, 128], sizes = [8, 128], strides = [1, 1]} : vector<8x512xf32> to vector<8x128xf32>
    %126 = arith.negf %125 : vector<8x128xf32>
    %127 = math.exp %126 : vector<8x128xf32>
    %cst_41 = arith.constant 1.000000e+00 : f32
    %128 = vector.broadcast %cst_41 : f32 to vector<8x128xf32>
    %129 = arith.addf %128, %127 : vector<8x128xf32>
    %130 = arith.divf %128, %129 : vector<8x128xf32>
    %131 = vector.extract_strided_slice %118 {offsets = [0, 256], sizes = [8, 128], strides = [1, 1]} : vector<8x512xf32> to vector<8x128xf32>
    %132 = math.tanh %131 : vector<8x128xf32>
    %133 = vector.extract_strided_slice %118 {offsets = [0, 384], sizes = [8, 128], strides = [1, 1]} : vector<8x512xf32> to vector<8x128xf32>
    %134 = arith.negf %133 : vector<8x128xf32>
    %135 = math.exp %134 : vector<8x128xf32>
    %cst_42 = arith.constant 1.000000e+00 : f32
    %136 = vector.broadcast %cst_42 : f32 to vector<8x128xf32>
    %137 = arith.addf %136, %135 : vector<8x128xf32>
    %138 = arith.divf %136, %137 : vector<8x128xf32>
    %139 = arith.mulf %130, %108 : vector<8x128xf32>
    %140 = arith.mulf %124, %132 : vector<8x128xf32>
    %141 = arith.addf %139, %140 : vector<8x128xf32>
    %142 = math.tanh %141 : vector<8x128xf32>
    %143 = arith.mulf %138, %142 : vector<8x128xf32>
    %144 = arith.index_cast %114 : i32 to index
    %c0_43 = arith.constant 0 : index
    %145 = vector.load %arg7[%144, %c0_43] : memref<64x128xf32, #tpu.memory_space<vmem>>, vector<8x128xf32>
    tpu.vector_store %arg7[%144, %c0_43], %143 {strides = array<i32>} : memref<64x128xf32, #tpu.memory_space<vmem>>, vector<8x128xf32>,
    %c4_i32 = arith.constant 4 : i32
    %c8_i32_44 = arith.constant 8 : i32
    %146 = arith.muli %c4_i32, %c8_i32_44 : i32
    %147 = tpu.assume_multiple %146, 8 : i32
    %148 = arith.index_cast %147 : i32 to index
    %c0_45 = arith.constant 0 : index
    %149 = vector.load %arg10[%148, %c0_45] : memref<64x512xf32, #tpu.memory_space<vmem>>, vector<8x512xf32>
    %cst_46 = arith.constant dense<0.000000e+00> : vector<8x512xf32>
    %150 = tpu.matmul %143, %9, %cst_46 {dimension_numbers = #tpu.dot_dimension_numbers<[1], [0], [0], [1], [0, 0, 1, 1], [], []>} : vector<8x128xf32>, vector<128x512xf32>, vector<8x512xf32> -> vector<8x512xf32>
    %151 = arith.addf %149, %150 : vector<8x512xf32>
    %152 = vector.extract_strided_slice %151 {offsets = [0, 0], sizes = [8, 128], strides = [1, 1]} : vector<8x512xf32> to vector<8x128xf32>
    %153 = arith.negf %152 : vector<8x128xf32>
    %154 = math.exp %153 : vector<8x128xf32>
    %cst_47 = arith.constant 1.000000e+00 : f32
    %155 = vector.broadcast %cst_47 : f32 to vector<8x128xf32>
    %156 = arith.addf %155, %154 : vector<8x128xf32>
    %157 = arith.divf %155, %156 : vector<8x128xf32>
    %158 = vector.extract_strided_slice %151 {offsets = [0, 128], sizes = [8, 128], strides = [1, 1]} : vector<8x512xf32> to vector<8x128xf32>
    %159 = arith.negf %158 : vector<8x128xf32>
    %160 = math.exp %159 : vector<8x128xf32>
    %cst_48 = arith.constant 1.000000e+00 : f32
    %161 = vector.broadcast %cst_48 : f32 to vector<8x128xf32>
    %162 = arith.addf %161, %160 : vector<8x128xf32>
    %163 = arith.divf %161, %162 : vector<8x128xf32>
    %164 = vector.extract_strided_slice %151 {offsets = [0, 256], sizes = [8, 128], strides = [1, 1]} : vector<8x512xf32> to vector<8x128xf32>
    %165 = math.tanh %164 : vector<8x128xf32>
    %166 = vector.extract_strided_slice %151 {offsets = [0, 384], sizes = [8, 128], strides = [1, 1]} : vector<8x512xf32> to vector<8x128xf32>
    %167 = arith.negf %166 : vector<8x128xf32>
    %168 = math.exp %167 : vector<8x128xf32>
    %cst_49 = arith.constant 1.000000e+00 : f32
    %169 = vector.broadcast %cst_49 : f32 to vector<8x128xf32>
    %170 = arith.addf %169, %168 : vector<8x128xf32>
    %171 = arith.divf %169, %170 : vector<8x128xf32>
    %172 = arith.mulf %163, %141 : vector<8x128xf32>
    %173 = arith.mulf %157, %165 : vector<8x128xf32>
    %174 = arith.addf %172, %173 : vector<8x128xf32>
    %175 = math.tanh %174 : vector<8x128xf32>
    %176 = arith.mulf %171, %175 : vector<8x128xf32>
    %177 = arith.index_cast %147 : i32 to index
    %c0_50 = arith.constant 0 : index
    %178 = vector.load %arg7[%177, %c0_50] : memref<64x128xf32, #tpu.memory_space<vmem>>, vector<8x128xf32>
    tpu.vector_store %arg7[%177, %c0_50], %176 {strides = array<i32>} : memref<64x128xf32, #tpu.memory_space<vmem>>, vector<8x128xf32>,
    %c5_i32 = arith.constant 5 : i32
    %c8_i32_51 = arith.constant 8 : i32
    %179 = arith.muli %c5_i32, %c8_i32_51 : i32
    %180 = tpu.assume_multiple %179, 8 : i32
    %181 = arith.index_cast %180 : i32 to index
    %c0_52 = arith.constant 0 : index
    %182 = vector.load %arg10[%181, %c0_52] : memref<64x512xf32, #tpu.memory_space<vmem>>, vector<8x512xf32>
    %cst_53 = arith.constant dense<0.000000e+00> : vector<8x512xf32>
    %183 = tpu.matmul %176, %9, %cst_53 {dimension_numbers = #tpu.dot_dimension_numbers<[1], [0], [0], [1], [0, 0, 1, 1], [], []>} : vector<8x128xf32>, vector<128x512xf32>, vector<8x512xf32> -> vector<8x512xf32>
    %184 = arith.addf %182, %183 : vector<8x512xf32>
    %185 = vector.extract_strided_slice %184 {offsets = [0, 0], sizes = [8, 128], strides = [1, 1]} : vector<8x512xf32> to vector<8x128xf32>
    %186 = arith.negf %185 : vector<8x128xf32>
    %187 = math.exp %186 : vector<8x128xf32>
    %cst_54 = arith.constant 1.000000e+00 : f32
    %188 = vector.broadcast %cst_54 : f32 to vector<8x128xf32>
    %189 = arith.addf %188, %187 : vector<8x128xf32>
    %190 = arith.divf %188, %189 : vector<8x128xf32>
    %191 = vector.extract_strided_slice %184 {offsets = [0, 128], sizes = [8, 128], strides = [1, 1]} : vector<8x512xf32> to vector<8x128xf32>
    %192 = arith.negf %191 : vector<8x128xf32>
    %193 = math.exp %192 : vector<8x128xf32>
    %cst_55 = arith.constant 1.000000e+00 : f32
    %194 = vector.broadcast %cst_55 : f32 to vector<8x128xf32>
    %195 = arith.addf %194, %193 : vector<8x128xf32>
    %196 = arith.divf %194, %195 : vector<8x128xf32>
    %197 = vector.extract_strided_slice %184 {offsets = [0, 256], sizes = [8, 128], strides = [1, 1]} : vector<8x512xf32> to vector<8x128xf32>
    %198 = math.tanh %197 : vector<8x128xf32>
    %199 = vector.extract_strided_slice %184 {offsets = [0, 384], sizes = [8, 128], strides = [1, 1]} : vector<8x512xf32> to vector<8x128xf32>
    %200 = arith.negf %199 : vector<8x128xf32>
    %201 = math.exp %200 : vector<8x128xf32>
    %cst_56 = arith.constant 1.000000e+00 : f32
    %202 = vector.broadcast %cst_56 : f32 to vector<8x128xf32>
    %203 = arith.addf %202, %201 : vector<8x128xf32>
    %204 = arith.divf %202, %203 : vector<8x128xf32>
    %205 = arith.mulf %196, %174 : vector<8x128xf32>
    %206 = arith.mulf %190, %198 : vector<8x128xf32>
    %207 = arith.addf %205, %206 : vector<8x128xf32>
    %208 = math.tanh %207 : vector<8x128xf32>
    %209 = arith.mulf %204, %208 : vector<8x128xf32>
    %210 = arith.index_cast %180 : i32 to index
    %c0_57 = arith.constant 0 : index
    %211 = vector.load %arg7[%210, %c0_57] : memref<64x128xf32, #tpu.memory_space<vmem>>, vector<8x128xf32>
    tpu.vector_store %arg7[%210, %c0_57], %209 {strides = array<i32>} : memref<64x128xf32, #tpu.memory_space<vmem>>, vector<8x128xf32>,
    %c6_i32 = arith.constant 6 : i32
    %c8_i32_58 = arith.constant 8 : i32
    %212 = arith.muli %c6_i32, %c8_i32_58 : i32
    %213 = tpu.assume_multiple %212, 8 : i32
    %214 = arith.index_cast %213 : i32 to index
    %c0_59 = arith.constant 0 : index
    %215 = vector.load %arg10[%214, %c0_59] : memref<64x512xf32, #tpu.memory_space<vmem>>, vector<8x512xf32>
    %cst_60 = arith.constant dense<0.000000e+00> : vector<8x512xf32>
    %216 = tpu.matmul %209, %9, %cst_60 {dimension_numbers = #tpu.dot_dimension_numbers<[1], [0], [0], [1], [0, 0, 1, 1], [], []>} : vector<8x128xf32>, vector<128x512xf32>, vector<8x512xf32> -> vector<8x512xf32>
    %217 = arith.addf %215, %216 : vector<8x512xf32>
    %218 = vector.extract_strided_slice %217 {offsets = [0, 0], sizes = [8, 128], strides = [1, 1]} : vector<8x512xf32> to vector<8x128xf32>
    %219 = arith.negf %218 : vector<8x128xf32>
    %220 = math.exp %219 : vector<8x128xf32>
    %cst_61 = arith.constant 1.000000e+00 : f32
    %221 = vector.broadcast %cst_61 : f32 to vector<8x128xf32>
    %222 = arith.addf %221, %220 : vector<8x128xf32>
    %223 = arith.divf %221, %222 : vector<8x128xf32>
    %224 = vector.extract_strided_slice %217 {offsets = [0, 128], sizes = [8, 128], strides = [1, 1]} : vector<8x512xf32> to vector<8x128xf32>
    %225 = arith.negf %224 : vector<8x128xf32>
    %226 = math.exp %225 : vector<8x128xf32>
    %cst_62 = arith.constant 1.000000e+00 : f32
    %227 = vector.broadcast %cst_62 : f32 to vector<8x128xf32>
    %228 = arith.addf %227, %226 : vector<8x128xf32>
    %229 = arith.divf %227, %228 : vector<8x128xf32>
    %230 = vector.extract_strided_slice %217 {offsets = [0, 256], sizes = [8, 128], strides = [1, 1]} : vector<8x512xf32> to vector<8x128xf32>
    %231 = math.tanh %230 : vector<8x128xf32>
    %232 = vector.extract_strided_slice %217 {offsets = [0, 384], sizes = [8, 128], strides = [1, 1]} : vector<8x512xf32> to vector<8x128xf32>
    %233 = arith.negf %232 : vector<8x128xf32>
    %234 = math.exp %233 : vector<8x128xf32>
    %cst_63 = arith.constant 1.000000e+00 : f32
    %235 = vector.broadcast %cst_63 : f32 to vector<8x128xf32>
    %236 = arith.addf %235, %234 : vector<8x128xf32>
    %237 = arith.divf %235, %236 : vector<8x128xf32>
    %238 = arith.mulf %229, %207 : vector<8x128xf32>
    %239 = arith.mulf %223, %231 : vector<8x128xf32>
    %240 = arith.addf %238, %239 : vector<8x128xf32>
    %241 = math.tanh %240 : vector<8x128xf32>
    %242 = arith.mulf %237, %241 : vector<8x128xf32>
    %243 = arith.index_cast %213 : i32 to index
    %c0_64 = arith.constant 0 : index
    %244 = vector.load %arg7[%243, %c0_64] : memref<64x128xf32, #tpu.memory_space<vmem>>, vector<8x128xf32>
    tpu.vector_store %arg7[%243, %c0_64], %242 {strides = array<i32>} : memref<64x128xf32, #tpu.memory_space<vmem>>, vector<8x128xf32>,
    %c7_i32 = arith.constant 7 : i32
    %c8_i32_65 = arith.constant 8 : i32
    %245 = arith.muli %c7_i32, %c8_i32_65 : i32
    %246 = tpu.assume_multiple %245, 8 : i32
    %247 = arith.index_cast %246 : i32 to index
    %c0_66 = arith.constant 0 : index
    %248 = vector.load %arg10[%247, %c0_66] : memref<64x512xf32, #tpu.memory_space<vmem>>, vector<8x512xf32>
    %cst_67 = arith.constant dense<0.000000e+00> : vector<8x512xf32>
    %249 = tpu.matmul %242, %9, %cst_67 {dimension_numbers = #tpu.dot_dimension_numbers<[1], [0], [0], [1], [0, 0, 1, 1], [], []>} : vector<8x128xf32>, vector<128x512xf32>, vector<8x512xf32> -> vector<8x512xf32>
    %250 = arith.addf %248, %249 : vector<8x512xf32>
    %251 = vector.extract_strided_slice %250 {offsets = [0, 0], sizes = [8, 128], strides = [1, 1]} : vector<8x512xf32> to vector<8x128xf32>
    %252 = arith.negf %251 : vector<8x128xf32>
    %253 = math.exp %252 : vector<8x128xf32>
    %cst_68 = arith.constant 1.000000e+00 : f32
    %254 = vector.broadcast %cst_68 : f32 to vector<8x128xf32>
    %255 = arith.addf %254, %253 : vector<8x128xf32>
    %256 = arith.divf %254, %255 : vector<8x128xf32>
    %257 = vector.extract_strided_slice %250 {offsets = [0, 128], sizes = [8, 128], strides = [1, 1]} : vector<8x512xf32> to vector<8x128xf32>
    %258 = arith.negf %257 : vector<8x128xf32>
    %259 = math.exp %258 : vector<8x128xf32>
    %cst_69 = arith.constant 1.000000e+00 : f32
    %260 = vector.broadcast %cst_69 : f32 to vector<8x128xf32>
    %261 = arith.addf %260, %259 : vector<8x128xf32>
    %262 = arith.divf %260, %261 : vector<8x128xf32>
    %263 = vector.extract_strided_slice %250 {offsets = [0, 256], sizes = [8, 128], strides = [1, 1]} : vector<8x512xf32> to vector<8x128xf32>
    %264 = math.tanh %263 : vector<8x128xf32>
    %265 = vector.extract_strided_slice %250 {offsets = [0, 384], sizes = [8, 128], strides = [1, 1]} : vector<8x512xf32> to vector<8x128xf32>
    %266 = arith.negf %265 : vector<8x128xf32>
    %267 = math.exp %266 : vector<8x128xf32>
    %cst_70 = arith.constant 1.000000e+00 : f32
    %268 = vector.broadcast %cst_70 : f32 to vector<8x128xf32>
    %269 = arith.addf %268, %267 : vector<8x128xf32>
    %270 = arith.divf %268, %269 : vector<8x128xf32>
    %271 = arith.mulf %262, %240 : vector<8x128xf32>
    %272 = arith.mulf %256, %264 : vector<8x128xf32>
    %273 = arith.addf %271, %272 : vector<8x128xf32>
    %274 = math.tanh %273 : vector<8x128xf32>
    %275 = arith.mulf %270, %274 : vector<8x128xf32>
    %276 = arith.index_cast %246 : i32 to index
    %c0_71 = arith.constant 0 : index
    %277 = vector.load %arg7[%276, %c0_71] : memref<64x128xf32, #tpu.memory_space<vmem>>, vector<8x128xf32>
    tpu.vector_store %arg7[%276, %c0_71], %275 {strides = array<i32>} : memref<64x128xf32, #tpu.memory_space<vmem>>, vector<8x128xf32>,
    %c8_i32_72 = arith.constant 8 : i32
    %c0_73 = arith.constant 0 : index
    %c0_74 = arith.constant 0 : index
    %c0_75 = arith.constant 0 : index
    %278 = vector.load %arg8[%c0_73, %c0_74, %c0_75] : memref<2x8x128xf32, #tpu.memory_space<vmem>>, vector<1x8x128xf32>
    %279 = vector.shape_cast %278 : vector<1x8x128xf32> to vector<8x128xf32>
    %280 = vector.shape_cast %275 : vector<8x128xf32> to vector<1x8x128xf32>
    tpu.vector_store %arg8[%c0_73, %c0_74, %c0_75], %280 {strides = array<i32>} : memref<2x8x128xf32, #tpu.memory_space<vmem>>, vector<1x8x128xf32>,
    %c0_76 = arith.constant 0 : index
    %c0_77 = arith.constant 0 : index
    %c0_78 = arith.constant 0 : index
    %281 = vector.load %arg9[%c0_76, %c0_77, %c0_78] : memref<2x8x128xf32, #tpu.memory_space<vmem>>, vector<1x8x128xf32>
    %282 = vector.shape_cast %281 : vector<1x8x128xf32> to vector<8x128xf32>
    %283 = vector.shape_cast %273 : vector<8x128xf32> to vector<1x8x128xf32>
    tpu.vector_store %arg9[%c0_76, %c0_77, %c0_78], %283 {strides = array<i32>} : memref<2x8x128xf32, #tpu.memory_space<vmem>>, vector<1x8x128xf32>,
    %c0_79 = arith.constant 0 : index
    %c0_80 = arith.constant 0 : index
    %284 = vector.load %arg7[%c0_79, %c0_80] : memref<64x128xf32, #tpu.memory_space<vmem>>, vector<64x128xf32>
    %c0_81 = arith.constant 0 : index
    %c0_82 = arith.constant 0 : index
    %c0_83 = arith.constant 0 : index
    %285 = vector.load %arg2[%c0_81, %c0_82, %c0_83] : memref<1x128x512xf32, #tpu.memory_space<vmem>>, vector<1x128x512xf32>
    %286 = vector.shape_cast %285 : vector<1x128x512xf32> to vector<128x512xf32>
    %cst_84 = arith.constant dense<0.000000e+00> : vector<64x512xf32>
    %287 = tpu.matmul %284, %286, %cst_84 {dimension_numbers = #tpu.dot_dimension_numbers<[1], [0], [0], [1], [0, 0, 1, 1], [], []>} : vector<64x128xf32>, vector<128x512xf32>, vector<64x512xf32> -> vector<64x512xf32>
    %c1 = arith.constant 1 : index
    %c0_85 = arith.constant 0 : index
    %c0_86 = arith.constant 0 : index
    %288 = vector.load %arg4[%c1, %c0_85, %c0_86] : memref<2x1x512xf32, #tpu.memory_space<vmem>>, vector<1x1x512xf32>
    %289 = vector.shape_cast %288 : vector<1x1x512xf32> to vector<1x512xf32>
    %290 = vector.broadcast %289 : vector<1x512xf32> to vector<64x512xf32>
    %291 = arith.addf %287, %290 : vector<64x512xf32>
    %c0_87 = arith.constant 0 : index
    %c0_88 = arith.constant 0 : index
    %292 = vector.load %arg10[%c0_87, %c0_88] : memref<64x512xf32, #tpu.memory_space<vmem>>, vector<64x512xf32>
    tpu.vector_store %arg10[%c0_87, %c0_88], %291 {strides = array<i32>} : memref<64x512xf32, #tpu.memory_space<vmem>>, vector<64x512xf32>,
    %c1_89 = arith.constant 1 : index
    %c0_90 = arith.constant 0 : index
    %c0_91 = arith.constant 0 : index
    %293 = vector.load %arg3[%c1_89, %c0_90, %c0_91] : memref<2x128x512xf32, #tpu.memory_space<vmem>>, vector<1x128x512xf32>
    %294 = vector.shape_cast %293 : vector<1x128x512xf32> to vector<128x512xf32>
    %c1_92 = arith.constant 1 : index
    %c0_93 = arith.constant 0 : index
    %c0_94 = arith.constant 0 : index
    %295 = vector.load %arg5[%c1_92, %c0_93, %c0_94] : memref<2x8x128xf32, #tpu.memory_space<vmem>>, vector<1x8x128xf32>
    %296 = vector.shape_cast %295 : vector<1x8x128xf32> to vector<8x128xf32>
    %c1_95 = arith.constant 1 : index
    %c0_96 = arith.constant 0 : index
    %c0_97 = arith.constant 0 : index
    %297 = vector.load %arg6[%c1_95, %c0_96, %c0_97] : memref<2x8x128xf32, #tpu.memory_space<vmem>>, vector<1x8x128xf32>
    %298 = vector.shape_cast %297 : vector<1x8x128xf32> to vector<8x128xf32>
    %c0_i32_98 = arith.constant 0 : i32
    %c8_i32_99 = arith.constant 8 : i32
    %299 = arith.muli %c0_i32_98, %c8_i32_99 : i32
    %300 = tpu.assume_multiple %299, 8 : i32
    %301 = arith.index_cast %300 : i32 to index
    %c0_100 = arith.constant 0 : index
    %302 = vector.load %arg10[%301, %c0_100] : memref<64x512xf32, #tpu.memory_space<vmem>>, vector<8x512xf32>
    %cst_101 = arith.constant dense<0.000000e+00> : vector<8x512xf32>
    %303 = tpu.matmul %296, %294, %cst_101 {dimension_numbers = #tpu.dot_dimension_numbers<[1], [0], [0], [1], [0, 0, 1, 1], [], []>} : vector<8x128xf32>, vector<128x512xf32>, vector<8x512xf32> -> vector<8x512xf32>
    %304 = arith.addf %302, %303 : vector<8x512xf32>
    %305 = vector.extract_strided_slice %304 {offsets = [0, 0], sizes = [8, 128], strides = [1, 1]} : vector<8x512xf32> to vector<8x128xf32>
    %306 = arith.negf %305 : vector<8x128xf32>
    %307 = math.exp %306 : vector<8x128xf32>
    %cst_102 = arith.constant 1.000000e+00 : f32
    %308 = vector.broadcast %cst_102 : f32 to vector<8x128xf32>
    %309 = arith.addf %308, %307 : vector<8x128xf32>
    %310 = arith.divf %308, %309 : vector<8x128xf32>
    %311 = vector.extract_strided_slice %304 {offsets = [0, 128], sizes = [8, 128], strides = [1, 1]} : vector<8x512xf32> to vector<8x128xf32>
    %312 = arith.negf %311 : vector<8x128xf32>
    %313 = math.exp %312 : vector<8x128xf32>
    %cst_103 = arith.constant 1.000000e+00 : f32
    %314 = vector.broadcast %cst_103 : f32 to vector<8x128xf32>
    %315 = arith.addf %314, %313 : vector<8x128xf32>
    %316 = arith.divf %314, %315 : vector<8x128xf32>
    %317 = vector.extract_strided_slice %304 {offsets = [0, 256], sizes = [8, 128], strides = [1, 1]} : vector<8x512xf32> to vector<8x128xf32>
    %318 = math.tanh %317 : vector<8x128xf32>
    %319 = vector.extract_strided_slice %304 {offsets = [0, 384], sizes = [8, 128], strides = [1, 1]} : vector<8x512xf32> to vector<8x128xf32>
    %320 = arith.negf %319 : vector<8x128xf32>
    %321 = math.exp %320 : vector<8x128xf32>
    %cst_104 = arith.constant 1.000000e+00 : f32
    %322 = vector.broadcast %cst_104 : f32 to vector<8x128xf32>
    %323 = arith.addf %322, %321 : vector<8x128xf32>
    %324 = arith.divf %322, %323 : vector<8x128xf32>
    %325 = arith.mulf %316, %298 : vector<8x128xf32>
    %326 = arith.mulf %310, %318 : vector<8x128xf32>
    %327 = arith.addf %325, %326 : vector<8x128xf32>
    %328 = math.tanh %327 : vector<8x128xf32>
    %329 = arith.mulf %324, %328 : vector<8x128xf32>
    %330 = arith.index_cast %300 : i32 to index
    %c0_105 = arith.constant 0 : index
    %331 = vector.load %arg7[%330, %c0_105] : memref<64x128xf32, #tpu.memory_space<vmem>>, vector<8x128xf32>
    tpu.vector_store %arg7[%330, %c0_105], %329 {strides = array<i32>} : memref<64x128xf32, #tpu.memory_space<vmem>>, vector<8x128xf32>,
    %c1_i32_106 = arith.constant 1 : i32
    %c8_i32_107 = arith.constant 8 : i32
    %332 = arith.muli %c1_i32_106, %c8_i32_107 : i32
    %333 = tpu.assume_multiple %332, 8 : i32
    %334 = arith.index_cast %333 : i32 to index
    %c0_108 = arith.constant 0 : index
    %335 = vector.load %arg10[%334, %c0_108] : memref<64x512xf32, #tpu.memory_space<vmem>>, vector<8x512xf32>
    %cst_109 = arith.constant dense<0.000000e+00> : vector<8x512xf32>
    %336 = tpu.matmul %329, %294, %cst_109 {dimension_numbers = #tpu.dot_dimension_numbers<[1], [0], [0], [1], [0, 0, 1, 1], [], []>} : vector<8x128xf32>, vector<128x512xf32>, vector<8x512xf32> -> vector<8x512xf32>
    %337 = arith.addf %335, %336 : vector<8x512xf32>
    %338 = vector.extract_strided_slice %337 {offsets = [0, 0], sizes = [8, 128], strides = [1, 1]} : vector<8x512xf32> to vector<8x128xf32>
    %339 = arith.negf %338 : vector<8x128xf32>
    %340 = math.exp %339 : vector<8x128xf32>
    %cst_110 = arith.constant 1.000000e+00 : f32
    %341 = vector.broadcast %cst_110 : f32 to vector<8x128xf32>
    %342 = arith.addf %341, %340 : vector<8x128xf32>
    %343 = arith.divf %341, %342 : vector<8x128xf32>
    %344 = vector.extract_strided_slice %337 {offsets = [0, 128], sizes = [8, 128], strides = [1, 1]} : vector<8x512xf32> to vector<8x128xf32>
    %345 = arith.negf %344 : vector<8x128xf32>
    %346 = math.exp %345 : vector<8x128xf32>
    %cst_111 = arith.constant 1.000000e+00 : f32
    %347 = vector.broadcast %cst_111 : f32 to vector<8x128xf32>
    %348 = arith.addf %347, %346 : vector<8x128xf32>
    %349 = arith.divf %347, %348 : vector<8x128xf32>
    %350 = vector.extract_strided_slice %337 {offsets = [0, 256], sizes = [8, 128], strides = [1, 1]} : vector<8x512xf32> to vector<8x128xf32>
    %351 = math.tanh %350 : vector<8x128xf32>
    %352 = vector.extract_strided_slice %337 {offsets = [0, 384], sizes = [8, 128], strides = [1, 1]} : vector<8x512xf32> to vector<8x128xf32>
    %353 = arith.negf %352 : vector<8x128xf32>
    %354 = math.exp %353 : vector<8x128xf32>
    %cst_112 = arith.constant 1.000000e+00 : f32
    %355 = vector.broadcast %cst_112 : f32 to vector<8x128xf32>
    %356 = arith.addf %355, %354 : vector<8x128xf32>
    %357 = arith.divf %355, %356 : vector<8x128xf32>
    %358 = arith.mulf %349, %327 : vector<8x128xf32>
    %359 = arith.mulf %343, %351 : vector<8x128xf32>
    %360 = arith.addf %358, %359 : vector<8x128xf32>
    %361 = math.tanh %360 : vector<8x128xf32>
    %362 = arith.mulf %357, %361 : vector<8x128xf32>
    %363 = arith.index_cast %333 : i32 to index
    %c0_113 = arith.constant 0 : index
    %364 = vector.load %arg7[%363, %c0_113] : memref<64x128xf32, #tpu.memory_space<vmem>>, vector<8x128xf32>
    tpu.vector_store %arg7[%363, %c0_113], %362 {strides = array<i32>} : memref<64x128xf32, #tpu.memory_space<vmem>>, vector<8x128xf32>,
    %c2_i32_114 = arith.constant 2 : i32
    %c8_i32_115 = arith.constant 8 : i32
    %365 = arith.muli %c2_i32_114, %c8_i32_115 : i32
    %366 = tpu.assume_multiple %365, 8 : i32
    %367 = arith.index_cast %366 : i32 to index
    %c0_116 = arith.constant 0 : index
    %368 = vector.load %arg10[%367, %c0_116] : memref<64x512xf32, #tpu.memory_space<vmem>>, vector<8x512xf32>
    %cst_117 = arith.constant dense<0.000000e+00> : vector<8x512xf32>
    %369 = tpu.matmul %362, %294, %cst_117 {dimension_numbers = #tpu.dot_dimension_numbers<[1], [0], [0], [1], [0, 0, 1, 1], [], []>} : vector<8x128xf32>, vector<128x512xf32>, vector<8x512xf32> -> vector<8x512xf32>
    %370 = arith.addf %368, %369 : vector<8x512xf32>
    %371 = vector.extract_strided_slice %370 {offsets = [0, 0], sizes = [8, 128], strides = [1, 1]} : vector<8x512xf32> to vector<8x128xf32>
    %372 = arith.negf %371 : vector<8x128xf32>
    %373 = math.exp %372 : vector<8x128xf32>
    %cst_118 = arith.constant 1.000000e+00 : f32
    %374 = vector.broadcast %cst_118 : f32 to vector<8x128xf32>
    %375 = arith.addf %374, %373 : vector<8x128xf32>
    %376 = arith.divf %374, %375 : vector<8x128xf32>
    %377 = vector.extract_strided_slice %370 {offsets = [0, 128], sizes = [8, 128], strides = [1, 1]} : vector<8x512xf32> to vector<8x128xf32>
    %378 = arith.negf %377 : vector<8x128xf32>
    %379 = math.exp %378 : vector<8x128xf32>
    %cst_119 = arith.constant 1.000000e+00 : f32
    %380 = vector.broadcast %cst_119 : f32 to vector<8x128xf32>
    %381 = arith.addf %380, %379 : vector<8x128xf32>
    %382 = arith.divf %380, %381 : vector<8x128xf32>
    %383 = vector.extract_strided_slice %370 {offsets = [0, 256], sizes = [8, 128], strides = [1, 1]} : vector<8x512xf32> to vector<8x128xf32>
    %384 = math.tanh %383 : vector<8x128xf32>
    %385 = vector.extract_strided_slice %370 {offsets = [0, 384], sizes = [8, 128], strides = [1, 1]} : vector<8x512xf32> to vector<8x128xf32>
    %386 = arith.negf %385 : vector<8x128xf32>
    %387 = math.exp %386 : vector<8x128xf32>
    %cst_120 = arith.constant 1.000000e+00 : f32
    %388 = vector.broadcast %cst_120 : f32 to vector<8x128xf32>
    %389 = arith.addf %388, %387 : vector<8x128xf32>
    %390 = arith.divf %388, %389 : vector<8x128xf32>
    %391 = arith.mulf %382, %360 : vector<8x128xf32>
    %392 = arith.mulf %376, %384 : vector<8x128xf32>
    %393 = arith.addf %391, %392 : vector<8x128xf32>
    %394 = math.tanh %393 : vector<8x128xf32>
    %395 = arith.mulf %390, %394 : vector<8x128xf32>
    %396 = arith.index_cast %366 : i32 to index
    %c0_121 = arith.constant 0 : index
    %397 = vector.load %arg7[%396, %c0_121] : memref<64x128xf32, #tpu.memory_space<vmem>>, vector<8x128xf32>
    tpu.vector_store %arg7[%396, %c0_121], %395 {strides = array<i32>} : memref<64x128xf32, #tpu.memory_space<vmem>>, vector<8x128xf32>,
    %c3_i32_122 = arith.constant 3 : i32
    %c8_i32_123 = arith.constant 8 : i32
    %398 = arith.muli %c3_i32_122, %c8_i32_123 : i32
    %399 = tpu.assume_multiple %398, 8 : i32
    %400 = arith.index_cast %399 : i32 to index
    %c0_124 = arith.constant 0 : index
    %401 = vector.load %arg10[%400, %c0_124] : memref<64x512xf32, #tpu.memory_space<vmem>>, vector<8x512xf32>
    %cst_125 = arith.constant dense<0.000000e+00> : vector<8x512xf32>
    %402 = tpu.matmul %395, %294, %cst_125 {dimension_numbers = #tpu.dot_dimension_numbers<[1], [0], [0], [1], [0, 0, 1, 1], [], []>} : vector<8x128xf32>, vector<128x512xf32>, vector<8x512xf32> -> vector<8x512xf32>
    %403 = arith.addf %401, %402 : vector<8x512xf32>
    %404 = vector.extract_strided_slice %403 {offsets = [0, 0], sizes = [8, 128], strides = [1, 1]} : vector<8x512xf32> to vector<8x128xf32>
    %405 = arith.negf %404 : vector<8x128xf32>
    %406 = math.exp %405 : vector<8x128xf32>
    %cst_126 = arith.constant 1.000000e+00 : f32
    %407 = vector.broadcast %cst_126 : f32 to vector<8x128xf32>
    %408 = arith.addf %407, %406 : vector<8x128xf32>
    %409 = arith.divf %407, %408 : vector<8x128xf32>
    %410 = vector.extract_strided_slice %403 {offsets = [0, 128], sizes = [8, 128], strides = [1, 1]} : vector<8x512xf32> to vector<8x128xf32>
    %411 = arith.negf %410 : vector<8x128xf32>
    %412 = math.exp %411 : vector<8x128xf32>
    %cst_127 = arith.constant 1.000000e+00 : f32
    %413 = vector.broadcast %cst_127 : f32 to vector<8x128xf32>
    %414 = arith.addf %413, %412 : vector<8x128xf32>
    %415 = arith.divf %413, %414 : vector<8x128xf32>
    %416 = vector.extract_strided_slice %403 {offsets = [0, 256], sizes = [8, 128], strides = [1, 1]} : vector<8x512xf32> to vector<8x128xf32>
    %417 = math.tanh %416 : vector<8x128xf32>
    %418 = vector.extract_strided_slice %403 {offsets = [0, 384], sizes = [8, 128], strides = [1, 1]} : vector<8x512xf32> to vector<8x128xf32>
    %419 = arith.negf %418 : vector<8x128xf32>
    %420 = math.exp %419 : vector<8x128xf32>
    %cst_128 = arith.constant 1.000000e+00 : f32
    %421 = vector.broadcast %cst_128 : f32 to vector<8x128xf32>
    %422 = arith.addf %421, %420 : vector<8x128xf32>
    %423 = arith.divf %421, %422 : vector<8x128xf32>
    %424 = arith.mulf %415, %393 : vector<8x128xf32>
    %425 = arith.mulf %409, %417 : vector<8x128xf32>
    %426 = arith.addf %424, %425 : vector<8x128xf32>
    %427 = math.tanh %426 : vector<8x128xf32>
    %428 = arith.mulf %423, %427 : vector<8x128xf32>
    %429 = arith.index_cast %399 : i32 to index
    %c0_129 = arith.constant 0 : index
    %430 = vector.load %arg7[%429, %c0_129] : memref<64x128xf32, #tpu.memory_space<vmem>>, vector<8x128xf32>
    tpu.vector_store %arg7[%429, %c0_129], %428 {strides = array<i32>} : memref<64x128xf32, #tpu.memory_space<vmem>>, vector<8x128xf32>,
    %c4_i32_130 = arith.constant 4 : i32
    %c8_i32_131 = arith.constant 8 : i32
    %431 = arith.muli %c4_i32_130, %c8_i32_131 : i32
    %432 = tpu.assume_multiple %431, 8 : i32
    %433 = arith.index_cast %432 : i32 to index
    %c0_132 = arith.constant 0 : index
    %434 = vector.load %arg10[%433, %c0_132] : memref<64x512xf32, #tpu.memory_space<vmem>>, vector<8x512xf32>
    %cst_133 = arith.constant dense<0.000000e+00> : vector<8x512xf32>
    %435 = tpu.matmul %428, %294, %cst_133 {dimension_numbers = #tpu.dot_dimension_numbers<[1], [0], [0], [1], [0, 0, 1, 1], [], []>} : vector<8x128xf32>, vector<128x512xf32>, vector<8x512xf32> -> vector<8x512xf32>
    %436 = arith.addf %434, %435 : vector<8x512xf32>
    %437 = vector.extract_strided_slice %436 {offsets = [0, 0], sizes = [8, 128], strides = [1, 1]} : vector<8x512xf32> to vector<8x128xf32>
    %438 = arith.negf %437 : vector<8x128xf32>
    %439 = math.exp %438 : vector<8x128xf32>
    %cst_134 = arith.constant 1.000000e+00 : f32
    %440 = vector.broadcast %cst_134 : f32 to vector<8x128xf32>
    %441 = arith.addf %440, %439 : vector<8x128xf32>
    %442 = arith.divf %440, %441 : vector<8x128xf32>
    %443 = vector.extract_strided_slice %436 {offsets = [0, 128], sizes = [8, 128], strides = [1, 1]} : vector<8x512xf32> to vector<8x128xf32>
    %444 = arith.negf %443 : vector<8x128xf32>
    %445 = math.exp %444 : vector<8x128xf32>
    %cst_135 = arith.constant 1.000000e+00 : f32
    %446 = vector.broadcast %cst_135 : f32 to vector<8x128xf32>
    %447 = arith.addf %446, %445 : vector<8x128xf32>
    %448 = arith.divf %446, %447 : vector<8x128xf32>
    %449 = vector.extract_strided_slice %436 {offsets = [0, 256], sizes = [8, 128], strides = [1, 1]} : vector<8x512xf32> to vector<8x128xf32>
    %450 = math.tanh %449 : vector<8x128xf32>
    %451 = vector.extract_strided_slice %436 {offsets = [0, 384], sizes = [8, 128], strides = [1, 1]} : vector<8x512xf32> to vector<8x128xf32>
    %452 = arith.negf %451 : vector<8x128xf32>
    %453 = math.exp %452 : vector<8x128xf32>
    %cst_136 = arith.constant 1.000000e+00 : f32
    %454 = vector.broadcast %cst_136 : f32 to vector<8x128xf32>
    %455 = arith.addf %454, %453 : vector<8x128xf32>
    %456 = arith.divf %454, %455 : vector<8x128xf32>
    %457 = arith.mulf %448, %426 : vector<8x128xf32>
    %458 = arith.mulf %442, %450 : vector<8x128xf32>
    %459 = arith.addf %457, %458 : vector<8x128xf32>
    %460 = math.tanh %459 : vector<8x128xf32>
    %461 = arith.mulf %456, %460 : vector<8x128xf32>
    %462 = arith.index_cast %432 : i32 to index
    %c0_137 = arith.constant 0 : index
    %463 = vector.load %arg7[%462, %c0_137] : memref<64x128xf32, #tpu.memory_space<vmem>>, vector<8x128xf32>
    tpu.vector_store %arg7[%462, %c0_137], %461 {strides = array<i32>} : memref<64x128xf32, #tpu.memory_space<vmem>>, vector<8x128xf32>,
    %c5_i32_138 = arith.constant 5 : i32
    %c8_i32_139 = arith.constant 8 : i32
    %464 = arith.muli %c5_i32_138, %c8_i32_139 : i32
    %465 = tpu.assume_multiple %464, 8 : i32
    %466 = arith.index_cast %465 : i32 to index
    %c0_140 = arith.constant 0 : index
    %467 = vector.load %arg10[%466, %c0_140] : memref<64x512xf32, #tpu.memory_space<vmem>>, vector<8x512xf32>
    %cst_141 = arith.constant dense<0.000000e+00> : vector<8x512xf32>
    %468 = tpu.matmul %461, %294, %cst_141 {dimension_numbers = #tpu.dot_dimension_numbers<[1], [0], [0], [1], [0, 0, 1, 1], [], []>} : vector<8x128xf32>, vector<128x512xf32>, vector<8x512xf32> -> vector<8x512xf32>
    %469 = arith.addf %467, %468 : vector<8x512xf32>
    %470 = vector.extract_strided_slice %469 {offsets = [0, 0], sizes = [8, 128], strides = [1, 1]} : vector<8x512xf32> to vector<8x128xf32>
    %471 = arith.negf %470 : vector<8x128xf32>
    %472 = math.exp %471 : vector<8x128xf32>
    %cst_142 = arith.constant 1.000000e+00 : f32
    %473 = vector.broadcast %cst_142 : f32 to vector<8x128xf32>
    %474 = arith.addf %473, %472 : vector<8x128xf32>
    %475 = arith.divf %473, %474 : vector<8x128xf32>
    %476 = vector.extract_strided_slice %469 {offsets = [0, 128], sizes = [8, 128], strides = [1, 1]} : vector<8x512xf32> to vector<8x128xf32>
    %477 = arith.negf %476 : vector<8x128xf32>
    %478 = math.exp %477 : vector<8x128xf32>
    %cst_143 = arith.constant 1.000000e+00 : f32
    %479 = vector.broadcast %cst_143 : f32 to vector<8x128xf32>
    %480 = arith.addf %479, %478 : vector<8x128xf32>
    %481 = arith.divf %479, %480 : vector<8x128xf32>
    %482 = vector.extract_strided_slice %469 {offsets = [0, 256], sizes = [8, 128], strides = [1, 1]} : vector<8x512xf32> to vector<8x128xf32>
    %483 = math.tanh %482 : vector<8x128xf32>
    %484 = vector.extract_strided_slice %469 {offsets = [0, 384], sizes = [8, 128], strides = [1, 1]} : vector<8x512xf32> to vector<8x128xf32>
    %485 = arith.negf %484 : vector<8x128xf32>
    %486 = math.exp %485 : vector<8x128xf32>
    %cst_144 = arith.constant 1.000000e+00 : f32
    %487 = vector.broadcast %cst_144 : f32 to vector<8x128xf32>
    %488 = arith.addf %487, %486 : vector<8x128xf32>
    %489 = arith.divf %487, %488 : vector<8x128xf32>
    %490 = arith.mulf %481, %459 : vector<8x128xf32>
    %491 = arith.mulf %475, %483 : vector<8x128xf32>
    %492 = arith.addf %490, %491 : vector<8x128xf32>
    %493 = math.tanh %492 : vector<8x128xf32>
    %494 = arith.mulf %489, %493 : vector<8x128xf32>
    %495 = arith.index_cast %465 : i32 to index
    %c0_145 = arith.constant 0 : index
    %496 = vector.load %arg7[%495, %c0_145] : memref<64x128xf32, #tpu.memory_space<vmem>>, vector<8x128xf32>
    tpu.vector_store %arg7[%495, %c0_145], %494 {strides = array<i32>} : memref<64x128xf32, #tpu.memory_space<vmem>>, vector<8x128xf32>,
    %c6_i32_146 = arith.constant 6 : i32
    %c8_i32_147 = arith.constant 8 : i32
    %497 = arith.muli %c6_i32_146, %c8_i32_147 : i32
    %498 = tpu.assume_multiple %497, 8 : i32
    %499 = arith.index_cast %498 : i32 to index
    %c0_148 = arith.constant 0 : index
    %500 = vector.load %arg10[%499, %c0_148] : memref<64x512xf32, #tpu.memory_space<vmem>>, vector<8x512xf32>
    %cst_149 = arith.constant dense<0.000000e+00> : vector<8x512xf32>
    %501 = tpu.matmul %494, %294, %cst_149 {dimension_numbers = #tpu.dot_dimension_numbers<[1], [0], [0], [1], [0, 0, 1, 1], [], []>} : vector<8x128xf32>, vector<128x512xf32>, vector<8x512xf32> -> vector<8x512xf32>
    %502 = arith.addf %500, %501 : vector<8x512xf32>
    %503 = vector.extract_strided_slice %502 {offsets = [0, 0], sizes = [8, 128], strides = [1, 1]} : vector<8x512xf32> to vector<8x128xf32>
    %504 = arith.negf %503 : vector<8x128xf32>
    %505 = math.exp %504 : vector<8x128xf32>
    %cst_150 = arith.constant 1.000000e+00 : f32
    %506 = vector.broadcast %cst_150 : f32 to vector<8x128xf32>
    %507 = arith.addf %506, %505 : vector<8x128xf32>
    %508 = arith.divf %506, %507 : vector<8x128xf32>
    %509 = vector.extract_strided_slice %502 {offsets = [0, 128], sizes = [8, 128], strides = [1, 1]} : vector<8x512xf32> to vector<8x128xf32>
    %510 = arith.negf %509 : vector<8x128xf32>
    %511 = math.exp %510 : vector<8x128xf32>
    %cst_151 = arith.constant 1.000000e+00 : f32
    %512 = vector.broadcast %cst_151 : f32 to vector<8x128xf32>
    %513 = arith.addf %512, %511 : vector<8x128xf32>
    %514 = arith.divf %512, %513 : vector<8x128xf32>
    %515 = vector.extract_strided_slice %502 {offsets = [0, 256], sizes = [8, 128], strides = [1, 1]} : vector<8x512xf32> to vector<8x128xf32>
    %516 = math.tanh %515 : vector<8x128xf32>
    %517 = vector.extract_strided_slice %502 {offsets = [0, 384], sizes = [8, 128], strides = [1, 1]} : vector<8x512xf32> to vector<8x128xf32>
    %518 = arith.negf %517 : vector<8x128xf32>
    %519 = math.exp %518 : vector<8x128xf32>
    %cst_152 = arith.constant 1.000000e+00 : f32
    %520 = vector.broadcast %cst_152 : f32 to vector<8x128xf32>
    %521 = arith.addf %520, %519 : vector<8x128xf32>
    %522 = arith.divf %520, %521 : vector<8x128xf32>
    %523 = arith.mulf %514, %492 : vector<8x128xf32>
    %524 = arith.mulf %508, %516 : vector<8x128xf32>
    %525 = arith.addf %523, %524 : vector<8x128xf32>
    %526 = math.tanh %525 : vector<8x128xf32>
    %527 = arith.mulf %522, %526 : vector<8x128xf32>
    %528 = arith.index_cast %498 : i32 to index
    %c0_153 = arith.constant 0 : index
    %529 = vector.load %arg7[%528, %c0_153] : memref<64x128xf32, #tpu.memory_space<vmem>>, vector<8x128xf32>
    tpu.vector_store %arg7[%528, %c0_153], %527 {strides = array<i32>} : memref<64x128xf32, #tpu.memory_space<vmem>>, vector<8x128xf32>,
    %c7_i32_154 = arith.constant 7 : i32
    %c8_i32_155 = arith.constant 8 : i32
    %530 = arith.muli %c7_i32_154, %c8_i32_155 : i32
    %531 = tpu.assume_multiple %530, 8 : i32
    %532 = arith.index_cast %531 : i32 to index
    %c0_156 = arith.constant 0 : index
    %533 = vector.load %arg10[%532, %c0_156] : memref<64x512xf32, #tpu.memory_space<vmem>>, vector<8x512xf32>
    %cst_157 = arith.constant dense<0.000000e+00> : vector<8x512xf32>
    %534 = tpu.matmul %527, %294, %cst_157 {dimension_numbers = #tpu.dot_dimension_numbers<[1], [0], [0], [1], [0, 0, 1, 1], [], []>} : vector<8x128xf32>, vector<128x512xf32>, vector<8x512xf32> -> vector<8x512xf32>
    %535 = arith.addf %533, %534 : vector<8x512xf32>
    %536 = vector.extract_strided_slice %535 {offsets = [0, 0], sizes = [8, 128], strides = [1, 1]} : vector<8x512xf32> to vector<8x128xf32>
    %537 = arith.negf %536 : vector<8x128xf32>
    %538 = math.exp %537 : vector<8x128xf32>
    %cst_158 = arith.constant 1.000000e+00 : f32
    %539 = vector.broadcast %cst_158 : f32 to vector<8x128xf32>
    %540 = arith.addf %539, %538 : vector<8x128xf32>
    %541 = arith.divf %539, %540 : vector<8x128xf32>
    %542 = vector.extract_strided_slice %535 {offsets = [0, 128], sizes = [8, 128], strides = [1, 1]} : vector<8x512xf32> to vector<8x128xf32>
    %543 = arith.negf %542 : vector<8x128xf32>
    %544 = math.exp %543 : vector<8x128xf32>
    %cst_159 = arith.constant 1.000000e+00 : f32
    %545 = vector.broadcast %cst_159 : f32 to vector<8x128xf32>
    %546 = arith.addf %545, %544 : vector<8x128xf32>
    %547 = arith.divf %545, %546 : vector<8x128xf32>
    %548 = vector.extract_strided_slice %535 {offsets = [0, 256], sizes = [8, 128], strides = [1, 1]} : vector<8x512xf32> to vector<8x128xf32>
    %549 = math.tanh %548 : vector<8x128xf32>
    %550 = vector.extract_strided_slice %535 {offsets = [0, 384], sizes = [8, 128], strides = [1, 1]} : vector<8x512xf32> to vector<8x128xf32>
    %551 = arith.negf %550 : vector<8x128xf32>
    %552 = math.exp %551 : vector<8x128xf32>
    %cst_160 = arith.constant 1.000000e+00 : f32
    %553 = vector.broadcast %cst_160 : f32 to vector<8x128xf32>
    %554 = arith.addf %553, %552 : vector<8x128xf32>
    %555 = arith.divf %553, %554 : vector<8x128xf32>
    %556 = arith.mulf %547, %525 : vector<8x128xf32>
    %557 = arith.mulf %541, %549 : vector<8x128xf32>
    %558 = arith.addf %556, %557 : vector<8x128xf32>
    %559 = math.tanh %558 : vector<8x128xf32>
    %560 = arith.mulf %555, %559 : vector<8x128xf32>
    %561 = arith.index_cast %531 : i32 to index
    %c0_161 = arith.constant 0 : index
    %562 = vector.load %arg7[%561, %c0_161] : memref<64x128xf32, #tpu.memory_space<vmem>>, vector<8x128xf32>
    tpu.vector_store %arg7[%561, %c0_161], %560 {strides = array<i32>} : memref<64x128xf32, #tpu.memory_space<vmem>>, vector<8x128xf32>,
    %c8_i32_162 = arith.constant 8 : i32
    %c1_163 = arith.constant 1 : index
    %c0_164 = arith.constant 0 : index
    %c0_165 = arith.constant 0 : index
    %563 = vector.load %arg8[%c1_163, %c0_164, %c0_165] : memref<2x8x128xf32, #tpu.memory_space<vmem>>, vector<1x8x128xf32>
    %564 = vector.shape_cast %563 : vector<1x8x128xf32> to vector<8x128xf32>
    %565 = vector.shape_cast %560 : vector<8x128xf32> to vector<1x8x128xf32>
    tpu.vector_store %arg8[%c1_163, %c0_164, %c0_165], %565 {strides = array<i32>} : memref<2x8x128xf32, #tpu.memory_space<vmem>>, vector<1x8x128xf32>,
    %c1_166 = arith.constant 1 : index
    %c0_167 = arith.constant 0 : index
    %c0_168 = arith.constant 0 : index
    %566 = vector.load %arg9[%c1_166, %c0_167, %c0_168] : memref<2x8x128xf32, #tpu.memory_space<vmem>>, vector<1x8x128xf32>
    %567 = vector.shape_cast %566 : vector<1x8x128xf32> to vector<8x128xf32>
    %568 = vector.shape_cast %558 : vector<8x128xf32> to vector<1x8x128xf32>
    tpu.vector_store %arg9[%c1_166, %c0_167, %c0_168], %568 {strides = array<i32>} : memref<2x8x128xf32, #tpu.memory_space<vmem>>, vector<1x8x128xf32>,
    return
  }
}

</mosaic_0001>

<llo_original>
// kernel: decoder_forward.3
$region0: #{decoder_forward.3}
  #allocation0 [shape = 'u32[]', space=smem, size = 0x4, offset = 0x4, fixed_abs, tag = 'smem constant byte address 0x4 - core index']
  #allocation1 [shape = 'u32[144,128]{1,0:T(1,128)}', space=vmem, size = 0x12000, scoped, tag = 'internal scratch']
  %s0 = inlined_call_operand.vmem [shape: f32[64,128], index: 0, kind: input, shape index: {}]
  %s1 = inlined_call_operand.vmem [shape: f32[128,128], index: 1, kind: input, shape index: {}]
  %s2 = inlined_call_operand.vmem [shape: f32[1,128], index: 2, kind: input, shape index: {}]
  %s3 = inlined_call_operand.vmem [shape: f32[64,128], index: 3, kind: output, shape index: {}]
  %s4 = sld [smem:[#allocation0]]
  $region22: #{decoder_forward.3} parent=0
    _
  %s6 = ssub.s32 1, %s4
  %s7 = scalar_select 0, %s6, %s4
  // Predicated region
  $region2: #{decoder_forward.3} parent=0 // pred_check
    _
  $region3: #{decoder_forward.3} parent=0 // pred_check_branch
    %9 = sbr.rel (0) target = $region5
  $region4: #{decoder_forward.3} parent=0 // pred_region
    _
  $region5: #{decoder_forward.3} parent=0 // pred_fallthru
    _
  // Predicated region
  $region6: #{decoder_forward.3} parent=0 // pred_check
    _
  $region7: #{decoder_forward.3} parent=0 // pred_check_branch
    %11 = sbr.rel (0) target = $region9
  $region8: #{decoder_forward.3} parent=0 // pred_region
    _
  $region9: #{decoder_forward.3} parent=0 // pred_fallthru
    _
  // Predicated region
  $region10: #{decoder_forward.3} parent=0 // pred_check
    _
  $region11: #{decoder_forward.3} parent=0 // pred_check_branch
    %13 = sbr.rel (0) target = $region13
  $region12: #{decoder_forward.3} parent=0 // pred_region
    _
  $region13: #{decoder_forward.3} parent=0 // pred_fallthru
    _
  %v14 = vld [vmem:[%s0] sm:$0xff]
  %v15 = vld [vmem:[%s0 + $0x8] sm:$0xff]
  %v16 = vld [vmem:[%s0 + $0x10] sm:$0xff]
  %v17 = vld [vmem:[%s0 + $0x18] sm:$0xff]
  %v18 = vld [vmem:[%s0 + $0x20] sm:$0xff]
  %v19 = vld [vmem:[%s0 + $0x28] sm:$0xff]
  %v20 = vld [vmem:[%s0 + $0x30] sm:$0xff]
  %v21 = vld [vmem:[%s0 + $0x38] sm:$0xff]
  %v22 = vld [vmem:[%s1] sm:$0xff]
  %v23 = vld [vmem:[%s1 + $0x8] sm:$0xff]
  %v24 = vld [vmem:[%s1 + $0x10] sm:$0xff]
  %v25 = vld [vmem:[%s1 + $0x18] sm:$0xff]
  %v26 = vld [vmem:[%s1 + $0x20] sm:$0xff]
  %v27 = vld [vmem:[%s1 + $0x28] sm:$0xff]
  %v28 = vld [vmem:[%s1 + $0x30] sm:$0xff]
  %v29 = vld [vmem:[%s1 + $0x38] sm:$0xff]
  %v30 = vld [vmem:[%s1 + $0x40] sm:$0xff]
  %v31 = vld [vmem:[%s1 + $0x48] sm:$0xff]
  %v32 = vld [vmem:[%s1 + $0x50] sm:$0xff]
  %v33 = vld [vmem:[%s1 + $0x58] sm:$0xff]
  %v34 = vld [vmem:[%s1 + $0x60] sm:$0xff]
  %v35 = vld [vmem:[%s1 + $0x68] sm:$0xff]
  %v36 = vld [vmem:[%s1 + $0x70] sm:$0xff]
  %v37 = vld [vmem:[%s1 + $0x78] sm:$0xff]
  %v38 = vld [vmem:[%s2] sm:$0x1]
  %v40 = vlaneseq
  %v41 = vshrl.u32 %v40, 7
  %v42 = vsub.s32 0, %v41
  %v43 = vrot.slane %v38, %v42
  %45 = vmatprep.subr.mxu0 0.0
  %46 = vmatpush1.msra.mxu0 %v22
  %47 = vmatprep.subr.mxu0 0.0
  %48 = vmatpush1.msra.mxu0 %v23
  %49 = vmatprep.subr.mxu0 0.0
  %50 = vmatpush1.msra.mxu0 %v24
  %51 = vmatprep.subr.mxu0 0.0
  %52 = vmatpush1.msra.mxu0 %v25
  %53 = vmatprep.subr.mxu0 0.0
  %54 = vmatpush1.msra.mxu0 %v26
  %55 = vmatprep.subr.mxu0 0.0
  %56 = vmatpush1.msra.mxu0 %v27
  %57 = vmatprep.subr.mxu0 0.0
  %58 = vmatpush1.msra.mxu0 %v28
  %59 = vmatprep.subr.mxu0 0.0
  %60 = vmatpush1.msra.mxu0 %v29
  %61 = vmatprep.subr.mxu0 0.0
  %62 = vmatpush1.msra.mxu0 %v30
  %63 = vmatprep.subr.mxu0 0.0
  %64 = vmatpush1.msra.mxu0 %v31
  %65 = vmatprep.subr.mxu0 0.0
  %66 = vmatpush1.msra.mxu0 %v32
  %67 = vmatprep.subr.mxu0 0.0
  %68 = vmatpush1.msra.mxu0 %v33
  %69 = vmatprep.subr.mxu0 0.0
  %70 = vmatpush1.msra.mxu0 %v34
  %71 = vmatprep.subr.mxu0 0.0
  %72 = vmatpush1.msra.mxu0 %v35
  %73 = vmatprep.subr.mxu0 0.0
  %74 = vmatpush1.msra.mxu0 %v36
  %75 = vmatprep.subr.mxu0 0.0
  %76 = vmatpush1.msra.mxu0 %v37
  %77 = vmatprep.subr.mxu0 0.0
  %78 = vmatpush1.msra.mxu0 0.0
  %79 = vmatprep.subr.mxu0 0.0
  %80 = vmatpush1.msra.mxu0 0.0
  %81 = vmatprep.subr.mxu0 0.0
  %82 = vmatpush1.msra.mxu0 0.0
  %83 = vmatprep.subr.mxu0 0.0
  %84 = vmatpush1.msra.mxu0 0.0
  %85 = vmatprep.subr.mxu0 0.0
  %86 = vmatpush1.msra.mxu0 0.0
  %87 = vmatprep.subr.mxu0 0.0
  %88 = vmatpush1.msra.mxu0 0.0
  %89 = vmatprep.subr.mxu0 0.0
  %90 = vmatpush1.msra.mxu0 0.0
  %91 = vmatprep.subr.mxu0 0.0
  %92 = vmatpush1.msra.mxu0 0.0
  %93 = vmatprep.subr.mxu0 0.0
  %94 = vmatpush1.msra.mxu0 0.0
  %95 = vmatprep.subr.mxu0 0.0
  %96 = vmatpush1.msra.mxu0 0.0
  %97 = vmatprep.subr.mxu0 0.0
  %98 = vmatpush1.msra.mxu0 0.0
  %99 = vmatprep.subr.mxu0 0.0
  %100 = vmatpush1.msra.mxu0 0.0
  %101 = vmatprep.subr.mxu0 0.0
  %102 = vmatpush1.msra.mxu0 0.0
  %103 = vmatprep.subr.mxu0 0.0
  %104 = vmatpush1.msra.mxu0 0.0
  %105 = vmatprep.subr.mxu0 0.0
  %106 = vmatpush1.msra.mxu0 0.0
  %107 = vmatprep.subr.mxu0 0.0
  %108 = vmatpush1.msra.mxu0 0.0
  %109 = vmatprep.mubr.f32.mxu0 0.0
  %110 = vmatmul.mubr.f32.gmra.mrb[0].mxu0 %v14
  %v111 = vpop.f32.mrb[0].mxu0
  %v112 = vadd.f32 %v43, %v111
  %v113 = vpop.f32.mrb[0].mxu0
  %114 = vmatprep.mubr.f32.mxu0 0.0
  %115 = vmatmul.mubr.f32.gmra.mrb[0].mxu0 %v15
  %v116 = vpop.f32.mrb[0].mxu0
  %v117 = vadd.f32 %v43, %v116
  %v118 = vpop.f32.mrb[0].mxu0
  %119 = vmatprep.mubr.f32.mxu0 0.0
  %120 = vmatmul.mubr.f32.gmra.mrb[0].mxu0 %v16
  %v121 = vpop.f32.mrb[0].mxu0
  %v122 = vadd.f32 %v43, %v121
  %v123 = vpop.f32.mrb[0].mxu0
  %124 = vmatprep.mubr.f32.mxu0 0.0
  %125 = vmatmul.mubr.f32.gmra.mrb[0].mxu0 %v17
  %v126 = vpop.f32.mrb[0].mxu0
  %v127 = vadd.f32 %v43, %v126
  %v128 = vpop.f32.mrb[0].mxu0
  %129 = vmatprep.mubr.f32.mxu0 0.0
  %130 = vmatmul.mubr.f32.gmra.mrb[0].mxu0 %v18
  %v131 = vpop.f32.mrb[0].mxu0
  %v132 = vadd.f32 %v43, %v131
  %v133 = vpop.f32.mrb[0].mxu0
  %134 = vmatprep.mubr.f32.mxu0 0.0
  %135 = vmatmul.mubr.f32.gmra.mrb[0].mxu0 %v19
  %v136 = vpop.f32.mrb[0].mxu0
  %v137 = vadd.f32 %v43, %v136
  %v138 = vpop.f32.mrb[0].mxu0
  %139 = vmatprep.mubr.f32.mxu0 0.0
  %140 = vmatmul.mubr.f32.gmra.mrb[0].mxu0 %v20
  %v141 = vpop.f32.mrb[0].mxu0
  %v142 = vadd.f32 %v43, %v141
  %v143 = vpop.f32.mrb[0].mxu0
  %144 = vmatprep.mubr.f32.mxu0 0.0
  %145 = vmatmul.mubr.f32.gmra.mrb[0].mxu0 %v21
  %v146 = vpop.f32.mrb[0].mxu0
  %v147 = vadd.f32 %v43, %v146
  %v148 = vpop.f32.mrb[0].mxu0
  %149 = vdwg.mxu0
  %150 = vst [vmem:[%s3] sm:$0xff] %v112
  %151 = vst [vmem:[%s3 + $0x8] sm:$0xff] %v117
  %152 = vst [vmem:[%s3 + $0x10] sm:$0xff] %v122
  %153 = vst [vmem:[%s3 + $0x18] sm:$0xff] %v127
  %154 = vst [vmem:[%s3 + $0x20] sm:$0xff] %v132
  %155 = vst [vmem:[%s3 + $0x28] sm:$0xff] %v137
  %156 = vst [vmem:[%s3 + $0x30] sm:$0xff] %v142
  %157 = vst [vmem:[%s3 + $0x38] sm:$0xff] %v147
  // Predicated region
  $region14: #{decoder_forward.3} parent=0 // pred_check
    _
  $region15: #{decoder_forward.3} parent=0 // pred_check_branch
    %159 = sbr.rel (0) target = $region17
  $region16: #{decoder_forward.3} parent=0 // pred_region
    _
  $region17: #{decoder_forward.3} parent=0 // pred_fallthru
    _
  // Predicated region
  $region18: #{decoder_forward.3} parent=0 // pred_check
    _
  $region19: #{decoder_forward.3} parent=0 // pred_check_branch
    %161 = sbr.rel (0) target = $region21
  $region20: #{decoder_forward.3} parent=0 // pred_region
    _
  $region21: #{decoder_forward.3} parent=0 // pred_fallthru
    _

// kernel: decoder_forward.2
$region0: #{decoder_forward.2}
  #allocation0 [shape = 'u32[]', space=smem, size = 0x4, offset = 0x4, fixed_abs, tag = 'smem constant byte address 0x4 - core index']
  #allocation1 [shape = 'u32[144,128]{1,0:T(1,128)}', space=vmem, size = 0x12000, scoped, tag = 'internal scratch']
  #allocation2 [shape = 'f32[64,512]{1,0:T(8,128)}', space=vmem, size = 0x20000, scoped, tag = 'scratch operand']
  %s0 = inlined_call_operand.vmem [shape: f32[64,128], index: 0, kind: input, shape index: {}]
  %s1 = inlined_call_operand.hbm [shape: f32[128,512], index: 1, kind: input, shape index: {}]
  %s2 = inlined_call_operand.hbm [shape: f32[1,128,512], index: 2, kind: input, shape index: {}]
  %s3 = inlined_call_operand.hbm [shape: f32[2,128,512], index: 3, kind: input, shape index: {}]
  %s4 = inlined_call_operand.vmem [shape: f32[2,1,512], index: 4, kind: input, shape index: {}]
  %s5 = inlined_call_operand.vmem [shape: f32[2,8,128], index: 5, kind: input, shape index: {}]
  %s6 = inlined_call_operand.vmem [shape: f32[2,8,128], index: 6, kind: input, shape index: {}]
  %s7 = inlined_call_operand.vmem [shape: f32[64,128], index: 7, kind: output, shape index: {0}]
  %s8 = inlined_call_operand.vmem [shape: f32[2,8,128], index: 8, kind: output, shape index: {1}]
  %s9 = inlined_call_operand.vmem [shape: f32[2,8,128], index: 9, kind: output, shape index: {2}]
  %10 = xla_tuple %s7, %s8, %s9
  %s11 = sld [smem:[#allocation0]]
  $region66: #{decoder_forward.2} parent=0
    _
  %s13 = ssub.s32 1, %s11
  %s14 = scalar_select 0, %s13, %s11
  $region1: #{decoder_forward.2} parent=0
    #allocation3 [shape = 'u8[262144]{0}', space=vmem, size = 0x40000, scoped, tag = 'input window, operand 1, single buffered']
    #allocation4 [shape = 's32[1]{0}', space=sflag, size = 0x4, scoped, tag = 'scoped memory for decoder_forward.2']
    #allocation5 [shape = 'u8[262144]{0}', space=vmem, size = 0x40000, scoped, tag = 'input window, operand 2, single buffered']
    #allocation6 [shape = 's32[1]{0}', space=sflag, size = 0x4, scoped, tag = 'scoped memory for decoder_forward.2']
    #allocation7 [shape = 'u8[524288]{0}', space=vmem, size = 0x80000, scoped, tag = 'input window, operand 3, single buffered']
    %15 = vsyncpa [#allocation4], 0
    %16 = vsyncpa [#allocation6], 0
    // Predicated region
    $region2: #{decoder_forward.2} parent=1 // pred_check
      _
    $region3: #{decoder_forward.2} parent=1 // pred_check_branch
      %18 = sbr.rel (0) target = $region5
    $region4: #{decoder_forward.2} parent=1 // pred_region
      _
    $region5: #{decoder_forward.2} parent=1 // pred_fallthru
      _
    // Predicated region
    $region6: #{decoder_forward.2} parent=1 // pred_check
      _
    $region7: #{decoder_forward.2} parent=1 // pred_check_branch
      %20 = sbr.rel (0) target = $region9
    $region8: #{decoder_forward.2} parent=1 // pred_region
      %s22 = ssub.s32 8192, 8192
      %23 = vsyncadd [#allocation4], %s22
      %s24 = sshll.u32 [#allocation3], 4
      %s25 = int_to_ptr.vmem [resolvable:$true] %s24
      %30 = dma.hbm_to_vmem [thread:$0]  %s1, 8192, %s25, [#allocation4], 512, 512, 32
    $region9: #{decoder_forward.2} parent=1 // pred_fallthru
      _
    // Predicated region
    $region10: #{decoder_forward.2} parent=1 // pred_check
      _
    $region11: #{decoder_forward.2} parent=1 // pred_check_branch
      %32 = sbr.rel (0) target = $region13
    $region12: #{decoder_forward.2} parent=1 // pred_region
      %s34 = ssub.s32 8192, 8192
      %35 = vsyncadd [#allocation6], %s34
      %s36 = sshll.u32 [#allocation5], 4
      %s37 = int_to_ptr.vmem [resolvable:$true] %s36
      %42 = dma.hbm_to_vmem [thread:$0]  %s2, 8192, %s37, [#allocation6], 512, 512, 32
    $region13: #{decoder_forward.2} parent=1 // pred_fallthru
      _
    // Predicated region
    $region14: #{decoder_forward.2} parent=1 // pred_check
      _
    $region15: #{decoder_forward.2} parent=1 // pred_check_branch
      %44 = sbr.rel (0) target = $region17
    $region16: #{decoder_forward.2} parent=1 // pred_region
      %s46 = ssub.s32 16384, 16384
      %47 = vsyncadd [#allocation6], %s46
      %s48 = sshll.u32 [#allocation7], 4
      %s49 = int_to_ptr.vmem [resolvable:$true] %s48
      %54 = dma.hbm_to_vmem [thread:$0]  %s3, 16384, %s49, [#allocation6], 512, 512, 32
    $region17: #{decoder_forward.2} parent=1 // pred_fallthru
      _
    // Predicated region
    $region18: #{decoder_forward.2} parent=1 // pred_check
      _
    $region19: #{decoder_forward.2} parent=1 // pred_check_branch
      %56 = sbr.rel (0) target = $region21
    $region20: #{decoder_forward.2} parent=1 // pred_region
      _
    $region21: #{decoder_forward.2} parent=1 // pred_fallthru
      _
    // Predicated region
    $region22: #{decoder_forward.2} parent=1 // pred_check
      _
    $region23: #{decoder_forward.2} parent=1 // pred_check_branch
      %58 = sbr.rel (0) target = $region25
    $region24: #{decoder_forward.2} parent=1 // pred_region
      _
    $region25: #{decoder_forward.2} parent=1 // pred_fallthru
      _
    // Predicated region
    $region26: #{decoder_forward.2} parent=1 // pred_check
      _
    $region27: #{decoder_forward.2} parent=1 // pred_check_branch
      %60 = sbr.rel (0) target = $region29
    $region28: #{decoder_forward.2} parent=1 // pred_region
      _
    $region29: #{decoder_forward.2} parent=1 // pred_fallthru
      _
    // Predicated region
    $region30: #{decoder_forward.2} parent=1 // pred_check
      _
    $region31: #{decoder_forward.2} parent=1 // pred_check_branch
      %62 = sbr.rel (0) target = $region33
    $region32: #{decoder_forward.2} parent=1 // pred_region
      %63 = dma.done [#allocation4], 8192
    $region33: #{decoder_forward.2} parent=1 // pred_fallthru
      _
    // Predicated region
    $region34: #{decoder_forward.2} parent=1 // pred_check
      _
    $region35: #{decoder_forward.2} parent=1 // pred_check_branch
      %65 = sbr.rel (0) target = $region37
    $region36: #{decoder_forward.2} parent=1 // pred_region
      %66 = dma.done [#allocation6], 8192
    $region37: #{decoder_forward.2} parent=1 // pred_fallthru
      _
    // Predicated region
    $region38: #{decoder_forward.2} parent=1 // pred_check
      _
    $region39: #{decoder_forward.2} parent=1 // pred_check_branch
      %68 = sbr.rel (0) target = $region41
    $region40: #{decoder_forward.2} parent=1 // pred_region
      %69 = dma.done [#allocation6], 16384
    $region41: #{decoder_forward.2} parent=1 // pred_fallthru
      _
    %v70 = vld [vmem:[%s0] sm:$0xff]
    %v71 = vld [vmem:[%s0 + $0x8] sm:$0xff]
    %v72 = vld [vmem:[%s0 + $0x10] sm:$0xff]
    %v73 = vld [vmem:[%s0 + $0x18] sm:$0xff]
    %v74 = vld [vmem:[%s0 + $0x20] sm:$0xff]
    %v75 = vld [vmem:[%s0 + $0x28] sm:$0xff]
    %v76 = vld [vmem:[%s0 + $0x30] sm:$0xff]
    %v77 = vld [vmem:[%s0 + $0x38] sm:$0xff]
    %v78 = vld [vmem:[#allocation3] sm:$0xff]
    %v79 = vld [vmem:[#allocation3 + $0x8] sm:$0xff]
    %v80 = vld [vmem:[#allocation3 + $0x10] sm:$0xff]
    %v81 = vld [vmem:[#allocation3 + $0x18] sm:$0xff]
    %v82 = vld [vmem:[#allocation3 + $0x20] sm:$0xff]
    %v83 = vld [vmem:[#allocation3 + $0x28] sm:$0xff]
    %v84 = vld [vmem:[#allocation3 + $0x30] sm:$0xff]
    %v85 = vld [vmem:[#allocation3 + $0x38] sm:$0xff]
    %v86 = vld [vmem:[#allocation3 + $0x40] sm:$0xff]
    %v87 = vld [vmem:[#allocation3 + $0x48] sm:$0xff]
    %v88 = vld [vmem:[#allocation3 + $0x50] sm:$0xff]
    %v89 = vld [vmem:[#allocation3 + $0x58] sm:$0xff]
    %v90 = vld [vmem:[#allocation3 + $0x60] sm:$0xff]
    %v91 = vld [vmem:[#allocation3 + $0x68] sm:$0xff]
    %v92 = vld [vmem:[#allocation3 + $0x70] sm:$0xff]
    %v93 = vld [vmem:[#allocation3 + $0x78] sm:$0xff]
    %v94 = vld [vmem:[#allocation3 + $0x80] sm:$0xff]
    %v95 = vld [vmem:[#allocation3 + $0x88] sm:$0xff]
    %v96 = vld [vmem:[#allocation3 + $0x90] sm:$0xff]
    %v97 = vld [vmem:[#allocation3 + $0x98] sm:$0xff]
    %v98 = vld [vmem:[#allocation3 + $0xa0] sm:$0xff]
    %v99 = vld [vmem:[#allocation3 + $0xa8] sm:$0xff]
    %v100 = vld [vmem:[#allocation3 + $0xb0] sm:$0xff]
    %v101 = vld [vmem:[#allocation3 + $0xb8] sm:$0xff]
    %v102 = vld [vmem:[#allocation3 + $0xc0] sm:$0xff]
    %v103 = vld [vmem:[#allocation3 + $0xc8] sm:$0xff]
    %v104 = vld [vmem:[#allocation3 + $0xd0] sm:$0xff]
    %v105 = vld [vmem:[#allocation3 + $0xd8] sm:$0xff]
    %v106 = vld [vmem:[#allocation3 + $0xe0] sm:$0xff]
    %v107 = vld [vmem:[#allocation3 + $0xe8] sm:$0xff]
    %v108 = vld [vmem:[#allocation3 + $0xf0] sm:$0xff]
    %v109 = vld [vmem:[#allocation3 + $0xf8] sm:$0xff]
    %v110 = vld [vmem:[#allocation3 + $0x100] sm:$0xff]
    %v111 = vld [vmem:[#allocation3 + $0x108] sm:$0xff]
    %v112 = vld [vmem:[#allocation3 + $0x110] sm:$0xff]
    %v113 = vld [vmem:[#allocation3 + $0x118] sm:$0xff]
    %v114 = vld [vmem:[#allocation3 + $0x120] sm:$0xff]
    %v115 = vld [vmem:[#allocation3 + $0x128] sm:$0xff]
    %v116 = vld [vmem:[#allocation3 + $0x130] sm:$0xff]
    %v117 = vld [vmem:[#allocation3 + $0x138] sm:$0xff]
    %v118 = vld [vmem:[#allocation3 + $0x140] sm:$0xff]
    %v119 = vld [vmem:[#allocation3 + $0x148] sm:$0xff]
    %v120 = vld [vmem:[#allocation3 + $0x150] sm:$0xff]
    %v121 = vld [vmem:[#allocation3 + $0x158] sm:$0xff]
    %v122 = vld [vmem:[#allocation3 + $0x160] sm:$0xff]
    %v123 = vld [vmem:[#allocation3 + $0x168] sm:$0xff]
    %v124 = vld [vmem:[#allocation3 + $0x170] sm:$0xff]
    %v125 = vld [vmem:[#allocation3 + $0x178] sm:$0xff]
    %v126 = vld [vmem:[#allocation3 + $0x180] sm:$0xff]
    %v127 = vld [vmem:[#allocation3 + $0x188] sm:$0xff]
    %v128 = vld [vmem:[#allocation3 + $0x190] sm:$0xff]
    %v129 = vld [vmem:[#allocation3 + $0x198] sm:$0xff]
    %v130 = vld [vmem:[#allocation3 + $0x1a0] sm:$0xff]
    %v131 = vld [vmem:[#allocation3 + $0x1a8] sm:$0xff]
    %v132 = vld [vmem:[#allocation3 + $0x1b0] sm:$0xff]
    %v133 = vld [vmem:[#allocation3 + $0x1b8] sm:$0xff]
    %v134 = vld [vmem:[#allocation3 + $0x1c0] sm:$0xff]
    %v135 = vld [vmem:[#allocation3 + $0x1c8] sm:$0xff]
    %v136 = vld [vmem:[#allocation3 + $0x1d0] sm:$0xff]
    %v137 = vld [vmem:[#allocation3 + $0x1d8] sm:$0xff]
    %v138 = vld [vmem:[#allocation3 + $0x1e0] sm:$0xff]
    %v139 = vld [vmem:[#allocation3 + $0x1e8] sm:$0xff]
    %v140 = vld [vmem:[#allocation3 + $0x1f0] sm:$0xff]
    %v141 = vld [vmem:[#allocation3 + $0x1f8] sm:$0xff]
    %v142 = vld [vmem:[%s4] sm:$0xf]
    %v144 = vlaneseq
    %v145 = vshrl.u32 %v144, 7
    %v146 = vsub.s32 0, %v145
    %v147 = vrot.slane %v142, %v146
    %v148 = vlaneseq
    %v149 = vshrl.u32 %v148, 7
    %v150 = vsub.s32 1, %v149
    %v151 = vrot.slane %v142, %v150
    %v152 = vlaneseq
    %v153 = vshrl.u32 %v152, 7
    %v154 = vsub.s32 2, %v153
    %v155 = vrot.slane %v142, %v154
    %v156 = vlaneseq
    %v157 = vshrl.u32 %v156, 7
    %v158 = vsub.s32 3, %v157
    %v159 = vrot.slane %v142, %v158
    %164 = vmatprep.subr.mxu0 %v79
    %165 = vmatpush1.msra.mxu0 %v78
    %166 = vmatprep.subr.mxu0 %v83
    %167 = vmatpush1.msra.mxu0 %v82
    %168 = vmatprep.subr.mxu0 %v87
    %169 = vmatpush1.msra.mxu0 %v86
    %170 = vmatprep.subr.mxu0 %v91
    %171 = vmatpush1.msra.mxu0 %v90
    %172 = vmatprep.subr.mxu0 %v95
    %173 = vmatpush1.msra.mxu0 %v94
    %174 = vmatprep.subr.mxu0 %v99
    %175 = vmatpush1.msra.mxu0 %v98
    %176 = vmatprep.subr.mxu0 %v103
    %177 = vmatpush1.msra.mxu0 %v102
    %178 = vmatprep.subr.mxu0 %v107
    %179 = vmatpush1.msra.mxu0 %v106
    %180 = vmatprep.subr.mxu0 %v111
    %181 = vmatpush1.msra.mxu0 %v110
    %182 = vmatprep.subr.mxu0 %v115
    %183 = vmatpush1.msra.mxu0 %v114
    %184 = vmatprep.subr.mxu0 %v119
    %185 = vmatpush1.msra.mxu0 %v118
    %186 = vmatprep.subr.mxu0 %v123
    %187 = vmatpush1.msra.mxu0 %v122
    %188 = vmatprep.subr.mxu0 %v127
    %189 = vmatpush1.msra.mxu0 %v126
    %190 = vmatprep.subr.mxu0 %v131
    %191 = vmatpush1.msra.mxu0 %v130
    %192 = vmatprep.subr.mxu0 %v135
    %193 = vmatpush1.msra.mxu0 %v134
    %194 = vmatprep.subr.mxu0 %v139
    %195 = vmatpush1.msra.mxu0 %v138
    %196 = vmatprep.subr.mxu0 0.0
    %197 = vmatpush1.msra.mxu0 0.0
    %198 = vmatprep.subr.mxu0 0.0
    %199 = vmatpush1.msra.mxu0 0.0
    %200 = vmatprep.subr.mxu0 0.0
    %201 = vmatpush1.msra.mxu0 0.0
    %202 = vmatprep.subr.mxu0 0.0
    %203 = vmatpush1.msra.mxu0 0.0
    %204 = vmatprep.subr.mxu0 0.0
    %205 = vmatpush1.msra.mxu0 0.0
    %206 = vmatprep.subr.mxu0 0.0
    %207 = vmatpush1.msra.mxu0 0.0
    %208 = vmatprep.subr.mxu0 0.0
    %209 = vmatpush1.msra.mxu0 0.0
    %210 = vmatprep.subr.mxu0 0.0
    %211 = vmatpush1.msra.mxu0 0.0
    %212 = vmatprep.subr.mxu0 0.0
    %213 = vmatpush1.msra.mxu0 0.0
    %214 = vmatprep.subr.mxu0 0.0
    %215 = vmatpush1.msra.mxu0 0.0
    %216 = vmatprep.subr.mxu0 0.0
    %217 = vmatpush1.msra.mxu0 0.0
    %218 = vmatprep.subr.mxu0 0.0
    %219 = vmatpush1.msra.mxu0 0.0
    %220 = vmatprep.subr.mxu0 0.0
    %221 = vmatpush1.msra.mxu0 0.0
    %222 = vmatprep.subr.mxu0 0.0
    %223 = vmatpush1.msra.mxu0 0.0
    %224 = vmatprep.subr.mxu0 0.0
    %225 = vmatpush1.msra.mxu0 0.0
    %226 = vmatprep.subr.mxu0 0.0
    %227 = vmatpush1.msra.mxu0 0.0
    %228 = vmatprep.mubr.f32.mxu0 0.0
    %229 = vmatmul.mubr.f32.gmra.mrb[0].mxu0 %v70
    %v230 = vpop.f32.mrb[0].mxu0
    %v231 = vadd.f32 %v147, %v230
    %v232 = vpop.f32.mrb[0].mxu0
    %v233 = vadd.f32 %v151, %v232
    %234 = vmatprep.mubr.f32.mxu0 0.0
    %235 = vmatmul.mubr.f32.gmra.mrb[0].mxu0 %v71
    %v236 = vpop.f32.mrb[0].mxu0
    %v237 = vadd.f32 %v147, %v236
    %v238 = vpop.f32.mrb[0].mxu0
    %v239 = vadd.f32 %v151, %v238
    %240 = vmatprep.mubr.f32.mxu0 0.0
    %241 = vmatmul.mubr.f32.gmra.mrb[0].mxu0 %v72
    %v242 = vpop.f32.mrb[0].mxu0
    %v243 = vadd.f32 %v147, %v242
    %v244 = vpop.f32.mrb[0].mxu0
    %v245 = vadd.f32 %v151, %v244
    %246 = vmatprep.mubr.f32.mxu0 0.0
    %247 = vmatmul.mubr.f32.gmra.mrb[0].mxu0 %v73
    %v248 = vpop.f32.mrb[0].mxu0
    %v249 = vadd.f32 %v147, %v248
    %v250 = vpop.f32.mrb[0].mxu0
    %v251 = vadd.f32 %v151, %v250
    %252 = vmatprep.mubr.f32.mxu0 0.0
    %253 = vmatmul.mubr.f32.gmra.mrb[0].mxu0 %v74
    %v254 = vpop.f32.mrb[0].mxu0
    %v255 = vadd.f32 %v147, %v254
    %v256 = vpop.f32.mrb[0].mxu0
    %v257 = vadd.f32 %v151, %v256
    %258 = vmatprep.mubr.f32.mxu0 0.0
    %259 = vmatmul.mubr.f32.gmra.mrb[0].mxu0 %v75
    %v260 = vpop.f32.mrb[0].mxu0
    %v261 = vadd.f32 %v147, %v260
    %v262 = vpop.f32.mrb[0].mxu0
    %v263 = vadd.f32 %v151, %v262
    %264 = vmatprep.mubr.f32.mxu0 0.0
    %265 = vmatmul.mubr.f32.gmra.mrb[0].mxu0 %v76
    %v266 = vpop.f32.mrb[0].mxu0
    %v267 = vadd.f32 %v147, %v266
    %v268 = vpop.f32.mrb[0].mxu0
    %v269 = vadd.f32 %v151, %v268
    %270 = vmatprep.mubr.f32.mxu0 0.0
    %271 = vmatmul.mubr.f32.gmra.mrb[0].mxu0 %v77
    %v272 = vpop.f32.mrb[0].mxu0
    %v273 = vadd.f32 %v147, %v272
    %v274 = vpop.f32.mrb[0].mxu0
    %v275 = vadd.f32 %v151, %v274
    %276 = vdwg.mxu0
    %277 = vmatprep.subr.mxu0 %v81
    %278 = vmatpush1.msra.mxu0 %v80
    %279 = vmatprep.subr.mxu0 %v85
    %280 = vmatpush1.msra.mxu0 %v84
    %281 = vmatprep.subr.mxu0 %v89
    %282 = vmatpush1.msra.mxu0 %v88
    %283 = vmatprep.subr.mxu0 %v93
    %284 = vmatpush1.msra.mxu0 %v92
    %285 = vmatprep.subr.mxu0 %v97
    %286 = vmatpush1.msra.mxu0 %v96
    %287 = vmatprep.subr.mxu0 %v101
    %288 = vmatpush1.msra.mxu0 %v100
    %289 = vmatprep.subr.mxu0 %v105
    %290 = vmatpush1.msra.mxu0 %v104
    %291 = vmatprep.subr.mxu0 %v109
    %292 = vmatpush1.msra.mxu0 %v108
    %293 = vmatprep.subr.mxu0 %v113
    %294 = vmatpush1.msra.mxu0 %v112
    %295 = vmatprep.subr.mxu0 %v117
    %296 = vmatpush1.msra.mxu0 %v116
    %297 = vmatprep.subr.mxu0 %v121
    %298 = vmatpush1.msra.mxu0 %v120
    %299 = vmatprep.subr.mxu0 %v125
    %300 = vmatpush1.msra.mxu0 %v124
    %301 = vmatprep.subr.mxu0 %v129
    %302 = vmatpush1.msra.mxu0 %v128
    %303 = vmatprep.subr.mxu0 %v133
    %304 = vmatpush1.msra.mxu0 %v132
    %305 = vmatprep.subr.mxu0 %v137
    %306 = vmatpush1.msra.mxu0 %v136
    %307 = vmatprep.subr.mxu0 %v141
    %308 = vmatpush1.msra.mxu0 %v140
    %309 = vmatprep.subr.mxu0 0.0
    %310 = vmatpush1.msra.mxu0 0.0
    %311 = vmatprep.subr.mxu0 0.0
    %312 = vmatpush1.msra.mxu0 0.0
    %313 = vmatprep.subr.mxu0 0.0
    %314 = vmatpush1.msra.mxu0 0.0
    %315 = vmatprep.subr.mxu0 0.0
    %316 = vmatpush1.msra.mxu0 0.0
    %317 = vmatprep.subr.mxu0 0.0
    %318 = vmatpush1.msra.mxu0 0.0
    %319 = vmatprep.subr.mxu0 0.0
    %320 = vmatpush1.msra.mxu0 0.0
    %321 = vmatprep.subr.mxu0 0.0
    %322 = vmatpush1.msra.mxu0 0.0
    %323 = vmatprep.subr.mxu0 0.0
    %324 = vmatpush1.msra.mxu0 0.0
    %325 = vmatprep.subr.mxu0 0.0
    %326 = vmatpush1.msra.mxu0 0.0
    %327 = vmatprep.subr.mxu0 0.0
    %328 = vmatpush1.msra.mxu0 0.0
    %329 = vmatprep.subr.mxu0 0.0
    %330 = vmatpush1.msra.mxu0 0.0
    %331 = vmatprep.subr.mxu0 0.0
    %332 = vmatpush1.msra.mxu0 0.0
    %333 = vmatprep.subr.mxu0 0.0
    %334 = vmatpush1.msra.mxu0 0.0
    %335 = vmatprep.subr.mxu0 0.0
    %336 = vmatpush1.msra.mxu0 0.0
    %337 = vmatprep.subr.mxu0 0.0
    %338 = vmatpush1.msra.mxu0 0.0
    %339 = vmatprep.subr.mxu0 0.0
    %340 = vmatpush1.msra.mxu0 0.0
    %341 = vmatprep.mubr.f32.mxu0 0.0
    %342 = vmatmul.mubr.f32.gmra.mrb[0].mxu0 %v70
    %v343 = vpop.f32.mrb[0].mxu0
    %v344 = vadd.f32 %v155, %v343
    %v345 = vpop.f32.mrb[0].mxu0
    %v346 = vadd.f32 %v159, %v345
    %347 = vmatprep.mubr.f32.mxu0 0.0
    %348 = vmatmul.mubr.f32.gmra.mrb[0].mxu0 %v71
    %v349 = vpop.f32.mrb[0].mxu0
    %v350 = vadd.f32 %v155, %v349
    %v351 = vpop.f32.mrb[0].mxu0
    %v352 = vadd.f32 %v159, %v351
    %353 = vmatprep.mubr.f32.mxu0 0.0
    %354 = vmatmul.mubr.f32.gmra.mrb[0].mxu0 %v72
    %v355 = vpop.f32.mrb[0].mxu0
    %v356 = vadd.f32 %v155, %v355
    %v357 = vpop.f32.mrb[0].mxu0
    %v358 = vadd.f32 %v159, %v357
    %359 = vmatprep.mubr.f32.mxu0 0.0
    %360 = vmatmul.mubr.f32.gmra.mrb[0].mxu0 %v73
    %v361 = vpop.f32.mrb[0].mxu0
    %v362 = vadd.f32 %v155, %v361
    %v363 = vpop.f32.mrb[0].mxu0
    %v364 = vadd.f32 %v159, %v363
    %365 = vmatprep.mubr.f32.mxu0 0.0
    %366 = vmatmul.mubr.f32.gmra.mrb[0].mxu0 %v74
    %v367 = vpop.f32.mrb[0].mxu0
    %v368 = vadd.f32 %v155, %v367
    %v369 = vpop.f32.mrb[0].mxu0
    %v370 = vadd.f32 %v159, %v369
    %371 = vmatprep.mubr.f32.mxu0 0.0
    %372 = vmatmul.mubr.f32.gmra.mrb[0].mxu0 %v75
    %v373 = vpop.f32.mrb[0].mxu0
    %v374 = vadd.f32 %v155, %v373
    %v375 = vpop.f32.mrb[0].mxu0
    %v376 = vadd.f32 %v159, %v375
    %377 = vmatprep.mubr.f32.mxu0 0.0
    %378 = vmatmul.mubr.f32.gmra.mrb[0].mxu0 %v76
    %v379 = vpop.f32.mrb[0].mxu0
    %v380 = vadd.f32 %v155, %v379
    %v381 = vpop.f32.mrb[0].mxu0
    %v382 = vadd.f32 %v159, %v381
    %383 = vmatprep.mubr.f32.mxu0 0.0
    %384 = vmatmul.mubr.f32.gmra.mrb[0].mxu0 %v77
    %v385 = vpop.f32.mrb[0].mxu0
    %v386 = vadd.f32 %v155, %v385
    %v387 = vpop.f32.mrb[0].mxu0
    %v388 = vadd.f32 %v159, %v387
    %389 = vdwg.mxu0
    %390 = vst [vmem:[#allocation2] sm:$0xff] %v231
    %391 = vst [vmem:[#allocation2 + $0x8] sm:$0xff] %v233
    %392 = vst [vmem:[#allocation2 + $0x10] sm:$0xff] %v344
    %393 = vst [vmem:[#allocation2 + $0x18] sm:$0xff] %v346
    %394 = vst [vmem:[#allocation2 + $0x20] sm:$0xff] %v237
    %395 = vst [vmem:[#allocation2 + $0x28] sm:$0xff] %v239
    %396 = vst [vmem:[#allocation2 + $0x30] sm:$0xff] %v350
    %397 = vst [vmem:[#allocation2 + $0x38] sm:$0xff] %v352
    %398 = vst [vmem:[#allocation2 + $0x40] sm:$0xff] %v243
    %399 = vst [vmem:[#allocation2 + $0x48] sm:$0xff] %v245
    %400 = vst [vmem:[#allocation2 + $0x50] sm:$0xff] %v356
    %401 = vst [vmem:[#allocation2 + $0x58] sm:$0xff] %v358
    %402 = vst [vmem:[#allocation2 + $0x60] sm:$0xff] %v249
    %403 = vst [vmem:[#allocation2 + $0x68] sm:$0xff] %v251
    %404 = vst [vmem:[#allocation2 + $0x70] sm:$0xff] %v362
    %405 = vst [vmem:[#allocation2 + $0x78] sm:$0xff] %v364
    %406 = vst [vmem:[#allocation2 + $0x80] sm:$0xff] %v255
    %407 = vst [vmem:[#allocation2 + $0x88] sm:$0xff] %v257
    %408 = vst [vmem:[#allocation2 + $0x90] sm:$0xff] %v368
    %409 = vst [vmem:[#allocation2 + $0x98] sm:$0xff] %v370
    %410 = vst [vmem:[#allocation2 + $0xa0] sm:$0xff] %v261
    %411 = vst [vmem:[#allocation2 + $0xa8] sm:$0xff] %v263
    %412 = vst [vmem:[#allocation2 + $0xb0] sm:$0xff] %v374
    %413 = vst [vmem:[#allocation2 + $0xb8] sm:$0xff] %v376
    %414 = vst [vmem:[#allocation2 + $0xc0] sm:$0xff] %v267
    %415 = vst [vmem:[#allocation2 + $0xc8] sm:$0xff] %v269
    %416 = vst [vmem:[#allocation2 + $0xd0] sm:$0xff] %v380
    %417 = vst [vmem:[#allocation2 + $0xd8] sm:$0xff] %v382
    %418 = vst [vmem:[#allocation2 + $0xe0] sm:$0xff] %v273
    %419 = vst [vmem:[#allocation2 + $0xe8] sm:$0xff] %v275
    %420 = vst [vmem:[#allocation2 + $0xf0] sm:$0xff] %v386
    %421 = vst [vmem:[#allocation2 + $0xf8] sm:$0xff] %v388
    %v422 = vld [vmem:[#allocation7] sm:$0xff]
    %v423 = vld [vmem:[#allocation7 + $0x8] sm:$0xff]
    %v424 = vld [vmem:[#allocation7 + $0x10] sm:$0xff]
    %v425 = vld [vmem:[#allocation7 + $0x18] sm:$0xff]
    %v426 = vld [vmem:[#allocation7 + $0x20] sm:$0xff]
    %v427 = vld [vmem:[#allocation7 + $0x28] sm:$0xff]
    %v428 = vld [vmem:[#allocation7 + $0x30] sm:$0xff]
    %v429 = vld [vmem:[#allocation7 + $0x38] sm:$0xff]
    %v430 = vld [vmem:[#allocation7 + $0x40] sm:$0xff]
    %v431 = vld [vmem:[#allocation7 + $0x48] sm:$0xff]
    %v432 = vld [vmem:[#allocation7 + $0x50] sm:$0xff]
    %v433 = vld [vmem:[#allocation7 + $0x58] sm:$0xff]
    %v434 = vld [vmem:[#allocation7 + $0x60] sm:$0xff]
    %v435 = vld [vmem:[#allocation7 + $0x68] sm:$0xff]
    %v436 = vld [vmem:[#allocation7 + $0x70] sm:$0xff]
    %v437 = vld [vmem:[#allocation7 + $0x78] sm:$0xff]
    %v438 = vld [vmem:[#allocation7 + $0x80] sm:$0xff]
    %v439 = vld [vmem:[#allocation7 + $0x88] sm:$0xff]
    %v440 = vld [vmem:[#allocation7 + $0x90] sm:$0xff]
    %v441 = vld [vmem:[#allocation7 + $0x98] sm:$0xff]
    %v442 = vld [vmem:[#allocation7 + $0xa0] sm:$0xff]
    %v443 = vld [vmem:[#allocation7 + $0xa8] sm:$0xff]
    %v444 = vld [vmem:[#allocation7 + $0xb0] sm:$0xff]
    %v445 = vld [vmem:[#allocation7 + $0xb8] sm:$0xff]
    %v446 = vld [vmem:[#allocation7 + $0xc0] sm:$0xff]
    %v447 = vld [vmem:[#allocation7 + $0xc8] sm:$0xff]
    %v448 = vld [vmem:[#allocation7 + $0xd0] sm:$0xff]
    %v449 = vld [vmem:[#allocation7 + $0xd8] sm:$0xff]
    %v450 = vld [vmem:[#allocation7 + $0xe0] sm:$0xff]
    %v451 = vld [vmem:[#allocation7 + $0xe8] sm:$0xff]
    %v452 = vld [vmem:[#allocation7 + $0xf0] sm:$0xff]
    %v453 = vld [vmem:[#allocation7 + $0xf8] sm:$0xff]
    %v454 = vld [vmem:[#allocation7 + $0x100] sm:$0xff]
    %v455 = vld [vmem:[#allocation7 + $0x108] sm:$0xff]
    %v456 = vld [vmem:[#allocation7 + $0x110] sm:$0xff]
    %v457 = vld [vmem:[#allocation7 + $0x118] sm:$0xff]
    %v458 = vld [vmem:[#allocation7 + $0x120] sm:$0xff]
    %v459 = vld [vmem:[#allocation7 + $0x128] sm:$0xff]
    %v460 = vld [vmem:[#allocation7 + $0x130] sm:$0xff]
    %v461 = vld [vmem:[#allocation7 + $0x138] sm:$0xff]
    %v462 = vld [vmem:[#allocation7 + $0x140] sm:$0xff]
    %v463 = vld [vmem:[#allocation7 + $0x148] sm:$0xff]
    %v464 = vld [vmem:[#allocation7 + $0x150] sm:$0xff]
    %v465 = vld [vmem:[#allocation7 + $0x158] sm:$0xff]
    %v466 = vld [vmem:[#allocation7 + $0x160] sm:$0xff]
    %v467 = vld [vmem:[#allocation7 + $0x168] sm:$0xff]
    %v468 = vld [vmem:[#allocation7 + $0x170] sm:$0xff]
    %v469 = vld [vmem:[#allocation7 + $0x178] sm:$0xff]
    %v470 = vld [vmem:[#allocation7 + $0x180] sm:$0xff]
    %v471 = vld [vmem:[#allocation7 + $0x188] sm:$0xff]
    %v472 = vld [vmem:[#allocation7 + $0x190] sm:$0xff]
    %v473 = vld [vmem:[#allocation7 + $0x198] sm:$0xff]
    %v474 = vld [vmem:[#allocation7 + $0x1a0] sm:$0xff]
    %v475 = vld [vmem:[#allocation7 + $0x1a8] sm:$0xff]
    %v476 = vld [vmem:[#allocation7 + $0x1b0] sm:$0xff]
    %v477 = vld [vmem:[#allocation7 + $0x1b8] sm:$0xff]
    %v478 = vld [vmem:[#allocation7 + $0x1c0] sm:$0xff]
    %v479 = vld [vmem:[#allocation7 + $0x1c8] sm:$0xff]
    %v480 = vld [vmem:[#allocation7 + $0x1d0] sm:$0xff]
    %v481 = vld [vmem:[#allocation7 + $0x1d8] sm:$0xff]
    %v482 = vld [vmem:[#allocation7 + $0x1e0] sm:$0xff]
    %v483 = vld [vmem:[#allocation7 + $0x1e8] sm:$0xff]
    %v484 = vld [vmem:[#allocation7 + $0x1f0] sm:$0xff]
    %v485 = vld [vmem:[#allocation7 + $0x1f8] sm:$0xff]
    %v486 = vld [vmem:[%s5] sm:$0xff]
    %v487 = vld [vmem:[%s6] sm:$0xff]
    %s488 = smul.u32 0, 4
    %s489 = smul.addr %s488, 8
    %s490 = scalar_lea.vmem [#allocation2], %s489
    %v491 = vld [vmem:[%s490] sm:$0xff]
    %v492 = vld [vmem:[%s490 + $0x8] sm:$0xff]
    %v493 = vld [vmem:[%s490 + $0x10] sm:$0xff]
    %v494 = vld [vmem:[%s490 + $0x18] sm:$0xff]
    %495 = vmatprep.subr.mxu0 %v423
    %496 = vmatpush1.msra.mxu0 %v422
    %497 = vmatprep.subr.mxu0 %v427
    %498 = vmatpush1.msra.mxu0 %v426
    %499 = vmatprep.subr.mxu0 %v431
    %500 = vmatpush1.msra.mxu0 %v430
    %501 = vmatprep.subr.mxu0 %v435
    %502 = vmatpush1.msra.mxu0 %v434
    %503 = vmatprep.subr.mxu0 %v439
    %504 = vmatpush1.msra.mxu0 %v438
    %505 = vmatprep.subr.mxu0 %v443
    %506 = vmatpush1.msra.mxu0 %v442
    %507 = vmatprep.subr.mxu0 %v447
    %508 = vmatpush1.msra.mxu0 %v446
    %509 = vmatprep.subr.mxu0 %v451
    %510 = vmatpush1.msra.mxu0 %v450
    %511 = vmatprep.subr.mxu0 %v455
    %512 = vmatpush1.msra.mxu0 %v454
    %513 = vmatprep.subr.mxu0 %v459
    %514 = vmatpush1.msra.mxu0 %v458
    %515 = vmatprep.subr.mxu0 %v463
    %516 = vmatpush1.msra.mxu0 %v462
    %517 = vmatprep.subr.mxu0 %v467
    %518 = vmatpush1.msra.mxu0 %v466
    %519 = vmatprep.subr.mxu0 %v471
    %520 = vmatpush1.msra.mxu0 %v470
    %521 = vmatprep.subr.mxu0 %v475
    %522 = vmatpush1.msra.mxu0 %v474
    %523 = vmatprep.subr.mxu0 %v479
    %524 = vmatpush1.msra.mxu0 %v478
    %525 = vmatprep.subr.mxu0 %v483
    %526 = vmatpush1.msra.mxu0 %v482
    %527 = vmatprep.subr.mxu0 0.0
    %528 = vmatpush1.msra.mxu0 0.0
    %529 = vmatprep.subr.mxu0 0.0
    %530 = vmatpush1.msra.mxu0 0.0
    %531 = vmatprep.subr.mxu0 0.0
    %532 = vmatpush1.msra.mxu0 0.0
    %533 = vmatprep.subr.mxu0 0.0
    %534 = vmatpush1.msra.mxu0 0.0
    %535 = vmatprep.subr.mxu0 0.0
    %536 = vmatpush1.msra.mxu0 0.0
    %537 = vmatprep.subr.mxu0 0.0
    %538 = vmatpush1.msra.mxu0 0.0
    %539 = vmatprep.subr.mxu0 0.0
    %540 = vmatpush1.msra.mxu0 0.0
    %541 = vmatprep.subr.mxu0 0.0
    %542 = vmatpush1.msra.mxu0 0.0
    %543 = vmatprep.subr.mxu0 0.0
    %544 = vmatpush1.msra.mxu0 0.0
    %545 = vmatprep.subr.mxu0 0.0
    %546 = vmatpush1.msra.mxu0 0.0
    %547 = vmatprep.subr.mxu0 0.0
    %548 = vmatpush1.msra.mxu0 0.0
    %549 = vmatprep.subr.mxu0 0.0
    %550 = vmatpush1.msra.mxu0 0.0
    %551 = vmatprep.subr.mxu0 0.0
    %552 = vmatpush1.msra.mxu0 0.0
    %553 = vmatprep.subr.mxu0 0.0
    %554 = vmatpush1.msra.mxu0 0.0
    %555 = vmatprep.subr.mxu0 0.0
    %556 = vmatpush1.msra.mxu0 0.0
    %557 = vmatprep.subr.mxu0 0.0
    %558 = vmatpush1.msra.mxu0 0.0
    %559 = vmatprep.mubr.f32.mxu0 0.0
    %560 = vmatmul.mubr.f32.gmra.mrb[0].mxu0 %v486
    %v561 = vpop.f32.mrb[0].mxu0
    %v562 = vadd.f32 0.0, %v561
    %v563 = vpop.f32.mrb[0].mxu0
    %v564 = vadd.f32 0.0, %v563
    %565 = vdwg.mxu0
    %566 = vmatprep.subr.mxu0 %v425
    %567 = vmatpush1.msra.mxu0 %v424
    %568 = vmatprep.subr.mxu0 %v429
    %569 = vmatpush1.msra.mxu0 %v428
    %570 = vmatprep.subr.mxu0 %v433
    %571 = vmatpush1.msra.mxu0 %v432
    %572 = vmatprep.subr.mxu0 %v437
    %573 = vmatpush1.msra.mxu0 %v436
    %574 = vmatprep.subr.mxu0 %v441
    %575 = vmatpush1.msra.mxu0 %v440
    %576 = vmatprep.subr.mxu0 %v445
    %577 = vmatpush1.msra.mxu0 %v444
    %578 = vmatprep.subr.mxu0 %v449
    %579 = vmatpush1.msra.mxu0 %v448
    %580 = vmatprep.subr.mxu0 %v453
    %581 = vmatpush1.msra.mxu0 %v452
    %582 = vmatprep.subr.mxu0 %v457
    %583 = vmatpush1.msra.mxu0 %v456
    %584 = vmatprep.subr.mxu0 %v461
    %585 = vmatpush1.msra.mxu0 %v460
    %586 = vmatprep.subr.mxu0 %v465
    %587 = vmatpush1.msra.mxu0 %v464
    %588 = vmatprep.subr.mxu0 %v469
    %589 = vmatpush1.msra.mxu0 %v468
    %590 = vmatprep.subr.mxu0 %v473
    %591 = vmatpush1.msra.mxu0 %v472
    %592 = vmatprep.subr.mxu0 %v477
    %593 = vmatpush1.msra.mxu0 %v476
    %594 = vmatprep.subr.mxu0 %v481
    %595 = vmatpush1.msra.mxu0 %v480
    %596 = vmatprep.subr.mxu0 %v485
    %597 = vmatpush1.msra.mxu0 %v484
    %598 = vmatprep.subr.mxu0 0.0
    %599 = vmatpush1.msra.mxu0 0.0
    %600 = vmatprep.subr.mxu0 0.0
    %601 = vmatpush1.msra.mxu0 0.0
    %602 = vmatprep.subr.mxu0 0.0
    %603 = vmatpush1.msra.mxu0 0.0
    %604 = vmatprep.subr.mxu0 0.0
    %605 = vmatpush1.msra.mxu0 0.0
    %606 = vmatprep.subr.mxu0 0.0
    %607 = vmatpush1.msra.mxu0 0.0
    %608 = vmatprep.subr.mxu0 0.0
    %609 = vmatpush1.msra.mxu0 0.0
    %610 = vmatprep.subr.mxu0 0.0
    %611 = vmatpush1.msra.mxu0 0.0
    %612 = vmatprep.subr.mxu0 0.0
    %613 = vmatpush1.msra.mxu0 0.0
    %614 = vmatprep.subr.mxu0 0.0
    %615 = vmatpush1.msra.mxu0 0.0
    %616 = vmatprep.subr.mxu0 0.0
    %617 = vmatpush1.msra.mxu0 0.0
    %618 = vmatprep.subr.mxu0 0.0
    %619 = vmatpush1.msra.mxu0 0.0
    %620 = vmatprep.subr.mxu0 0.0
    %621 = vmatpush1.msra.mxu0 0.0
    %622 = vmatprep.subr.mxu0 0.0
    %623 = vmatpush1.msra.mxu0 0.0
    %624 = vmatprep.subr.mxu0 0.0
    %625 = vmatpush1.msra.mxu0 0.0
    %626 = vmatprep.subr.mxu0 0.0
    %627 = vmatpush1.msra.mxu0 0.0
    %628 = vmatprep.subr.mxu0 0.0
    %629 = vmatpush1.msra.mxu0 0.0
    %630 = vmatprep.mubr.f32.mxu0 0.0
    %631 = vmatmul.mubr.f32.gmra.mrb[0].mxu0 %v486
    %v632 = vpop.f32.mrb[0].mxu0
    %v633 = vadd.f32 0.0, %v632
    %v634 = vpop.f32.mrb[0].mxu0
    %v635 = vadd.f32 0.0, %v634
    %636 = vdwg.mxu0
    %v637 = vadd.f32 %v491, %v562
    %v638 = vadd.f32 %v492, %v564
    %v639 = vadd.f32 %v493, %v633
    %v640 = vadd.f32 %v494, %v635
    %v641 = vxor.u32 %v637, 2147483648
    %v642 = vmul.f32 %v641, 1.442695
    %v643 = vpow.pop %v642
    %v644 = vadd.f32 %v643, 1.0
    %v645 = vrcp.pop %v644
    %v646 = vmul.f32 1.0, %v645
    %v647 = vxor.u32 %v638, 2147483648
    %v648 = vmul.f32 %v647, 1.442695
    %v649 = vpow.pop %v648
    %v650 = vadd.f32 %v649, 1.0
    %v651 = vrcp.pop %v650
    %v652 = vmul.f32 1.0, %v651
    %v653 = vtanh.pop %v639
    %v654 = vxor.u32 %v640, 2147483648
    %v655 = vmul.f32 %v654, 1.442695
    %v656 = vpow.pop %v655
    %v657 = vadd.f32 %v656, 1.0
    %v658 = vrcp.pop %v657
    %v659 = vmul.f32 1.0, %v658
    %v660 = vmul.f32 %v652, %v487
    %v661 = vmul.f32 %v646, %v653
    %v662 = vadd.f32 %v660, %v661
    %v663 = vtanh.pop %v662
    %v664 = vmul.f32 %v659, %v663
    %665 = vst [vmem:[%s7] sm:$0xff] %v664
    %s666 = smul.u32 1, 4
    %s667 = smul.addr %s666, 8
    %s668 = scalar_lea.vmem [#allocation2], %s667
    %v669 = vld [vmem:[%s668] sm:$0xff]
    %v670 = vld [vmem:[%s668 + $0x8] sm:$0xff]
    %v671 = vld [vmem:[%s668 + $0x10] sm:$0xff]
    %v672 = vld [vmem:[%s668 + $0x18] sm:$0xff]
    %673 = vmatprep.subr.mxu0 %v423
    %674 = vmatpush1.msra.mxu0 %v422
    %675 = vmatprep.subr.mxu0 %v427
    %676 = vmatpush1.msra.mxu0 %v426
    %677 = vmatprep.subr.mxu0 %v431
    %678 = vmatpush1.msra.mxu0 %v430
    %679 = vmatprep.subr.mxu0 %v435
    %680 = vmatpush1.msra.mxu0 %v434
    %681 = vmatprep.subr.mxu0 %v439
    %682 = vmatpush1.msra.mxu0 %v438
    %683 = vmatprep.subr.mxu0 %v443
    %684 = vmatpush1.msra.mxu0 %v442
    %685 = vmatprep.subr.mxu0 %v447
    %686 = vmatpush1.msra.mxu0 %v446
    %687 = vmatprep.subr.mxu0 %v451
    %688 = vmatpush1.msra.mxu0 %v450
    %689 = vmatprep.subr.mxu0 %v455
    %690 = vmatpush1.msra.mxu0 %v454
    %691 = vmatprep.subr.mxu0 %v459
    %692 = vmatpush1.msra.mxu0 %v458
    %693 = vmatprep.subr.mxu0 %v463
    %694 = vmatpush1.msra.mxu0 %v462
    %695 = vmatprep.subr.mxu0 %v467
    %696 = vmatpush1.msra.mxu0 %v466
    %697 = vmatprep.subr.mxu0 %v471
    %698 = vmatpush1.msra.mxu0 %v470
    %699 = vmatprep.subr.mxu0 %v475
    %700 = vmatpush1.msra.mxu0 %v474
    %701 = vmatprep.subr.mxu0 %v479
    %702 = vmatpush1.msra.mxu0 %v478
    %703 = vmatprep.subr.mxu0 %v483
    %704 = vmatpush1.msra.mxu0 %v482
    %705 = vmatprep.subr.mxu0 0.0
    %706 = vmatpush1.msra.mxu0 0.0
    %707 = vmatprep.subr.mxu0 0.0
    %708 = vmatpush1.msra.mxu0 0.0
    %709 = vmatprep.subr.mxu0 0.0
    %710 = vmatpush1.msra.mxu0 0.0
    %711 = vmatprep.subr.mxu0 0.0
    %712 = vmatpush1.msra.mxu0 0.0
    %713 = vmatprep.subr.mxu0 0.0
    %714 = vmatpush1.msra.mxu0 0.0
    %715 = vmatprep.subr.mxu0 0.0
    %716 = vmatpush1.msra.mxu0 0.0
    %717 = vmatprep.subr.mxu0 0.0
    %718 = vmatpush1.msra.mxu0 0.0
    %719 = vmatprep.subr.mxu0 0.0
    %720 = vmatpush1.msra.mxu0 0.0
    %721 = vmatprep.subr.mxu0 0.0
    %722 = vmatpush1.msra.mxu0 0.0
    %723 = vmatprep.subr.mxu0 0.0
    %724 = vmatpush1.msra.mxu0 0.0
    %725 = vmatprep.subr.mxu0 0.0
    %726 = vmatpush1.msra.mxu0 0.0
    %727 = vmatprep.subr.mxu0 0.0
    %728 = vmatpush1.msra.mxu0 0.0
    %729 = vmatprep.subr.mxu0 0.0
    %730 = vmatpush1.msra.mxu0 0.0
    %731 = vmatprep.subr.mxu0 0.0
    %732 = vmatpush1.msra.mxu0 0.0
    %733 = vmatprep.subr.mxu0 0.0
    %734 = vmatpush1.msra.mxu0 0.0
    %735 = vmatprep.subr.mxu0 0.0
    %736 = vmatpush1.msra.mxu0 0.0
    %737 = vmatprep.mubr.f32.mxu0 0.0
    %738 = vmatmul.mubr.f32.gmra.mrb[0].mxu0 %v664
    %v739 = vpop.f32.mrb[0].mxu0
    %v740 = vadd.f32 0.0, %v739
    %v741 = vpop.f32.mrb[0].mxu0
    %v742 = vadd.f32 0.0, %v741
    %743 = vdwg.mxu0
    %744 = vmatprep.subr.mxu0 %v425
    %745 = vmatpush1.msra.mxu0 %v424
    %746 = vmatprep.subr.mxu0 %v429
    %747 = vmatpush1.msra.mxu0 %v428
    %748 = vmatprep.subr.mxu0 %v433
    %749 = vmatpush1.msra.mxu0 %v432
    %750 = vmatprep.subr.mxu0 %v437
    %751 = vmatpush1.msra.mxu0 %v436
    %752 = vmatprep.subr.mxu0 %v441
    %753 = vmatpush1.msra.mxu0 %v440
    %754 = vmatprep.subr.mxu0 %v445
    %755 = vmatpush1.msra.mxu0 %v444
    %756 = vmatprep.subr.mxu0 %v449
    %757 = vmatpush1.msra.mxu0 %v448
    %758 = vmatprep.subr.mxu0 %v453
    %759 = vmatpush1.msra.mxu0 %v452
    %760 = vmatprep.subr.mxu0 %v457
    %761 = vmatpush1.msra.mxu0 %v456
    %762 = vmatprep.subr.mxu0 %v461
    %763 = vmatpush1.msra.mxu0 %v460
    %764 = vmatprep.subr.mxu0 %v465
    %765 = vmatpush1.msra.mxu0 %v464
    %766 = vmatprep.subr.mxu0 %v469
    %767 = vmatpush1.msra.mxu0 %v468
    %768 = vmatprep.subr.mxu0 %v473
    %769 = vmatpush1.msra.mxu0 %v472
    %770 = vmatprep.subr.mxu0 %v477
    %771 = vmatpush1.msra.mxu0 %v476
    %772 = vmatprep.subr.mxu0 %v481
    %773 = vmatpush1.msra.mxu0 %v480
    %774 = vmatprep.subr.mxu0 %v485
    %775 = vmatpush1.msra.mxu0 %v484
    %776 = vmatprep.subr.mxu0 0.0
    %777 = vmatpush1.msra.mxu0 0.0
    %778 = vmatprep.subr.mxu0 0.0
    %779 = vmatpush1.msra.mxu0 0.0
    %780 = vmatprep.subr.mxu0 0.0
    %781 = vmatpush1.msra.mxu0 0.0
    %782 = vmatprep.subr.mxu0 0.0
    %783 = vmatpush1.msra.mxu0 0.0
    %784 = vmatprep.subr.mxu0 0.0
    %785 = vmatpush1.msra.mxu0 0.0
    %786 = vmatprep.subr.mxu0 0.0
    %787 = vmatpush1.msra.mxu0 0.0
    %788 = vmatprep.subr.mxu0 0.0
    %789 = vmatpush1.msra.mxu0 0.0
    %790 = vmatprep.subr.mxu0 0.0
    %791 = vmatpush1.msra.mxu0 0.0
    %792 = vmatprep.subr.mxu0 0.0
    %793 = vmatpush1.msra.mxu0 0.0
    %794 = vmatprep.subr.mxu0 0.0
    %795 = vmatpush1.msra.mxu0 0.0
    %796 = vmatprep.subr.mxu0 0.0
    %797 = vmatpush1.msra.mxu0 0.0
    %798 = vmatprep.subr.mxu0 0.0
    %799 = vmatpush1.msra.mxu0 0.0
    %800 = vmatprep.subr.mxu0 0.0
    %801 = vmatpush1.msra.mxu0 0.0
    %802 = vmatprep.subr.mxu0 0.0
    %803 = vmatpush1.msra.mxu0 0.0
    %804 = vmatprep.subr.mxu0 0.0
    %805 = vmatpush1.msra.mxu0 0.0
    %806 = vmatprep.subr.mxu0 0.0
    %807 = vmatpush1.msra.mxu0 0.0
    %808 = vmatprep.mubr.f32.mxu0 0.0
    %809 = vmatmul.mubr.f32.gmra.mrb[0].mxu0 %v664
    %v810 = vpop.f32.mrb[0].mxu0
    %v811 = vadd.f32 0.0, %v810
    %v812 = vpop.f32.mrb[0].mxu0
    %v813 = vadd.f32 0.0, %v812
    %814 = vdwg.mxu0
    %v815 = vadd.f32 %v669, %v740
    %v816 = vadd.f32 %v670, %v742
    %v817 = vadd.f32 %v671, %v811
    %v818 = vadd.f32 %v672, %v813
    %v819 = vxor.u32 %v815, 2147483648
    %v820 = vmul.f32 %v819, 1.442695
    %v821 = vpow.pop %v820
    %v822 = vadd.f32 %v821, 1.0
    %v823 = vrcp.pop %v822
    %v824 = vmul.f32 1.0, %v823
    %v825 = vxor.u32 %v816, 2147483648
    %v826 = vmul.f32 %v825, 1.442695
    %v827 = vpow.pop %v826
    %v828 = vadd.f32 %v827, 1.0
    %v829 = vrcp.pop %v828
    %v830 = vmul.f32 1.0, %v829
    %v831 = vtanh.pop %v817
    %v832 = vxor.u32 %v818, 2147483648
    %v833 = vmul.f32 %v832, 1.442695
    %v834 = vpow.pop %v833
    %v835 = vadd.f32 %v834, 1.0
    %v836 = vrcp.pop %v835
    %v837 = vmul.f32 1.0, %v836
    %v838 = vmul.f32 %v830, %v662
    %v839 = vmul.f32 %v824, %v831
    %v840 = vadd.f32 %v838, %v839
    %v841 = vtanh.pop %v840
    %v842 = vmul.f32 %v837, %v841
    %s843 = scalar_lea.vmem %s7, 8
    %844 = vst [vmem:[%s843] sm:$0xff] %v842
    %s845 = smul.u32 2, 4
    %s846 = smul.addr %s845, 8
    %s847 = scalar_lea.vmem [#allocation2], %s846
    %v848 = vld [vmem:[%s847] sm:$0xff]
    %v849 = vld [vmem:[%s847 + $0x8] sm:$0xff]
    %v850 = vld [vmem:[%s847 + $0x10] sm:$0xff]
    %v851 = vld [vmem:[%s847 + $0x18] sm:$0xff]
    %852 = vmatprep.subr.mxu0 %v423
    %853 = vmatpush1.msra.mxu0 %v422
    %854 = vmatprep.subr.mxu0 %v427
    %855 = vmatpush1.msra.mxu0 %v426
    %856 = vmatprep.subr.mxu0 %v431
    %857 = vmatpush1.msra.mxu0 %v430
    %858 = vmatprep.subr.mxu0 %v435
    %859 = vmatpush1.msra.mxu0 %v434
    %860 = vmatprep.subr.mxu0 %v439
    %861 = vmatpush1.msra.mxu0 %v438
    %862 = vmatprep.subr.mxu0 %v443
    %863 = vmatpush1.msra.mxu0 %v442
    %864 = vmatprep.subr.mxu0 %v447
    %865 = vmatpush1.msra.mxu0 %v446
    %866 = vmatprep.subr.mxu0 %v451
    %867 = vmatpush1.msra.mxu0 %v450
    %868 = vmatprep.subr.mxu0 %v455
    %869 = vmatpush1.msra.mxu0 %v454
    %870 = vmatprep.subr.mxu0 %v459
    %871 = vmatpush1.msra.mxu0 %v458
    %872 = vmatprep.subr.mxu0 %v463
    %873 = vmatpush1.msra.mxu0 %v462
    %874 = vmatprep.subr.mxu0 %v467
    %875 = vmatpush1.msra.mxu0 %v466
    %876 = vmatprep.subr.mxu0 %v471
    %877 = vmatpush1.msra.mxu0 %v470
    %878 = vmatprep.subr.mxu0 %v475
    %879 = vmatpush1.msra.mxu0 %v474
    %880 = vmatprep.subr.mxu0 %v479
    %881 = vmatpush1.msra.mxu0 %v478
    %882 = vmatprep.subr.mxu0 %v483
    %883 = vmatpush1.msra.mxu0 %v482
    %884 = vmatprep.subr.mxu0 0.0
    %885 = vmatpush1.msra.mxu0 0.0
    %886 = vmatprep.subr.mxu0 0.0
    %887 = vmatpush1.msra.mxu0 0.0
    %888 = vmatprep.subr.mxu0 0.0
    %889 = vmatpush1.msra.mxu0 0.0
    %890 = vmatprep.subr.mxu0 0.0
    %891 = vmatpush1.msra.mxu0 0.0
    %892 = vmatprep.subr.mxu0 0.0
    %893 = vmatpush1.msra.mxu0 0.0
    %894 = vmatprep.subr.mxu0 0.0
    %895 = vmatpush1.msra.mxu0 0.0
    %896 = vmatprep.subr.mxu0 0.0
    %897 = vmatpush1.msra.mxu0 0.0
    %898 = vmatprep.subr.mxu0 0.0
    %899 = vmatpush1.msra.mxu0 0.0
    %900 = vmatprep.subr.mxu0 0.0
    %901 = vmatpush1.msra.mxu0 0.0
    %902 = vmatprep.subr.mxu0 0.0
    %903 = vmatpush1.msra.mxu0 0.0
    %904 = vmatprep.subr.mxu0 0.0
    %905 = vmatpush1.msra.mxu0 0.0
    %906 = vmatprep.subr.mxu0 0.0
    %907 = vmatpush1.msra.mxu0 0.0
    %908 = vmatprep.subr.mxu0 0.0
    %909 = vmatpush1.msra.mxu0 0.0
    %910 = vmatprep.subr.mxu0 0.0
    %911 = vmatpush1.msra.mxu0 0.0
    %912 = vmatprep.subr.mxu0 0.0
    %913 = vmatpush1.msra.mxu0 0.0
    %914 = vmatprep.subr.mxu0 0.0
    %915 = vmatpush1.msra.mxu0 0.0
    %916 = vmatprep.mubr.f32.mxu0 0.0
    %917 = vmatmul.mubr.f32.gmra.mrb[0].mxu0 %v842
    %v918 = vpop.f32.mrb[0].mxu0
    %v919 = vadd.f32 0.0, %v918
    %v920 = vpop.f32.mrb[0].mxu0
    %v921 = vadd.f32 0.0, %v920
    %922 = vdwg.mxu0
    %923 = vmatprep.subr.mxu0 %v425
    %924 = vmatpush1.msra.mxu0 %v424
    %925 = vmatprep.subr.mxu0 %v429
    %926 = vmatpush1.msra.mxu0 %v428
    %927 = vmatprep.subr.mxu0 %v433
    %928 = vmatpush1.msra.mxu0 %v432
    %929 = vmatprep.subr.mxu0 %v437
    %930 = vmatpush1.msra.mxu0 %v436
    %931 = vmatprep.subr.mxu0 %v441
    %932 = vmatpush1.msra.mxu0 %v440
    %933 = vmatprep.subr.mxu0 %v445
    %934 = vmatpush1.msra.mxu0 %v444
    %935 = vmatprep.subr.mxu0 %v449
    %936 = vmatpush1.msra.mxu0 %v448
    %937 = vmatprep.subr.mxu0 %v453
    %938 = vmatpush1.msra.mxu0 %v452
    %939 = vmatprep.subr.mxu0 %v457
    %940 = vmatpush1.msra.mxu0 %v456
    %941 = vmatprep.subr.mxu0 %v461
    %942 = vmatpush1.msra.mxu0 %v460
    %943 = vmatprep.subr.mxu0 %v465
    %944 = vmatpush1.msra.mxu0 %v464
    %945 = vmatprep.subr.mxu0 %v469
    %946 = vmatpush1.msra.mxu0 %v468
    %947 = vmatprep.subr.mxu0 %v473
    %948 = vmatpush1.msra.mxu0 %v472
    %949 = vmatprep.subr.mxu0 %v477
    %950 = vmatpush1.msra.mxu0 %v476
    %951 = vmatprep.subr.mxu0 %v481
    %952 = vmatpush1.msra.mxu0 %v480
    %953 = vmatprep.subr.mxu0 %v485
    %954 = vmatpush1.msra.mxu0 %v484
    %955 = vmatprep.subr.mxu0 0.0
    %956 = vmatpush1.msra.mxu0 0.0
    %957 = vmatprep.subr.mxu0 0.0
    %958 = vmatpush1.msra.mxu0 0.0
    %959 = vmatprep.subr.mxu0 0.0
    %960 = vmatpush1.msra.mxu0 0.0
    %961 = vmatprep.subr.mxu0 0.0
    %962 = vmatpush1.msra.mxu0 0.0
    %963 = vmatprep.subr.mxu0 0.0
    %964 = vmatpush1.msra.mxu0 0.0
    %965 = vmatprep.subr.mxu0 0.0
    %966 = vmatpush1.msra.mxu0 0.0
    %967 = vmatprep.subr.mxu0 0.0
    %968 = vmatpush1.msra.mxu0 0.0
    %969 = vmatprep.subr.mxu0 0.0
    %970 = vmatpush1.msra.mxu0 0.0
    %971 = vmatprep.subr.mxu0 0.0
    %972 = vmatpush1.msra.mxu0 0.0
    %973 = vmatprep.subr.mxu0 0.0
    %974 = vmatpush1.msra.mxu0 0.0
    %975 = vmatprep.subr.mxu0 0.0
    %976 = vmatpush1.msra.mxu0 0.0
    %977 = vmatprep.subr.mxu0 0.0
    %978 = vmatpush1.msra.mxu0 0.0
    %979 = vmatprep.subr.mxu0 0.0
    %980 = vmatpush1.msra.mxu0 0.0
    %981 = vmatprep.subr.mxu0 0.0
    %982 = vmatpush1.msra.mxu0 0.0
    %983 = vmatprep.subr.mxu0 0.0
    %984 = vmatpush1.msra.mxu0 0.0
    %985 = vmatprep.subr.mxu0 0.0
    %986 = vmatpush1.msra.mxu0 0.0
    %987 = vmatprep.mubr.f32.mxu0 0.0
    %988 = vmatmul.mubr.f32.gmra.mrb[0].mxu0 %v842
    %v989 = vpop.f32.mrb[0].mxu0
    %v990 = vadd.f32 0.0, %v989
    %v991 = vpop.f32.mrb[0].mxu0
    %v992 = vadd.f32 0.0, %v991
    %993 = vdwg.mxu0
    %v994 = vadd.f32 %v848, %v919
    %v995 = vadd.f32 %v849, %v921
    %v996 = vadd.f32 %v850, %v990
    %v997 = vadd.f32 %v851, %v992
    %v998 = vxor.u32 %v994, 2147483648
    %v999 = vmul.f32 %v998, 1.442695
    %v1000 = vpow.pop %v999
    %v1001 = vadd.f32 %v1000, 1.0
    %v1002 = vrcp.pop %v1001
    %v1003 = vmul.f32 1.0, %v1002
    %v1004 = vxor.u32 %v995, 2147483648
    %v1005 = vmul.f32 %v1004, 1.442695
    %v1006 = vpow.pop %v1005
    %v1007 = vadd.f32 %v1006, 1.0
    %v1008 = vrcp.pop %v1007
    %v1009 = vmul.f32 1.0, %v1008
    %v1010 = vtanh.pop %v996
    %v1011 = vxor.u32 %v997, 2147483648
    %v1012 = vmul.f32 %v1011, 1.442695
    %v1013 = vpow.pop %v1012
    %v1014 = vadd.f32 %v1013, 1.0
    %v1015 = vrcp.pop %v1014
    %v1016 = vmul.f32 1.0, %v1015
    %v1017 = vmul.f32 %v1009, %v840
    %v1018 = vmul.f32 %v1003, %v1010
    %v1019 = vadd.f32 %v1017, %v1018
    %v1020 = vtanh.pop %v1019
    %v1021 = vmul.f32 %v1016, %v1020
    %s1022 = scalar_lea.vmem %s7, 16
    %1023 = vst [vmem:[%s1022] sm:$0xff] %v1021
    %s1024 = smul.u32 3, 4
    %s1025 = smul.addr %s1024, 8
    %s1026 = scalar_lea.vmem [#allocation2], %s1025
    %v1027 = vld [vmem:[%s1026] sm:$0xff]
    %v1028 = vld [vmem:[%s1026 + $0x8] sm:$0xff]
    %v1029 = vld [vmem:[%s1026 + $0x10] sm:$0xff]
    %v1030 = vld [vmem:[%s1026 + $0x18] sm:$0xff]
    %1031 = vmatprep.subr.mxu0 %v423
    %1032 = vmatpush1.msra.mxu0 %v422
    %1033 = vmatprep.subr.mxu0 %v427
    %1034 = vmatpush1.msra.mxu0 %v426
    %1035 = vmatprep.subr.mxu0 %v431
    %1036 = vmatpush1.msra.mxu0 %v430
    %1037 = vmatprep.subr.mxu0 %v435
    %1038 = vmatpush1.msra.mxu0 %v434
    %1039 = vmatprep.subr.mxu0 %v439
    %1040 = vmatpush1.msra.mxu0 %v438
    %1041 = vmatprep.subr.mxu0 %v443
    %1042 = vmatpush1.msra.mxu0 %v442
    %1043 = vmatprep.subr.mxu0 %v447
    %1044 = vmatpush1.msra.mxu0 %v446
    %1045 = vmatprep.subr.mxu0 %v451
    %1046 = vmatpush1.msra.mxu0 %v450
    %1047 = vmatprep.subr.mxu0 %v455
    %1048 = vmatpush1.msra.mxu0 %v454
    %1049 = vmatprep.subr.mxu0 %v459
    %1050 = vmatpush1.msra.mxu0 %v458
    %1051 = vmatprep.subr.mxu0 %v463
    %1052 = vmatpush1.msra.mxu0 %v462
    %1053 = vmatprep.subr.mxu0 %v467
    %1054 = vmatpush1.msra.mxu0 %v466
    %1055 = vmatprep.subr.mxu0 %v471
    %1056 = vmatpush1.msra.mxu0 %v470
    %1057 = vmatprep.subr.mxu0 %v475
    %1058 = vmatpush1.msra.mxu0 %v474
    %1059 = vmatprep.subr.mxu0 %v479
    %1060 = vmatpush1.msra.mxu0 %v478
    %1061 = vmatprep.subr.mxu0 %v483
    %1062 = vmatpush1.msra.mxu0 %v482
    %1063 = vmatprep.subr.mxu0 0.0
    %1064 = vmatpush1.msra.mxu0 0.0
    %1065 = vmatprep.subr.mxu0 0.0
    %1066 = vmatpush1.msra.mxu0 0.0
    %1067 = vmatprep.subr.mxu0 0.0
    %1068 = vmatpush1.msra.mxu0 0.0
    %1069 = vmatprep.subr.mxu0 0.0
    %1070 = vmatpush1.msra.mxu0 0.0
    %1071 = vmatprep.subr.mxu0 0.0
    %1072 = vmatpush1.msra.mxu0 0.0
    %1073 = vmatprep.subr.mxu0 0.0
    %1074 = vmatpush1.msra.mxu0 0.0
    %1075 = vmatprep.subr.mxu0 0.0
    %1076 = vmatpush1.msra.mxu0 0.0
    %1077 = vmatprep.subr.mxu0 0.0
    %1078 = vmatpush1.msra.mxu0 0.0
    %1079 = vmatprep.subr.mxu0 0.0
    %1080 = vmatpush1.msra.mxu0 0.0
    %1081 = vmatprep.subr.mxu0 0.0
    %1082 = vmatpush1.msra.mxu0 0.0
    %1083 = vmatprep.subr.mxu0 0.0
    %1084 = vmatpush1.msra.mxu0 0.0
    %1085 = vmatprep.subr.mxu0 0.0
    %1086 = vmatpush1.msra.mxu0 0.0
    %1087 = vmatprep.subr.mxu0 0.0
    %1088 = vmatpush1.msra.mxu0 0.0
    %1089 = vmatprep.subr.mxu0 0.0
    %1090 = vmatpush1.msra.mxu0 0.0
    %1091 = vmatprep.subr.mxu0 0.0
    %1092 = vmatpush1.msra.mxu0 0.0
    %1093 = vmatprep.subr.mxu0 0.0
    %1094 = vmatpush1.msra.mxu0 0.0
    %1095 = vmatprep.mubr.f32.mxu0 0.0
    %1096 = vmatmul.mubr.f32.gmra.mrb[0].mxu0 %v1021
    %v1097 = vpop.f32.mrb[0].mxu0
    %v1098 = vadd.f32 0.0, %v1097
    %v1099 = vpop.f32.mrb[0].mxu0
    %v1100 = vadd.f32 0.0, %v1099
    %1101 = vdwg.mxu0
    %1102 = vmatprep.subr.mxu0 %v425
    %1103 = vmatpush1.msra.mxu0 %v424
    %1104 = vmatprep.subr.mxu0 %v429
    %1105 = vmatpush1.msra.mxu0 %v428
    %1106 = vmatprep.subr.mxu0 %v433
    %1107 = vmatpush1.msra.mxu0 %v432
    %1108 = vmatprep.subr.mxu0 %v437
    %1109 = vmatpush1.msra.mxu0 %v436
    %1110 = vmatprep.subr.mxu0 %v441
    %1111 = vmatpush1.msra.mxu0 %v440
    %1112 = vmatprep.subr.mxu0 %v445
    %1113 = vmatpush1.msra.mxu0 %v444
    %1114 = vmatprep.subr.mxu0 %v449
    %1115 = vmatpush1.msra.mxu0 %v448
    %1116 = vmatprep.subr.mxu0 %v453
    %1117 = vmatpush1.msra.mxu0 %v452
    %1118 = vmatprep.subr.mxu0 %v457
    %1119 = vmatpush1.msra.mxu0 %v456
    %1120 = vmatprep.subr.mxu0 %v461
    %1121 = vmatpush1.msra.mxu0 %v460
    %1122 = vmatprep.subr.mxu0 %v465
    %1123 = vmatpush1.msra.mxu0 %v464
    %1124 = vmatprep.subr.mxu0 %v469
    %1125 = vmatpush1.msra.mxu0 %v468
    %1126 = vmatprep.subr.mxu0 %v473
    %1127 = vmatpush1.msra.mxu0 %v472
    %1128 = vmatprep.subr.mxu0 %v477
    %1129 = vmatpush1.msra.mxu0 %v476
    %1130 = vmatprep.subr.mxu0 %v481
    %1131 = vmatpush1.msra.mxu0 %v480
    %1132 = vmatprep.subr.mxu0 %v485
    %1133 = vmatpush1.msra.mxu0 %v484
    %1134 = vmatprep.subr.mxu0 0.0
    %1135 = vmatpush1.msra.mxu0 0.0
    %1136 = vmatprep.subr.mxu0 0.0
    %1137 = vmatpush1.msra.mxu0 0.0
    %1138 = vmatprep.subr.mxu0 0.0
    %1139 = vmatpush1.msra.mxu0 0.0
    %1140 = vmatprep.subr.mxu0 0.0
    %1141 = vmatpush1.msra.mxu0 0.0
    %1142 = vmatprep.subr.mxu0 0.0
    %1143 = vmatpush1.msra.mxu0 0.0
    %1144 = vmatprep.subr.mxu0 0.0
    %1145 = vmatpush1.msra.mxu0 0.0
    %1146 = vmatprep.subr.mxu0 0.0
    %1147 = vmatpush1.msra.mxu0 0.0
    %1148 = vmatprep.subr.mxu0 0.0
    %1149 = vmatpush1.msra.mxu0 0.0
    %1150 = vmatprep.subr.mxu0 0.0
    %1151 = vmatpush1.msra.mxu0 0.0
    %1152 = vmatprep.subr.mxu0 0.0
    %1153 = vmatpush1.msra.mxu0 0.0
    %1154 = vmatprep.subr.mxu0 0.0
    %1155 = vmatpush1.msra.mxu0 0.0
    %1156 = vmatprep.subr.mxu0 0.0
    %1157 = vmatpush1.msra.mxu0 0.0
    %1158 = vmatprep.subr.mxu0 0.0
    %1159 = vmatpush1.msra.mxu0 0.0
    %1160 = vmatprep.subr.mxu0 0.0
    %1161 = vmatpush1.msra.mxu0 0.0
    %1162 = vmatprep.subr.mxu0 0.0
    %1163 = vmatpush1.msra.mxu0 0.0
    %1164 = vmatprep.subr.mxu0 0.0
    %1165 = vmatpush1.msra.mxu0 0.0
    %1166 = vmatprep.mubr.f32.mxu0 0.0
    %1167 = vmatmul.mubr.f32.gmra.mrb[0].mxu0 %v1021
    %v1168 = vpop.f32.mrb[0].mxu0
    %v1169 = vadd.f32 0.0, %v1168
    %v1170 = vpop.f32.mrb[0].mxu0
    %v1171 = vadd.f32 0.0, %v1170
    %1172 = vdwg.mxu0
    %v1173 = vadd.f32 %v1027, %v1098
    %v1174 = vadd.f32 %v1028, %v1100
    %v1175 = vadd.f32 %v1029, %v1169
    %v1176 = vadd.f32 %v1030, %v1171
    %v1177 = vxor.u32 %v1173, 2147483648
    %v1178 = vmul.f32 %v1177, 1.442695
    %v1179 = vpow.pop %v1178
    %v1180 = vadd.f32 %v1179, 1.0
    %v1181 = vrcp.pop %v1180
    %v1182 = vmul.f32 1.0, %v1181
    %v1183 = vxor.u32 %v1174, 2147483648
    %v1184 = vmul.f32 %v1183, 1.442695
    %v1185 = vpow.pop %v1184
    %v1186 = vadd.f32 %v1185, 1.0
    %v1187 = vrcp.pop %v1186
    %v1188 = vmul.f32 1.0, %v1187
    %v1189 = vtanh.pop %v1175
    %v1190 = vxor.u32 %v1176, 2147483648
    %v1191 = vmul.f32 %v1190, 1.442695
    %v1192 = vpow.pop %v1191
    %v1193 = vadd.f32 %v1192, 1.0
    %v1194 = vrcp.pop %v1193
    %v1195 = vmul.f32 1.0, %v1194
    %v1196 = vmul.f32 %v1188, %v1019
    %v1197 = vmul.f32 %v1182, %v1189
    %v1198 = vadd.f32 %v1196, %v1197
    %v1199 = vtanh.pop %v1198
    %v1200 = vmul.f32 %v1195, %v1199
    %s1201 = scalar_lea.vmem %s7, 24
    %1202 = vst [vmem:[%s1201] sm:$0xff] %v1200
    %s1203 = smul.u32 4, 4
    %s1204 = smul.addr %s1203, 8
    %s1205 = scalar_lea.vmem [#allocation2], %s1204
    %v1206 = vld [vmem:[%s1205] sm:$0xff]
    %v1207 = vld [vmem:[%s1205 + $0x8] sm:$0xff]
    %v1208 = vld [vmem:[%s1205 + $0x10] sm:$0xff]
    %v1209 = vld [vmem:[%s1205 + $0x18] sm:$0xff]
    %1210 = vmatprep.subr.mxu0 %v423
    %1211 = vmatpush1.msra.mxu0 %v422
    %1212 = vmatprep.subr.mxu0 %v427
    %1213 = vmatpush1.msra.mxu0 %v426
    %1214 = vmatprep.subr.mxu0 %v431
    %1215 = vmatpush1.msra.mxu0 %v430
    %1216 = vmatprep.subr.mxu0 %v435
    %1217 = vmatpush1.msra.mxu0 %v434
    %1218 = vmatprep.subr.mxu0 %v439
    %1219 = vmatpush1.msra.mxu0 %v438
    %1220 = vmatprep.subr.mxu0 %v443
    %1221 = vmatpush1.msra.mxu0 %v442
    %1222 = vmatprep.subr.mxu0 %v447
    %1223 = vmatpush1.msra.mxu0 %v446
    %1224 = vmatprep.subr.mxu0 %v451
    %1225 = vmatpush1.msra.mxu0 %v450
    %1226 = vmatprep.subr.mxu0 %v455
    %1227 = vmatpush1.msra.mxu0 %v454
    %1228 = vmatprep.subr.mxu0 %v459
    %1229 = vmatpush1.msra.mxu0 %v458
    %1230 = vmatprep.subr.mxu0 %v463
    %1231 = vmatpush1.msra.mxu0 %v462
    %1232 = vmatprep.subr.mxu0 %v467
    %1233 = vmatpush1.msra.mxu0 %v466
    %1234 = vmatprep.subr.mxu0 %v471
    %1235 = vmatpush1.msra.mxu0 %v470
    %1236 = vmatprep.subr.mxu0 %v475
    %1237 = vmatpush1.msra.mxu0 %v474
    %1238 = vmatprep.subr.mxu0 %v479
    %1239 = vmatpush1.msra.mxu0 %v478
    %1240 = vmatprep.subr.mxu0 %v483
    %1241 = vmatpush1.msra.mxu0 %v482
    %1242 = vmatprep.subr.mxu0 0.0
    %1243 = vmatpush1.msra.mxu0 0.0
    %1244 = vmatprep.subr.mxu0 0.0
    %1245 = vmatpush1.msra.mxu0 0.0
    %1246 = vmatprep.subr.mxu0 0.0
    %1247 = vmatpush1.msra.mxu0 0.0
    %1248 = vmatprep.subr.mxu0 0.0
    %1249 = vmatpush1.msra.mxu0 0.0
    %1250 = vmatprep.subr.mxu0 0.0
    %1251 = vmatpush1.msra.mxu0 0.0
    %1252 = vmatprep.subr.mxu0 0.0
    %1253 = vmatpush1.msra.mxu0 0.0
    %1254 = vmatprep.subr.mxu0 0.0
    %1255 = vmatpush1.msra.mxu0 0.0
    %1256 = vmatprep.subr.mxu0 0.0
    %1257 = vmatpush1.msra.mxu0 0.0
    %1258 = vmatprep.subr.mxu0 0.0
    %1259 = vmatpush1.msra.mxu0 0.0
    %1260 = vmatprep.subr.mxu0 0.0
    %1261 = vmatpush1.msra.mxu0 0.0
    %1262 = vmatprep.subr.mxu0 0.0
    %1263 = vmatpush1.msra.mxu0 0.0
    %1264 = vmatprep.subr.mxu0 0.0
    %1265 = vmatpush1.msra.mxu0 0.0
    %1266 = vmatprep.subr.mxu0 0.0
    %1267 = vmatpush1.msra.mxu0 0.0
    %1268 = vmatprep.subr.mxu0 0.0
    %1269 = vmatpush1.msra.mxu0 0.0
    %1270 = vmatprep.subr.mxu0 0.0
    %1271 = vmatpush1.msra.mxu0 0.0
    %1272 = vmatprep.subr.mxu0 0.0
    %1273 = vmatpush1.msra.mxu0 0.0
    %1274 = vmatprep.mubr.f32.mxu0 0.0
    %1275 = vmatmul.mubr.f32.gmra.mrb[0].mxu0 %v1200
    %v1276 = vpop.f32.mrb[0].mxu0
    %v1277 = vadd.f32 0.0, %v1276
    %v1278 = vpop.f32.mrb[0].mxu0
    %v1279 = vadd.f32 0.0, %v1278
    %1280 = vdwg.mxu0
    %1281 = vmatprep.subr.mxu0 %v425
    %1282 = vmatpush1.msra.mxu0 %v424
    %1283 = vmatprep.subr.mxu0 %v429
    %1284 = vmatpush1.msra.mxu0 %v428
    %1285 = vmatprep.subr.mxu0 %v433
    %1286 = vmatpush1.msra.mxu0 %v432
    %1287 = vmatprep.subr.mxu0 %v437
    %1288 = vmatpush1.msra.mxu0 %v436
    %1289 = vmatprep.subr.mxu0 %v441
    %1290 = vmatpush1.msra.mxu0 %v440
    %1291 = vmatprep.subr.mxu0 %v445
    %1292 = vmatpush1.msra.mxu0 %v444
    %1293 = vmatprep.subr.mxu0 %v449
    %1294 = vmatpush1.msra.mxu0 %v448
    %1295 = vmatprep.subr.mxu0 %v453
    %1296 = vmatpush1.msra.mxu0 %v452
    %1297 = vmatprep.subr.mxu0 %v457
    %1298 = vmatpush1.msra.mxu0 %v456
    %1299 = vmatprep.subr.mxu0 %v461
    %1300 = vmatpush1.msra.mxu0 %v460
    %1301 = vmatprep.subr.mxu0 %v465
    %1302 = vmatpush1.msra.mxu0 %v464
    %1303 = vmatprep.subr.mxu0 %v469
    %1304 = vmatpush1.msra.mxu0 %v468
    %1305 = vmatprep.subr.mxu0 %v473
    %1306 = vmatpush1.msra.mxu0 %v472
    %1307 = vmatprep.subr.mxu0 %v477
    %1308 = vmatpush1.msra.mxu0 %v476
    %1309 = vmatprep.subr.mxu0 %v481
    %1310 = vmatpush1.msra.mxu0 %v480
    %1311 = vmatprep.subr.mxu0 %v485
    %1312 = vmatpush1.msra.mxu0 %v484
    %1313 = vmatprep.subr.mxu0 0.0
    %1314 = vmatpush1.msra.mxu0 0.0
    %1315 = vmatprep.subr.mxu0 0.0
    %1316 = vmatpush1.msra.mxu0 0.0
    %1317 = vmatprep.subr.mxu0 0.0
    %1318 = vmatpush1.msra.mxu0 0.0
    %1319 = vmatprep.subr.mxu0 0.0
    %1320 = vmatpush1.msra.mxu0 0.0
    %1321 = vmatprep.subr.mxu0 0.0
    %1322 = vmatpush1.msra.mxu0 0.0
    %1323 = vmatprep.subr.mxu0 0.0
    %1324 = vmatpush1.msra.mxu0 0.0
    %1325 = vmatprep.subr.mxu0 0.0
    %1326 = vmatpush1.msra.mxu0 0.0
    %1327 = vmatprep.subr.mxu0 0.0
    %1328 = vmatpush1.msra.mxu0 0.0
    %1329 = vmatprep.subr.mxu0 0.0
    %1330 = vmatpush1.msra.mxu0 0.0
    %1331 = vmatprep.subr.mxu0 0.0
    %1332 = vmatpush1.msra.mxu0 0.0
    %1333 = vmatprep.subr.mxu0 0.0
    %1334 = vmatpush1.msra.mxu0 0.0
    %1335 = vmatprep.subr.mxu0 0.0
    %1336 = vmatpush1.msra.mxu0 0.0
    %1337 = vmatprep.subr.mxu0 0.0
    %1338 = vmatpush1.msra.mxu0 0.0
    %1339 = vmatprep.subr.mxu0 0.0
    %1340 = vmatpush1.msra.mxu0 0.0
    %1341 = vmatprep.subr.mxu0 0.0
    %1342 = vmatpush1.msra.mxu0 0.0
    %1343 = vmatprep.subr.mxu0 0.0
    %1344 = vmatpush1.msra.mxu0 0.0
    %1345 = vmatprep.mubr.f32.mxu0 0.0
    %1346 = vmatmul.mubr.f32.gmra.mrb[0].mxu0 %v1200
    %v1347 = vpop.f32.mrb[0].mxu0
    %v1348 = vadd.f32 0.0, %v1347
    %v1349 = vpop.f32.mrb[0].mxu0
    %v1350 = vadd.f32 0.0, %v1349
    %1351 = vdwg.mxu0
    %v1352 = vadd.f32 %v1206, %v1277
    %v1353 = vadd.f32 %v1207, %v1279
    %v1354 = vadd.f32 %v1208, %v1348
    %v1355 = vadd.f32 %v1209, %v1350
    %v1356 = vxor.u32 %v1352, 2147483648
    %v1357 = vmul.f32 %v1356, 1.442695
    %v1358 = vpow.pop %v1357
    %v1359 = vadd.f32 %v1358, 1.0
    %v1360 = vrcp.pop %v1359
    %v1361 = vmul.f32 1.0, %v1360
    %v1362 = vxor.u32 %v1353, 2147483648
    %v1363 = vmul.f32 %v1362, 1.442695
    %v1364 = vpow.pop %v1363
    %v1365 = vadd.f32 %v1364, 1.0
    %v1366 = vrcp.pop %v1365
    %v1367 = vmul.f32 1.0, %v1366
    %v1368 = vtanh.pop %v1354
    %v1369 = vxor.u32 %v1355, 2147483648
    %v1370 = vmul.f32 %v1369, 1.442695
    %v1371 = vpow.pop %v1370
    %v1372 = vadd.f32 %v1371, 1.0
    %v1373 = vrcp.pop %v1372
    %v1374 = vmul.f32 1.0, %v1373
    %v1375 = vmul.f32 %v1367, %v1198
    %v1376 = vmul.f32 %v1361, %v1368
    %v1377 = vadd.f32 %v1375, %v1376
    %v1378 = vtanh.pop %v1377
    %v1379 = vmul.f32 %v1374, %v1378
    %s1380 = scalar_lea.vmem %s7, 32
    %1381 = vst [vmem:[%s1380] sm:$0xff] %v1379
    %s1382 = smul.u32 5, 4
    %s1383 = smul.addr %s1382, 8
    %s1384 = scalar_lea.vmem [#allocation2], %s1383
    %v1385 = vld [vmem:[%s1384] sm:$0xff]
    %v1386 = vld [vmem:[%s1384 + $0x8] sm:$0xff]
    %v1387 = vld [vmem:[%s1384 + $0x10] sm:$0xff]
    %v1388 = vld [vmem:[%s1384 + $0x18] sm:$0xff]
    %1389 = vmatprep.subr.mxu0 %v423
    %1390 = vmatpush1.msra.mxu0 %v422
    %1391 = vmatprep.subr.mxu0 %v427
    %1392 = vmatpush1.msra.mxu0 %v426
    %1393 = vmatprep.subr.mxu0 %v431
    %1394 = vmatpush1.msra.mxu0 %v430
    %1395 = vmatprep.subr.mxu0 %v435
    %1396 = vmatpush1.msra.mxu0 %v434
    %1397 = vmatprep.subr.mxu0 %v439
    %1398 = vmatpush1.msra.mxu0 %v438
    %1399 = vmatprep.subr.mxu0 %v443
    %1400 = vmatpush1.msra.mxu0 %v442
    %1401 = vmatprep.subr.mxu0 %v447
    %1402 = vmatpush1.msra.mxu0 %v446
    %1403 = vmatprep.subr.mxu0 %v451
    %1404 = vmatpush1.msra.mxu0 %v450
    %1405 = vmatprep.subr.mxu0 %v455
    %1406 = vmatpush1.msra.mxu0 %v454
    %1407 = vmatprep.subr.mxu0 %v459
    %1408 = vmatpush1.msra.mxu0 %v458
    %1409 = vmatprep.subr.mxu0 %v463
    %1410 = vmatpush1.msra.mxu0 %v462
    %1411 = vmatprep.subr.mxu0 %v467
    %1412 = vmatpush1.msra.mxu0 %v466
    %1413 = vmatprep.subr.mxu0 %v471
    %1414 = vmatpush1.msra.mxu0 %v470
    %1415 = vmatprep.subr.mxu0 %v475
    %1416 = vmatpush1.msra.mxu0 %v474
    %1417 = vmatprep.subr.mxu0 %v479
    %1418 = vmatpush1.msra.mxu0 %v478
    %1419 = vmatprep.subr.mxu0 %v483
    %1420 = vmatpush1.msra.mxu0 %v482
    %1421 = vmatprep.subr.mxu0 0.0
    %1422 = vmatpush1.msra.mxu0 0.0
    %1423 = vmatprep.subr.mxu0 0.0
    %1424 = vmatpush1.msra.mxu0 0.0
    %1425 = vmatprep.subr.mxu0 0.0
    %1426 = vmatpush1.msra.mxu0 0.0
    %1427 = vmatprep.subr.mxu0 0.0
    %1428 = vmatpush1.msra.mxu0 0.0
    %1429 = vmatprep.subr.mxu0 0.0
    %1430 = vmatpush1.msra.mxu0 0.0
    %1431 = vmatprep.subr.mxu0 0.0
    %1432 = vmatpush1.msra.mxu0 0.0
    %1433 = vmatprep.subr.mxu0 0.0
    %1434 = vmatpush1.msra.mxu0 0.0
    %1435 = vmatprep.subr.mxu0 0.0
    %1436 = vmatpush1.msra.mxu0 0.0
    %1437 = vmatprep.subr.mxu0 0.0
    %1438 = vmatpush1.msra.mxu0 0.0
    %1439 = vmatprep.subr.mxu0 0.0
    %1440 = vmatpush1.msra.mxu0 0.0
    %1441 = vmatprep.subr.mxu0 0.0
    %1442 = vmatpush1.msra.mxu0 0.0
    %1443 = vmatprep.subr.mxu0 0.0
    %1444 = vmatpush1.msra.mxu0 0.0
    %1445 = vmatprep.subr.mxu0 0.0
    %1446 = vmatpush1.msra.mxu0 0.0
    %1447 = vmatprep.subr.mxu0 0.0
    %1448 = vmatpush1.msra.mxu0 0.0
    %1449 = vmatprep.subr.mxu0 0.0
    %1450 = vmatpush1.msra.mxu0 0.0
    %1451 = vmatprep.subr.mxu0 0.0
    %1452 = vmatpush1.msra.mxu0 0.0
    %1453 = vmatprep.mubr.f32.mxu0 0.0
    %1454 = vmatmul.mubr.f32.gmra.mrb[0].mxu0 %v1379
    %v1455 = vpop.f32.mrb[0].mxu0
    %v1456 = vadd.f32 0.0, %v1455
    %v1457 = vpop.f32.mrb[0].mxu0
    %v1458 = vadd.f32 0.0, %v1457
    %1459 = vdwg.mxu0
    %1460 = vmatprep.subr.mxu0 %v425
    %1461 = vmatpush1.msra.mxu0 %v424
    %1462 = vmatprep.subr.mxu0 %v429
    %1463 = vmatpush1.msra.mxu0 %v428
    %1464 = vmatprep.subr.mxu0 %v433
    %1465 = vmatpush1.msra.mxu0 %v432
    %1466 = vmatprep.subr.mxu0 %v437
    %1467 = vmatpush1.msra.mxu0 %v436
    %1468 = vmatprep.subr.mxu0 %v441
    %1469 = vmatpush1.msra.mxu0 %v440
    %1470 = vmatprep.subr.mxu0 %v445
    %1471 = vmatpush1.msra.mxu0 %v444
    %1472 = vmatprep.subr.mxu0 %v449
    %1473 = vmatpush1.msra.mxu0 %v448
    %1474 = vmatprep.subr.mxu0 %v453
    %1475 = vmatpush1.msra.mxu0 %v452
    %1476 = vmatprep.subr.mxu0 %v457
    %1477 = vmatpush1.msra.mxu0 %v456
    %1478 = vmatprep.subr.mxu0 %v461
    %1479 = vmatpush1.msra.mxu0 %v460
    %1480 = vmatprep.subr.mxu0 %v465
    %1481 = vmatpush1.msra.mxu0 %v464
    %1482 = vmatprep.subr.mxu0 %v469
    %1483 = vmatpush1.msra.mxu0 %v468
    %1484 = vmatprep.subr.mxu0 %v473
    %1485 = vmatpush1.msra.mxu0 %v472
    %1486 = vmatprep.subr.mxu0 %v477
    %1487 = vmatpush1.msra.mxu0 %v476
    %1488 = vmatprep.subr.mxu0 %v481
    %1489 = vmatpush1.msra.mxu0 %v480
    %1490 = vmatprep.subr.mxu0 %v485
    %1491 = vmatpush1.msra.mxu0 %v484
    %1492 = vmatprep.subr.mxu0 0.0
    %1493 = vmatpush1.msra.mxu0 0.0
    %1494 = vmatprep.subr.mxu0 0.0
    %1495 = vmatpush1.msra.mxu0 0.0
    %1496 = vmatprep.subr.mxu0 0.0
    %1497 = vmatpush1.msra.mxu0 0.0
    %1498 = vmatprep.subr.mxu0 0.0
    %1499 = vmatpush1.msra.mxu0 0.0
    %1500 = vmatprep.subr.mxu0 0.0
    %1501 = vmatpush1.msra.mxu0 0.0
    %1502 = vmatprep.subr.mxu0 0.0
    %1503 = vmatpush1.msra.mxu0 0.0
    %1504 = vmatprep.subr.mxu0 0.0
    %1505 = vmatpush1.msra.mxu0 0.0
    %1506 = vmatprep.subr.mxu0 0.0
    %1507 = vmatpush1.msra.mxu0 0.0
    %1508 = vmatprep.subr.mxu0 0.0
    %1509 = vmatpush1.msra.mxu0 0.0
    %1510 = vmatprep.subr.mxu0 0.0
    %1511 = vmatpush1.msra.mxu0 0.0
    %1512 = vmatprep.subr.mxu0 0.0
    %1513 = vmatpush1.msra.mxu0 0.0
    %1514 = vmatprep.subr.mxu0 0.0
    %1515 = vmatpush1.msra.mxu0 0.0
    %1516 = vmatprep.subr.mxu0 0.0
    %1517 = vmatpush1.msra.mxu0 0.0
    %1518 = vmatprep.subr.mxu0 0.0
    %1519 = vmatpush1.msra.mxu0 0.0
    %1520 = vmatprep.subr.mxu0 0.0
    %1521 = vmatpush1.msra.mxu0 0.0
    %1522 = vmatprep.subr.mxu0 0.0
    %1523 = vmatpush1.msra.mxu0 0.0
    %1524 = vmatprep.mubr.f32.mxu0 0.0
    %1525 = vmatmul.mubr.f32.gmra.mrb[0].mxu0 %v1379
    %v1526 = vpop.f32.mrb[0].mxu0
    %v1527 = vadd.f32 0.0, %v1526
    %v1528 = vpop.f32.mrb[0].mxu0
    %v1529 = vadd.f32 0.0, %v1528
    %1530 = vdwg.mxu0
    %v1531 = vadd.f32 %v1385, %v1456
    %v1532 = vadd.f32 %v1386, %v1458
    %v1533 = vadd.f32 %v1387, %v1527
    %v1534 = vadd.f32 %v1388, %v1529
    %v1535 = vxor.u32 %v1531, 2147483648
    %v1536 = vmul.f32 %v1535, 1.442695
    %v1537 = vpow.pop %v1536
    %v1538 = vadd.f32 %v1537, 1.0
    %v1539 = vrcp.pop %v1538
    %v1540 = vmul.f32 1.0, %v1539
    %v1541 = vxor.u32 %v1532, 2147483648
    %v1542 = vmul.f32 %v1541, 1.442695
    %v1543 = vpow.pop %v1542
    %v1544 = vadd.f32 %v1543, 1.0
    %v1545 = vrcp.pop %v1544
    %v1546 = vmul.f32 1.0, %v1545
    %v1547 = vtanh.pop %v1533
    %v1548 = vxor.u32 %v1534, 2147483648
    %v1549 = vmul.f32 %v1548, 1.442695
    %v1550 = vpow.pop %v1549
    %v1551 = vadd.f32 %v1550, 1.0
    %v1552 = vrcp.pop %v1551
    %v1553 = vmul.f32 1.0, %v1552
    %v1554 = vmul.f32 %v1546, %v1377
    %v1555 = vmul.f32 %v1540, %v1547
    %v1556 = vadd.f32 %v1554, %v1555
    %v1557 = vtanh.pop %v1556
    %v1558 = vmul.f32 %v1553, %v1557
    %s1559 = scalar_lea.vmem %s7, 40
    %1560 = vst [vmem:[%s1559] sm:$0xff] %v1558
    %s1561 = smul.u32 6, 4
    %s1562 = smul.addr %s1561, 8
    %s1563 = scalar_lea.vmem [#allocation2], %s1562
    %v1564 = vld [vmem:[%s1563] sm:$0xff]
    %v1565 = vld [vmem:[%s1563 + $0x8] sm:$0xff]
    %v1566 = vld [vmem:[%s1563 + $0x10] sm:$0xff]
    %v1567 = vld [vmem:[%s1563 + $0x18] sm:$0xff]
    %1568 = vmatprep.subr.mxu0 %v423
    %1569 = vmatpush1.msra.mxu0 %v422
    %1570 = vmatprep.subr.mxu0 %v427
    %1571 = vmatpush1.msra.mxu0 %v426
    %1572 = vmatprep.subr.mxu0 %v431
    %1573 = vmatpush1.msra.mxu0 %v430
    %1574 = vmatprep.subr.mxu0 %v435
    %1575 = vmatpush1.msra.mxu0 %v434
    %1576 = vmatprep.subr.mxu0 %v439
    %1577 = vmatpush1.msra.mxu0 %v438
    %1578 = vmatprep.subr.mxu0 %v443
    %1579 = vmatpush1.msra.mxu0 %v442
    %1580 = vmatprep.subr.mxu0 %v447
    %1581 = vmatpush1.msra.mxu0 %v446
    %1582 = vmatprep.subr.mxu0 %v451
    %1583 = vmatpush1.msra.mxu0 %v450
    %1584 = vmatprep.subr.mxu0 %v455
    %1585 = vmatpush1.msra.mxu0 %v454
    %1586 = vmatprep.subr.mxu0 %v459
    %1587 = vmatpush1.msra.mxu0 %v458
    %1588 = vmatprep.subr.mxu0 %v463
    %1589 = vmatpush1.msra.mxu0 %v462
    %1590 = vmatprep.subr.mxu0 %v467
    %1591 = vmatpush1.msra.mxu0 %v466
    %1592 = vmatprep.subr.mxu0 %v471
    %1593 = vmatpush1.msra.mxu0 %v470
    %1594 = vmatprep.subr.mxu0 %v475
    %1595 = vmatpush1.msra.mxu0 %v474
    %1596 = vmatprep.subr.mxu0 %v479
    %1597 = vmatpush1.msra.mxu0 %v478
    %1598 = vmatprep.subr.mxu0 %v483
    %1599 = vmatpush1.msra.mxu0 %v482
    %1600 = vmatprep.subr.mxu0 0.0
    %1601 = vmatpush1.msra.mxu0 0.0
    %1602 = vmatprep.subr.mxu0 0.0
    %1603 = vmatpush1.msra.mxu0 0.0
    %1604 = vmatprep.subr.mxu0 0.0
    %1605 = vmatpush1.msra.mxu0 0.0
    %1606 = vmatprep.subr.mxu0 0.0
    %1607 = vmatpush1.msra.mxu0 0.0
    %1608 = vmatprep.subr.mxu0 0.0
    %1609 = vmatpush1.msra.mxu0 0.0
    %1610 = vmatprep.subr.mxu0 0.0
    %1611 = vmatpush1.msra.mxu0 0.0
    %1612 = vmatprep.subr.mxu0 0.0
    %1613 = vmatpush1.msra.mxu0 0.0
    %1614 = vmatprep.subr.mxu0 0.0
    %1615 = vmatpush1.msra.mxu0 0.0
    %1616 = vmatprep.subr.mxu0 0.0
    %1617 = vmatpush1.msra.mxu0 0.0
    %1618 = vmatprep.subr.mxu0 0.0
    %1619 = vmatpush1.msra.mxu0 0.0
    %1620 = vmatprep.subr.mxu0 0.0
    %1621 = vmatpush1.msra.mxu0 0.0
    %1622 = vmatprep.subr.mxu0 0.0
    %1623 = vmatpush1.msra.mxu0 0.0
    %1624 = vmatprep.subr.mxu0 0.0
    %1625 = vmatpush1.msra.mxu0 0.0
    %1626 = vmatprep.subr.mxu0 0.0
    %1627 = vmatpush1.msra.mxu0 0.0
    %1628 = vmatprep.subr.mxu0 0.0
    %1629 = vmatpush1.msra.mxu0 0.0
    %1630 = vmatprep.subr.mxu0 0.0
    %1631 = vmatpush1.msra.mxu0 0.0
    %1632 = vmatprep.mubr.f32.mxu0 0.0
    %1633 = vmatmul.mubr.f32.gmra.mrb[0].mxu0 %v1558
    %v1634 = vpop.f32.mrb[0].mxu0
    %v1635 = vadd.f32 0.0, %v1634
    %v1636 = vpop.f32.mrb[0].mxu0
    %v1637 = vadd.f32 0.0, %v1636
    %1638 = vdwg.mxu0
    %1639 = vmatprep.subr.mxu0 %v425
    %1640 = vmatpush1.msra.mxu0 %v424
    %1641 = vmatprep.subr.mxu0 %v429
    %1642 = vmatpush1.msra.mxu0 %v428
    %1643 = vmatprep.subr.mxu0 %v433
    %1644 = vmatpush1.msra.mxu0 %v432
    %1645 = vmatprep.subr.mxu0 %v437
    %1646 = vmatpush1.msra.mxu0 %v436
    %1647 = vmatprep.subr.mxu0 %v441
    %1648 = vmatpush1.msra.mxu0 %v440
    %1649 = vmatprep.subr.mxu0 %v445
    %1650 = vmatpush1.msra.mxu0 %v444
    %1651 = vmatprep.subr.mxu0 %v449
    %1652 = vmatpush1.msra.mxu0 %v448
    %1653 = vmatprep.subr.mxu0 %v453
    %1654 = vmatpush1.msra.mxu0 %v452
    %1655 = vmatprep.subr.mxu0 %v457
    %1656 = vmatpush1.msra.mxu0 %v456
    %1657 = vmatprep.subr.mxu0 %v461
    %1658 = vmatpush1.msra.mxu0 %v460
    %1659 = vmatprep.subr.mxu0 %v465
    %1660 = vmatpush1.msra.mxu0 %v464
    %1661 = vmatprep.subr.mxu0 %v469
    %1662 = vmatpush1.msra.mxu0 %v468
    %1663 = vmatprep.subr.mxu0 %v473
    %1664 = vmatpush1.msra.mxu0 %v472
    %1665 = vmatprep.subr.mxu0 %v477
    %1666 = vmatpush1.msra.mxu0 %v476
    %1667 = vmatprep.subr.mxu0 %v481
    %1668 = vmatpush1.msra.mxu0 %v480
    %1669 = vmatprep.subr.mxu0 %v485
    %1670 = vmatpush1.msra.mxu0 %v484
    %1671 = vmatprep.subr.mxu0 0.0
    %1672 = vmatpush1.msra.mxu0 0.0
    %1673 = vmatprep.subr.mxu0 0.0
    %1674 = vmatpush1.msra.mxu0 0.0
    %1675 = vmatprep.subr.mxu0 0.0
    %1676 = vmatpush1.msra.mxu0 0.0
    %1677 = vmatprep.subr.mxu0 0.0
    %1678 = vmatpush1.msra.mxu0 0.0
    %1679 = vmatprep.subr.mxu0 0.0
    %1680 = vmatpush1.msra.mxu0 0.0
    %1681 = vmatprep.subr.mxu0 0.0
    %1682 = vmatpush1.msra.mxu0 0.0
    %1683 = vmatprep.subr.mxu0 0.0
    %1684 = vmatpush1.msra.mxu0 0.0
    %1685 = vmatprep.subr.mxu0 0.0
    %1686 = vmatpush1.msra.mxu0 0.0
    %1687 = vmatprep.subr.mxu0 0.0
    %1688 = vmatpush1.msra.mxu0 0.0
    %1689 = vmatprep.subr.mxu0 0.0
    %1690 = vmatpush1.msra.mxu0 0.0
    %1691 = vmatprep.subr.mxu0 0.0
    %1692 = vmatpush1.msra.mxu0 0.0
    %1693 = vmatprep.subr.mxu0 0.0
    %1694 = vmatpush1.msra.mxu0 0.0
    %1695 = vmatprep.subr.mxu0 0.0
    %1696 = vmatpush1.msra.mxu0 0.0
    %1697 = vmatprep.subr.mxu0 0.0
    %1698 = vmatpush1.msra.mxu0 0.0
    %1699 = vmatprep.subr.mxu0 0.0
    %1700 = vmatpush1.msra.mxu0 0.0
    %1701 = vmatprep.subr.mxu0 0.0
    %1702 = vmatpush1.msra.mxu0 0.0
    %1703 = vmatprep.mubr.f32.mxu0 0.0
    %1704 = vmatmul.mubr.f32.gmra.mrb[0].mxu0 %v1558
    %v1705 = vpop.f32.mrb[0].mxu0
    %v1706 = vadd.f32 0.0, %v1705
    %v1707 = vpop.f32.mrb[0].mxu0
    %v1708 = vadd.f32 0.0, %v1707
    %1709 = vdwg.mxu0
    %v1710 = vadd.f32 %v1564, %v1635
    %v1711 = vadd.f32 %v1565, %v1637
    %v1712 = vadd.f32 %v1566, %v1706
    %v1713 = vadd.f32 %v1567, %v1708
    %v1714 = vxor.u32 %v1710, 2147483648
    %v1715 = vmul.f32 %v1714, 1.442695
    %v1716 = vpow.pop %v1715
    %v1717 = vadd.f32 %v1716, 1.0
    %v1718 = vrcp.pop %v1717
    %v1719 = vmul.f32 1.0, %v1718
    %v1720 = vxor.u32 %v1711, 2147483648
    %v1721 = vmul.f32 %v1720, 1.442695
    %v1722 = vpow.pop %v1721
    %v1723 = vadd.f32 %v1722, 1.0
    %v1724 = vrcp.pop %v1723
    %v1725 = vmul.f32 1.0, %v1724
    %v1726 = vtanh.pop %v1712
    %v1727 = vxor.u32 %v1713, 2147483648
    %v1728 = vmul.f32 %v1727, 1.442695
    %v1729 = vpow.pop %v1728
    %v1730 = vadd.f32 %v1729, 1.0
    %v1731 = vrcp.pop %v1730
    %v1732 = vmul.f32 1.0, %v1731
    %v1733 = vmul.f32 %v1725, %v1556
    %v1734 = vmul.f32 %v1719, %v1726
    %v1735 = vadd.f32 %v1733, %v1734
    %v1736 = vtanh.pop %v1735
    %v1737 = vmul.f32 %v1732, %v1736
    %s1738 = scalar_lea.vmem %s7, 48
    %1739 = vst [vmem:[%s1738] sm:$0xff] %v1737
    %s1740 = smul.u32 7, 4
    %s1741 = smul.addr %s1740, 8
    %s1742 = scalar_lea.vmem [#allocation2], %s1741
    %v1743 = vld [vmem:[%s1742] sm:$0xff]
    %v1744 = vld [vmem:[%s1742 + $0x8] sm:$0xff]
    %v1745 = vld [vmem:[%s1742 + $0x10] sm:$0xff]
    %v1746 = vld [vmem:[%s1742 + $0x18] sm:$0xff]
    %1747 = vmatprep.subr.mxu0 %v423
    %1748 = vmatpush1.msra.mxu0 %v422
    %1749 = vmatprep.subr.mxu0 %v427
    %1750 = vmatpush1.msra.mxu0 %v426
    %1751 = vmatprep.subr.mxu0 %v431
    %1752 = vmatpush1.msra.mxu0 %v430
    %1753 = vmatprep.subr.mxu0 %v435
    %1754 = vmatpush1.msra.mxu0 %v434
    %1755 = vmatprep.subr.mxu0 %v439
    %1756 = vmatpush1.msra.mxu0 %v438
    %1757 = vmatprep.subr.mxu0 %v443
    %1758 = vmatpush1.msra.mxu0 %v442
    %1759 = vmatprep.subr.mxu0 %v447
    %1760 = vmatpush1.msra.mxu0 %v446
    %1761 = vmatprep.subr.mxu0 %v451
    %1762 = vmatpush1.msra.mxu0 %v450
    %1763 = vmatprep.subr.mxu0 %v455
    %1764 = vmatpush1.msra.mxu0 %v454
    %1765 = vmatprep.subr.mxu0 %v459
    %1766 = vmatpush1.msra.mxu0 %v458
    %1767 = vmatprep.subr.mxu0 %v463
    %1768 = vmatpush1.msra.mxu0 %v462
    %1769 = vmatprep.subr.mxu0 %v467
    %1770 = vmatpush1.msra.mxu0 %v466
    %1771 = vmatprep.subr.mxu0 %v471
    %1772 = vmatpush1.msra.mxu0 %v470
    %1773 = vmatprep.subr.mxu0 %v475
    %1774 = vmatpush1.msra.mxu0 %v474
    %1775 = vmatprep.subr.mxu0 %v479
    %1776 = vmatpush1.msra.mxu0 %v478
    %1777 = vmatprep.subr.mxu0 %v483
    %1778 = vmatpush1.msra.mxu0 %v482
    %1779 = vmatprep.subr.mxu0 0.0
    %1780 = vmatpush1.msra.mxu0 0.0
    %1781 = vmatprep.subr.mxu0 0.0
    %1782 = vmatpush1.msra.mxu0 0.0
    %1783 = vmatprep.subr.mxu0 0.0
    %1784 = vmatpush1.msra.mxu0 0.0
    %1785 = vmatprep.subr.mxu0 0.0
    %1786 = vmatpush1.msra.mxu0 0.0
    %1787 = vmatprep.subr.mxu0 0.0
    %1788 = vmatpush1.msra.mxu0 0.0
    %1789 = vmatprep.subr.mxu0 0.0
    %1790 = vmatpush1.msra.mxu0 0.0
    %1791 = vmatprep.subr.mxu0 0.0
    %1792 = vmatpush1.msra.mxu0 0.0
    %1793 = vmatprep.subr.mxu0 0.0
    %1794 = vmatpush1.msra.mxu0 0.0
    %1795 = vmatprep.subr.mxu0 0.0
    %1796 = vmatpush1.msra.mxu0 0.0
    %1797 = vmatprep.subr.mxu0 0.0
    %1798 = vmatpush1.msra.mxu0 0.0
    %1799 = vmatprep.subr.mxu0 0.0
    %1800 = vmatpush1.msra.mxu0 0.0
    %1801 = vmatprep.subr.mxu0 0.0
    %1802 = vmatpush1.msra.mxu0 0.0
    %1803 = vmatprep.subr.mxu0 0.0
    %1804 = vmatpush1.msra.mxu0 0.0
    %1805 = vmatprep.subr.mxu0 0.0
    %1806 = vmatpush1.msra.mxu0 0.0
    %1807 = vmatprep.subr.mxu0 0.0
    %1808 = vmatpush1.msra.mxu0 0.0
    %1809 = vmatprep.subr.mxu0 0.0
    %1810 = vmatpush1.msra.mxu0 0.0
    %1811 = vmatprep.mubr.f32.mxu0 0.0
    %1812 = vmatmul.mubr.f32.gmra.mrb[0].mxu0 %v1737
    %v1813 = vpop.f32.mrb[0].mxu0
    %v1814 = vadd.f32 0.0, %v1813
    %v1815 = vpop.f32.mrb[0].mxu0
    %v1816 = vadd.f32 0.0, %v1815
    %1817 = vdwg.mxu0
    %1818 = vmatprep.subr.mxu0 %v425
    %1819 = vmatpush1.msra.mxu0 %v424
    %1820 = vmatprep.subr.mxu0 %v429
    %1821 = vmatpush1.msra.mxu0 %v428
    %1822 = vmatprep.subr.mxu0 %v433
    %1823 = vmatpush1.msra.mxu0 %v432
    %1824 = vmatprep.subr.mxu0 %v437
    %1825 = vmatpush1.msra.mxu0 %v436
    %1826 = vmatprep.subr.mxu0 %v441
    %1827 = vmatpush1.msra.mxu0 %v440
    %1828 = vmatprep.subr.mxu0 %v445
    %1829 = vmatpush1.msra.mxu0 %v444
    %1830 = vmatprep.subr.mxu0 %v449
    %1831 = vmatpush1.msra.mxu0 %v448
    %1832 = vmatprep.subr.mxu0 %v453
    %1833 = vmatpush1.msra.mxu0 %v452
    %1834 = vmatprep.subr.mxu0 %v457
    %1835 = vmatpush1.msra.mxu0 %v456
    %1836 = vmatprep.subr.mxu0 %v461
    %1837 = vmatpush1.msra.mxu0 %v460
    %1838 = vmatprep.subr.mxu0 %v465
    %1839 = vmatpush1.msra.mxu0 %v464
    %1840 = vmatprep.subr.mxu0 %v469
    %1841 = vmatpush1.msra.mxu0 %v468
    %1842 = vmatprep.subr.mxu0 %v473
    %1843 = vmatpush1.msra.mxu0 %v472
    %1844 = vmatprep.subr.mxu0 %v477
    %1845 = vmatpush1.msra.mxu0 %v476
    %1846 = vmatprep.subr.mxu0 %v481
    %1847 = vmatpush1.msra.mxu0 %v480
    %1848 = vmatprep.subr.mxu0 %v485
    %1849 = vmatpush1.msra.mxu0 %v484
    %1850 = vmatprep.subr.mxu0 0.0
    %1851 = vmatpush1.msra.mxu0 0.0
    %1852 = vmatprep.subr.mxu0 0.0
    %1853 = vmatpush1.msra.mxu0 0.0
    %1854 = vmatprep.subr.mxu0 0.0
    %1855 = vmatpush1.msra.mxu0 0.0
    %1856 = vmatprep.subr.mxu0 0.0
    %1857 = vmatpush1.msra.mxu0 0.0
    %1858 = vmatprep.subr.mxu0 0.0
    %1859 = vmatpush1.msra.mxu0 0.0
    %1860 = vmatprep.subr.mxu0 0.0
    %1861 = vmatpush1.msra.mxu0 0.0
    %1862 = vmatprep.subr.mxu0 0.0
    %1863 = vmatpush1.msra.mxu0 0.0
    %1864 = vmatprep.subr.mxu0 0.0
    %1865 = vmatpush1.msra.mxu0 0.0
    %1866 = vmatprep.subr.mxu0 0.0
    %1867 = vmatpush1.msra.mxu0 0.0
    %1868 = vmatprep.subr.mxu0 0.0
    %1869 = vmatpush1.msra.mxu0 0.0
    %1870 = vmatprep.subr.mxu0 0.0
    %1871 = vmatpush1.msra.mxu0 0.0
    %1872 = vmatprep.subr.mxu0 0.0
    %1873 = vmatpush1.msra.mxu0 0.0
    %1874 = vmatprep.subr.mxu0 0.0
    %1875 = vmatpush1.msra.mxu0 0.0
    %1876 = vmatprep.subr.mxu0 0.0
    %1877 = vmatpush1.msra.mxu0 0.0
    %1878 = vmatprep.subr.mxu0 0.0
    %1879 = vmatpush1.msra.mxu0 0.0
    %1880 = vmatprep.subr.mxu0 0.0
    %1881 = vmatpush1.msra.mxu0 0.0
    %1882 = vmatprep.mubr.f32.mxu0 0.0
    %1883 = vmatmul.mubr.f32.gmra.mrb[0].mxu0 %v1737
    %v1884 = vpop.f32.mrb[0].mxu0
    %v1885 = vadd.f32 0.0, %v1884
    %v1886 = vpop.f32.mrb[0].mxu0
    %v1887 = vadd.f32 0.0, %v1886
    %1888 = vdwg.mxu0
    %v1889 = vadd.f32 %v1743, %v1814
    %v1890 = vadd.f32 %v1744, %v1816
    %v1891 = vadd.f32 %v1745, %v1885
    %v1892 = vadd.f32 %v1746, %v1887
    %v1893 = vxor.u32 %v1889, 2147483648
    %v1894 = vmul.f32 %v1893, 1.442695
    %v1895 = vpow.pop %v1894
    %v1896 = vadd.f32 %v1895, 1.0
    %v1897 = vrcp.pop %v1896
    %v1898 = vmul.f32 1.0, %v1897
    %v1899 = vxor.u32 %v1890, 2147483648
    %v1900 = vmul.f32 %v1899, 1.442695
    %v1901 = vpow.pop %v1900
    %v1902 = vadd.f32 %v1901, 1.0
    %v1903 = vrcp.pop %v1902
    %v1904 = vmul.f32 1.0, %v1903
    %v1905 = vtanh.pop %v1891
    %v1906 = vxor.u32 %v1892, 2147483648
    %v1907 = vmul.f32 %v1906, 1.442695
    %v1908 = vpow.pop %v1907
    %v1909 = vadd.f32 %v1908, 1.0
    %v1910 = vrcp.pop %v1909
    %v1911 = vmul.f32 1.0, %v1910
    %v1912 = vmul.f32 %v1904, %v1735
    %v1913 = vmul.f32 %v1898, %v1905
    %v1914 = vadd.f32 %v1912, %v1913
    %v1915 = vtanh.pop %v1914
    %v1916 = vmul.f32 %v1911, %v1915
    %s1917 = scalar_lea.vmem %s7, 56
    %1918 = vst [vmem:[%s1917] sm:$0xff] %v1916
    %1919 = vst [vmem:[%s8] sm:$0xff] %v1916
    %1920 = vst [vmem:[%s9] sm:$0xff] %v1914
    %v1921 = vld [vmem:[%s7] sm:$0xff]
    %v1922 = vld [vmem:[%s7 + $0x8] sm:$0xff]
    %v1923 = vld [vmem:[%s7 + $0x10] sm:$0xff]
    %v1924 = vld [vmem:[%s7 + $0x18] sm:$0xff]
    %v1925 = vld [vmem:[%s7 + $0x20] sm:$0xff]
    %v1926 = vld [vmem:[%s7 + $0x28] sm:$0xff]
    %v1927 = vld [vmem:[%s7 + $0x30] sm:$0xff]
    %v1928 = vld [vmem:[%s7 + $0x38] sm:$0xff]
    %v1929 = vld [vmem:[#allocation5] sm:$0xff]
    %v1930 = vld [vmem:[#allocation5 + $0x8] sm:$0xff]
    %v1931 = vld [vmem:[#allocation5 + $0x10] sm:$0xff]
    %v1932 = vld [vmem:[#allocation5 + $0x18] sm:$0xff]
    %v1933 = vld [vmem:[#allocation5 + $0x20] sm:$0xff]
    %v1934 = vld [vmem:[#allocation5 + $0x28] sm:$0xff]
    %v1935 = vld [vmem:[#allocation5 + $0x30] sm:$0xff]
    %v1936 = vld [vmem:[#allocation5 + $0x38] sm:$0xff]
    %v1937 = vld [vmem:[#allocation5 + $0x40] sm:$0xff]
    %v1938 = vld [vmem:[#allocation5 + $0x48] sm:$0xff]
    %v1939 = vld [vmem:[#allocation5 + $0x50] sm:$0xff]
    %v1940 = vld [vmem:[#allocation5 + $0x58] sm:$0xff]
    %v1941 = vld [vmem:[#allocation5 + $0x60] sm:$0xff]
    %v1942 = vld [vmem:[#allocation5 + $0x68] sm:$0xff]
    %v1943 = vld [vmem:[#allocation5 + $0x70] sm:$0xff]
    %v1944 = vld [vmem:[#allocation5 + $0x78] sm:$0xff]
    %v1945 = vld [vmem:[#allocation5 + $0x80] sm:$0xff]
    %v1946 = vld [vmem:[#allocation5 + $0x88] sm:$0xff]
    %v1947 = vld [vmem:[#allocation5 + $0x90] sm:$0xff]
    %v1948 = vld [vmem:[#allocation5 + $0x98] sm:$0xff]
    %v1949 = vld [vmem:[#allocation5 + $0xa0] sm:$0xff]
    %v1950 = vld [vmem:[#allocation5 + $0xa8] sm:$0xff]
    %v1951 = vld [vmem:[#allocation5 + $0xb0] sm:$0xff]
    %v1952 = vld [vmem:[#allocation5 + $0xb8] sm:$0xff]
    %v1953 = vld [vmem:[#allocation5 + $0xc0] sm:$0xff]
    %v1954 = vld [vmem:[#allocation5 + $0xc8] sm:$0xff]
    %v1955 = vld [vmem:[#allocation5 + $0xd0] sm:$0xff]
    %v1956 = vld [vmem:[#allocation5 + $0xd8] sm:$0xff]
    %v1957 = vld [vmem:[#allocation5 + $0xe0] sm:$0xff]
    %v1958 = vld [vmem:[#allocation5 + $0xe8] sm:$0xff]
    %v1959 = vld [vmem:[#allocation5 + $0xf0] sm:$0xff]
    %v1960 = vld [vmem:[#allocation5 + $0xf8] sm:$0xff]
    %v1961 = vld [vmem:[#allocation5 + $0x100] sm:$0xff]
    %v1962 = vld [vmem:[#allocation5 + $0x108] sm:$0xff]
    %v1963 = vld [vmem:[#allocation5 + $0x110] sm:$0xff]
    %v1964 = vld [vmem:[#allocation5 + $0x118] sm:$0xff]
    %v1965 = vld [vmem:[#allocation5 + $0x120] sm:$0xff]
    %v1966 = vld [vmem:[#allocation5 + $0x128] sm:$0xff]
    %v1967 = vld [vmem:[#allocation5 + $0x130] sm:$0xff]
    %v1968 = vld [vmem:[#allocation5 + $0x138] sm:$0xff]
    %v1969 = vld [vmem:[#allocation5 + $0x140] sm:$0xff]
    %v1970 = vld [vmem:[#allocation5 + $0x148] sm:$0xff]
    %v1971 = vld [vmem:[#allocation5 + $0x150] sm:$0xff]
    %v1972 = vld [vmem:[#allocation5 + $0x158] sm:$0xff]
    %v1973 = vld [vmem:[#allocation5 + $0x160] sm:$0xff]
    %v1974 = vld [vmem:[#allocation5 + $0x168] sm:$0xff]
    %v1975 = vld [vmem:[#allocation5 + $0x170] sm:$0xff]
    %v1976 = vld [vmem:[#allocation5 + $0x178] sm:$0xff]
    %v1977 = vld [vmem:[#allocation5 + $0x180] sm:$0xff]
    %v1978 = vld [vmem:[#allocation5 + $0x188] sm:$0xff]
    %v1979 = vld [vmem:[#allocation5 + $0x190] sm:$0xff]
    %v1980 = vld [vmem:[#allocation5 + $0x198] sm:$0xff]
    %v1981 = vld [vmem:[#allocation5 + $0x1a0] sm:$0xff]
    %v1982 = vld [vmem:[#allocation5 + $0x1a8] sm:$0xff]
    %v1983 = vld [vmem:[#allocation5 + $0x1b0] sm:$0xff]
    %v1984 = vld [vmem:[#allocation5 + $0x1b8] sm:$0xff]
    %v1985 = vld [vmem:[#allocation5 + $0x1c0] sm:$0xff]
    %v1986 = vld [vmem:[#allocation5 + $0x1c8] sm:$0xff]
    %v1987 = vld [vmem:[#allocation5 + $0x1d0] sm:$0xff]
    %v1988 = vld [vmem:[#allocation5 + $0x1d8] sm:$0xff]
    %v1989 = vld [vmem:[#allocation5 + $0x1e0] sm:$0xff]
    %v1990 = vld [vmem:[#allocation5 + $0x1e8] sm:$0xff]
    %v1991 = vld [vmem:[#allocation5 + $0x1f0] sm:$0xff]
    %v1992 = vld [vmem:[#allocation5 + $0x1f8] sm:$0xff]
    %s1993 = scalar_lea.vmem %s4, 4
    %v1994 = vld [vmem:[%s1993] sm:$0xf]
    %v1996 = vlaneseq
    %v1997 = vshrl.u32 %v1996, 7
    %v1998 = vsub.s32 0, %v1997
    %v1999 = vrot.slane %v1994, %v1998
    %v2000 = vlaneseq
    %v2001 = vshrl.u32 %v2000, 7
    %v2002 = vsub.s32 1, %v2001
    %v2003 = vrot.slane %v1994, %v2002
    %v2004 = vlaneseq
    %v2005 = vshrl.u32 %v2004, 7
    %v2006 = vsub.s32 2, %v2005
    %v2007 = vrot.slane %v1994, %v2006
    %v2008 = vlaneseq
    %v2009 = vshrl.u32 %v2008, 7
    %v2010 = vsub.s32 3, %v2009
    %v2011 = vrot.slane %v1994, %v2010
    %2016 = vmatprep.subr.mxu0 %v1930
    %2017 = vmatpush1.msra.mxu0 %v1929
    %2018 = vmatprep.subr.mxu0 %v1934
    %2019 = vmatpush1.msra.mxu0 %v1933
    %2020 = vmatprep.subr.mxu0 %v1938
    %2021 = vmatpush1.msra.mxu0 %v1937
    %2022 = vmatprep.subr.mxu0 %v1942
    %2023 = vmatpush1.msra.mxu0 %v1941
    %2024 = vmatprep.subr.mxu0 %v1946
    %2025 = vmatpush1.msra.mxu0 %v1945
    %2026 = vmatprep.subr.mxu0 %v1950
    %2027 = vmatpush1.msra.mxu0 %v1949
    %2028 = vmatprep.subr.mxu0 %v1954
    %2029 = vmatpush1.msra.mxu0 %v1953
    %2030 = vmatprep.subr.mxu0 %v1958
    %2031 = vmatpush1.msra.mxu0 %v1957
    %2032 = vmatprep.subr.mxu0 %v1962
    %2033 = vmatpush1.msra.mxu0 %v1961
    %2034 = vmatprep.subr.mxu0 %v1966
    %2035 = vmatpush1.msra.mxu0 %v1965
    %2036 = vmatprep.subr.mxu0 %v1970
    %2037 = vmatpush1.msra.mxu0 %v1969
    %2038 = vmatprep.subr.mxu0 %v1974
    %2039 = vmatpush1.msra.mxu0 %v1973
    %2040 = vmatprep.subr.mxu0 %v1978
    %2041 = vmatpush1.msra.mxu0 %v1977
    %2042 = vmatprep.subr.mxu0 %v1982
    %2043 = vmatpush1.msra.mxu0 %v1981
    %2044 = vmatprep.subr.mxu0 %v1986
    %2045 = vmatpush1.msra.mxu0 %v1985
    %2046 = vmatprep.subr.mxu0 %v1990
    %2047 = vmatpush1.msra.mxu0 %v1989
    %2048 = vmatprep.subr.mxu0 0.0
    %2049 = vmatpush1.msra.mxu0 0.0
    %2050 = vmatprep.subr.mxu0 0.0
    %2051 = vmatpush1.msra.mxu0 0.0
    %2052 = vmatprep.subr.mxu0 0.0
    %2053 = vmatpush1.msra.mxu0 0.0
    %2054 = vmatprep.subr.mxu0 0.0
    %2055 = vmatpush1.msra.mxu0 0.0
    %2056 = vmatprep.subr.mxu0 0.0
    %2057 = vmatpush1.msra.mxu0 0.0
    %2058 = vmatprep.subr.mxu0 0.0
    %2059 = vmatpush1.msra.mxu0 0.0
    %2060 = vmatprep.subr.mxu0 0.0
    %2061 = vmatpush1.msra.mxu0 0.0
    %2062 = vmatprep.subr.mxu0 0.0
    %2063 = vmatpush1.msra.mxu0 0.0
    %2064 = vmatprep.subr.mxu0 0.0
    %2065 = vmatpush1.msra.mxu0 0.0
    %2066 = vmatprep.subr.mxu0 0.0
    %2067 = vmatpush1.msra.mxu0 0.0
    %2068 = vmatprep.subr.mxu0 0.0
    %2069 = vmatpush1.msra.mxu0 0.0
    %2070 = vmatprep.subr.mxu0 0.0
    %2071 = vmatpush1.msra.mxu0 0.0
    %2072 = vmatprep.subr.mxu0 0.0
    %2073 = vmatpush1.msra.mxu0 0.0
    %2074 = vmatprep.subr.mxu0 0.0
    %2075 = vmatpush1.msra.mxu0 0.0
    %2076 = vmatprep.subr.mxu0 0.0
    %2077 = vmatpush1.msra.mxu0 0.0
    %2078 = vmatprep.subr.mxu0 0.0
    %2079 = vmatpush1.msra.mxu0 0.0
    %2080 = vmatprep.mubr.f32.mxu0 0.0
    %2081 = vmatmul.mubr.f32.gmra.mrb[0].mxu0 %v1921
    %v2082 = vpop.f32.mrb[0].mxu0
    %v2083 = vadd.f32 %v1999, %v2082
    %v2084 = vpop.f32.mrb[0].mxu0
    %v2085 = vadd.f32 %v2003, %v2084
    %2086 = vmatprep.mubr.f32.mxu0 0.0
    %2087 = vmatmul.mubr.f32.gmra.mrb[0].mxu0 %v1922
    %v2088 = vpop.f32.mrb[0].mxu0
    %v2089 = vadd.f32 %v1999, %v2088
    %v2090 = vpop.f32.mrb[0].mxu0
    %v2091 = vadd.f32 %v2003, %v2090
    %2092 = vmatprep.mubr.f32.mxu0 0.0
    %2093 = vmatmul.mubr.f32.gmra.mrb[0].mxu0 %v1923
    %v2094 = vpop.f32.mrb[0].mxu0
    %v2095 = vadd.f32 %v1999, %v2094
    %v2096 = vpop.f32.mrb[0].mxu0
    %v2097 = vadd.f32 %v2003, %v2096
    %2098 = vmatprep.mubr.f32.mxu0 0.0
    %2099 = vmatmul.mubr.f32.gmra.mrb[0].mxu0 %v1924
    %v2100 = vpop.f32.mrb[0].mxu0
    %v2101 = vadd.f32 %v1999, %v2100
    %v2102 = vpop.f32.mrb[0].mxu0
    %v2103 = vadd.f32 %v2003, %v2102
    %2104 = vmatprep.mubr.f32.mxu0 0.0
    %2105 = vmatmul.mubr.f32.gmra.mrb[0].mxu0 %v1925
    %v2106 = vpop.f32.mrb[0].mxu0
    %v2107 = vadd.f32 %v1999, %v2106
    %v2108 = vpop.f32.mrb[0].mxu0
    %v2109 = vadd.f32 %v2003, %v2108
    %2110 = vmatprep.mubr.f32.mxu0 0.0
    %2111 = vmatmul.mubr.f32.gmra.mrb[0].mxu0 %v1926
    %v2112 = vpop.f32.mrb[0].mxu0
    %v2113 = vadd.f32 %v1999, %v2112
    %v2114 = vpop.f32.mrb[0].mxu0
    %v2115 = vadd.f32 %v2003, %v2114
    %2116 = vmatprep.mubr.f32.mxu0 0.0
    %2117 = vmatmul.mubr.f32.gmra.mrb[0].mxu0 %v1927
    %v2118 = vpop.f32.mrb[0].mxu0
    %v2119 = vadd.f32 %v1999, %v2118
    %v2120 = vpop.f32.mrb[0].mxu0
    %v2121 = vadd.f32 %v2003, %v2120
    %2122 = vmatprep.mubr.f32.mxu0 0.0
    %2123 = vmatmul.mubr.f32.gmra.mrb[0].mxu0 %v1928
    %v2124 = vpop.f32.mrb[0].mxu0
    %v2125 = vadd.f32 %v1999, %v2124
    %v2126 = vpop.f32.mrb[0].mxu0
    %v2127 = vadd.f32 %v2003, %v2126
    %2128 = vdwg.mxu0
    %2129 = vmatprep.subr.mxu0 %v1932
    %2130 = vmatpush1.msra.mxu0 %v1931
    %2131 = vmatprep.subr.mxu0 %v1936
    %2132 = vmatpush1.msra.mxu0 %v1935
    %2133 = vmatprep.subr.mxu0 %v1940
    %2134 = vmatpush1.msra.mxu0 %v1939
    %2135 = vmatprep.subr.mxu0 %v1944
    %2136 = vmatpush1.msra.mxu0 %v1943
    %2137 = vmatprep.subr.mxu0 %v1948
    %2138 = vmatpush1.msra.mxu0 %v1947
    %2139 = vmatprep.subr.mxu0 %v1952
    %2140 = vmatpush1.msra.mxu0 %v1951
    %2141 = vmatprep.subr.mxu0 %v1956
    %2142 = vmatpush1.msra.mxu0 %v1955
    %2143 = vmatprep.subr.mxu0 %v1960
    %2144 = vmatpush1.msra.mxu0 %v1959
    %2145 = vmatprep.subr.mxu0 %v1964
    %2146 = vmatpush1.msra.mxu0 %v1963
    %2147 = vmatprep.subr.mxu0 %v1968
    %2148 = vmatpush1.msra.mxu0 %v1967
    %2149 = vmatprep.subr.mxu0 %v1972
    %2150 = vmatpush1.msra.mxu0 %v1971
    %2151 = vmatprep.subr.mxu0 %v1976
    %2152 = vmatpush1.msra.mxu0 %v1975
    %2153 = vmatprep.subr.mxu0 %v1980
    %2154 = vmatpush1.msra.mxu0 %v1979
    %2155 = vmatprep.subr.mxu0 %v1984
    %2156 = vmatpush1.msra.mxu0 %v1983
    %2157 = vmatprep.subr.mxu0 %v1988
    %2158 = vmatpush1.msra.mxu0 %v1987
    %2159 = vmatprep.subr.mxu0 %v1992
    %2160 = vmatpush1.msra.mxu0 %v1991
    %2161 = vmatprep.subr.mxu0 0.0
    %2162 = vmatpush1.msra.mxu0 0.0
    %2163 = vmatprep.subr.mxu0 0.0
    %2164 = vmatpush1.msra.mxu0 0.0
    %2165 = vmatprep.subr.mxu0 0.0
    %2166 = vmatpush1.msra.mxu0 0.0
    %2167 = vmatprep.subr.mxu0 0.0
    %2168 = vmatpush1.msra.mxu0 0.0
    %2169 = vmatprep.subr.mxu0 0.0
    %2170 = vmatpush1.msra.mxu0 0.0
    %2171 = vmatprep.subr.mxu0 0.0
    %2172 = vmatpush1.msra.mxu0 0.0
    %2173 = vmatprep.subr.mxu0 0.0
    %2174 = vmatpush1.msra.mxu0 0.0
    %2175 = vmatprep.subr.mxu0 0.0
    %2176 = vmatpush1.msra.mxu0 0.0
    %2177 = vmatprep.subr.mxu0 0.0
    %2178 = vmatpush1.msra.mxu0 0.0
    %2179 = vmatprep.subr.mxu0 0.0
    %2180 = vmatpush1.msra.mxu0 0.0
    %2181 = vmatprep.subr.mxu0 0.0
    %2182 = vmatpush1.msra.mxu0 0.0
    %2183 = vmatprep.subr.mxu0 0.0
    %2184 = vmatpush1.msra.mxu0 0.0
    %2185 = vmatprep.subr.mxu0 0.0
    %2186 = vmatpush1.msra.mxu0 0.0
    %2187 = vmatprep.subr.mxu0 0.0
    %2188 = vmatpush1.msra.mxu0 0.0
    %2189 = vmatprep.subr.mxu0 0.0
    %2190 = vmatpush1.msra.mxu0 0.0
    %2191 = vmatprep.subr.mxu0 0.0
    %2192 = vmatpush1.msra.mxu0 0.0
    %2193 = vmatprep.mubr.f32.mxu0 0.0
    %2194 = vmatmul.mubr.f32.gmra.mrb[0].mxu0 %v1921
    %v2195 = vpop.f32.mrb[0].mxu0
    %v2196 = vadd.f32 %v2007, %v2195
    %v2197 = vpop.f32.mrb[0].mxu0
    %v2198 = vadd.f32 %v2011, %v2197
    %2199 = vmatprep.mubr.f32.mxu0 0.0
    %2200 = vmatmul.mubr.f32.gmra.mrb[0].mxu0 %v1922
    %v2201 = vpop.f32.mrb[0].mxu0
    %v2202 = vadd.f32 %v2007, %v2201
    %v2203 = vpop.f32.mrb[0].mxu0
    %v2204 = vadd.f32 %v2011, %v2203
    %2205 = vmatprep.mubr.f32.mxu0 0.0
    %2206 = vmatmul.mubr.f32.gmra.mrb[0].mxu0 %v1923
    %v2207 = vpop.f32.mrb[0].mxu0
    %v2208 = vadd.f32 %v2007, %v2207
    %v2209 = vpop.f32.mrb[0].mxu0
    %v2210 = vadd.f32 %v2011, %v2209
    %2211 = vmatprep.mubr.f32.mxu0 0.0
    %2212 = vmatmul.mubr.f32.gmra.mrb[0].mxu0 %v1924
    %v2213 = vpop.f32.mrb[0].mxu0
    %v2214 = vadd.f32 %v2007, %v2213
    %v2215 = vpop.f32.mrb[0].mxu0
    %v2216 = vadd.f32 %v2011, %v2215
    %2217 = vmatprep.mubr.f32.mxu0 0.0
    %2218 = vmatmul.mubr.f32.gmra.mrb[0].mxu0 %v1925
    %v2219 = vpop.f32.mrb[0].mxu0
    %v2220 = vadd.f32 %v2007, %v2219
    %v2221 = vpop.f32.mrb[0].mxu0
    %v2222 = vadd.f32 %v2011, %v2221
    %2223 = vmatprep.mubr.f32.mxu0 0.0
    %2224 = vmatmul.mubr.f32.gmra.mrb[0].mxu0 %v1926
    %v2225 = vpop.f32.mrb[0].mxu0
    %v2226 = vadd.f32 %v2007, %v2225
    %v2227 = vpop.f32.mrb[0].mxu0
    %v2228 = vadd.f32 %v2011, %v2227
    %2229 = vmatprep.mubr.f32.mxu0 0.0
    %2230 = vmatmul.mubr.f32.gmra.mrb[0].mxu0 %v1927
    %v2231 = vpop.f32.mrb[0].mxu0
    %v2232 = vadd.f32 %v2007, %v2231
    %v2233 = vpop.f32.mrb[0].mxu0
    %v2234 = vadd.f32 %v2011, %v2233
    %2235 = vmatprep.mubr.f32.mxu0 0.0
    %2236 = vmatmul.mubr.f32.gmra.mrb[0].mxu0 %v1928
    %v2237 = vpop.f32.mrb[0].mxu0
    %v2238 = vadd.f32 %v2007, %v2237
    %v2239 = vpop.f32.mrb[0].mxu0
    %v2240 = vadd.f32 %v2011, %v2239
    %2241 = vdwg.mxu0
    %2242 = vst [vmem:[#allocation2] sm:$0xff] %v2083
    %2243 = vst [vmem:[#allocation2 + $0x8] sm:$0xff] %v2085
    %2244 = vst [vmem:[#allocation2 + $0x10] sm:$0xff] %v2196
    %2245 = vst [vmem:[#allocation2 + $0x18] sm:$0xff] %v2198
    %2246 = vst [vmem:[#allocation2 + $0x20] sm:$0xff] %v2089
    %2247 = vst [vmem:[#allocation2 + $0x28] sm:$0xff] %v2091
    %2248 = vst [vmem:[#allocation2 + $0x30] sm:$0xff] %v2202
    %2249 = vst [vmem:[#allocation2 + $0x38] sm:$0xff] %v2204
    %2250 = vst [vmem:[#allocation2 + $0x40] sm:$0xff] %v2095
    %2251 = vst [vmem:[#allocation2 + $0x48] sm:$0xff] %v2097
    %2252 = vst [vmem:[#allocation2 + $0x50] sm:$0xff] %v2208
    %2253 = vst [vmem:[#allocation2 + $0x58] sm:$0xff] %v2210
    %2254 = vst [vmem:[#allocation2 + $0x60] sm:$0xff] %v2101
    %2255 = vst [vmem:[#allocation2 + $0x68] sm:$0xff] %v2103
    %2256 = vst [vmem:[#allocation2 + $0x70] sm:$0xff] %v2214
    %2257 = vst [vmem:[#allocation2 + $0x78] sm:$0xff] %v2216
    %2258 = vst [vmem:[#allocation2 + $0x80] sm:$0xff] %v2107
    %2259 = vst [vmem:[#allocation2 + $0x88] sm:$0xff] %v2109
    %2260 = vst [vmem:[#allocation2 + $0x90] sm:$0xff] %v2220
    %2261 = vst [vmem:[#allocation2 + $0x98] sm:$0xff] %v2222
    %2262 = vst [vmem:[#allocation2 + $0xa0] sm:$0xff] %v2113
    %2263 = vst [vmem:[#allocation2 + $0xa8] sm:$0xff] %v2115
    %2264 = vst [vmem:[#allocation2 + $0xb0] sm:$0xff] %v2226
    %2265 = vst [vmem:[#allocation2 + $0xb8] sm:$0xff] %v2228
    %2266 = vst [vmem:[#allocation2 + $0xc0] sm:$0xff] %v2119
    %2267 = vst [vmem:[#allocation2 + $0xc8] sm:$0xff] %v2121
    %2268 = vst [vmem:[#allocation2 + $0xd0] sm:$0xff] %v2232
    %2269 = vst [vmem:[#allocation2 + $0xd8] sm:$0xff] %v2234
    %2270 = vst [vmem:[#allocation2 + $0xe0] sm:$0xff] %v2125
    %2271 = vst [vmem:[#allocation2 + $0xe8] sm:$0xff] %v2127
    %2272 = vst [vmem:[#allocation2 + $0xf0] sm:$0xff] %v2238
    %2273 = vst [vmem:[#allocation2 + $0xf8] sm:$0xff] %v2240
    %s2274 = scalar_lea.vmem [#allocation7], 512
    %v2275 = vld [vmem:[%s2274] sm:$0xff]
    %v2276 = vld [vmem:[%s2274 + $0x8] sm:$0xff]
    %v2277 = vld [vmem:[%s2274 + $0x10] sm:$0xff]
    %v2278 = vld [vmem:[%s2274 + $0x18] sm:$0xff]
    %v2279 = vld [vmem:[%s2274 + $0x20] sm:$0xff]
    %v2280 = vld [vmem:[%s2274 + $0x28] sm:$0xff]
    %v2281 = vld [vmem:[%s2274 + $0x30] sm:$0xff]
    %v2282 = vld [vmem:[%s2274 + $0x38] sm:$0xff]
    %v2283 = vld [vmem:[%s2274 + $0x40] sm:$0xff]
    %v2284 = vld [vmem:[%s2274 + $0x48] sm:$0xff]
    %v2285 = vld [vmem:[%s2274 + $0x50] sm:$0xff]
    %v2286 = vld [vmem:[%s2274 + $0x58] sm:$0xff]
    %v2287 = vld [vmem:[%s2274 + $0x60] sm:$0xff]
    %v2288 = vld [vmem:[%s2274 + $0x68] sm:$0xff]
    %v2289 = vld [vmem:[%s2274 + $0x70] sm:$0xff]
    %v2290 = vld [vmem:[%s2274 + $0x78] sm:$0xff]
    %v2291 = vld [vmem:[%s2274 + $0x80] sm:$0xff]
    %v2292 = vld [vmem:[%s2274 + $0x88] sm:$0xff]
    %v2293 = vld [vmem:[%s2274 + $0x90] sm:$0xff]
    %v2294 = vld [vmem:[%s2274 + $0x98] sm:$0xff]
    %v2295 = vld [vmem:[%s2274 + $0xa0] sm:$0xff]
    %v2296 = vld [vmem:[%s2274 + $0xa8] sm:$0xff]
    %v2297 = vld [vmem:[%s2274 + $0xb0] sm:$0xff]
    %v2298 = vld [vmem:[%s2274 + $0xb8] sm:$0xff]
    %v2299 = vld [vmem:[%s2274 + $0xc0] sm:$0xff]
    %v2300 = vld [vmem:[%s2274 + $0xc8] sm:$0xff]
    %v2301 = vld [vmem:[%s2274 + $0xd0] sm:$0xff]
    %v2302 = vld [vmem:[%s2274 + $0xd8] sm:$0xff]
    %v2303 = vld [vmem:[%s2274 + $0xe0] sm:$0xff]
    %v2304 = vld [vmem:[%s2274 + $0xe8] sm:$0xff]
    %v2305 = vld [vmem:[%s2274 + $0xf0] sm:$0xff]
    %v2306 = vld [vmem:[%s2274 + $0xf8] sm:$0xff]
    %v2307 = vld [vmem:[%s2274 + $0x100] sm:$0xff]
    %v2308 = vld [vmem:[%s2274 + $0x108] sm:$0xff]
    %v2309 = vld [vmem:[%s2274 + $0x110] sm:$0xff]
    %v2310 = vld [vmem:[%s2274 + $0x118] sm:$0xff]
    %v2311 = vld [vmem:[%s2274 + $0x120] sm:$0xff]
    %v2312 = vld [vmem:[%s2274 + $0x128] sm:$0xff]
    %v2313 = vld [vmem:[%s2274 + $0x130] sm:$0xff]
    %v2314 = vld [vmem:[%s2274 + $0x138] sm:$0xff]
    %v2315 = vld [vmem:[%s2274 + $0x140] sm:$0xff]
    %v2316 = vld [vmem:[%s2274 + $0x148] sm:$0xff]
    %v2317 = vld [vmem:[%s2274 + $0x150] sm:$0xff]
    %v2318 = vld [vmem:[%s2274 + $0x158] sm:$0xff]
    %v2319 = vld [vmem:[%s2274 + $0x160] sm:$0xff]
    %v2320 = vld [vmem:[%s2274 + $0x168] sm:$0xff]
    %v2321 = vld [vmem:[%s2274 + $0x170] sm:$0xff]
    %v2322 = vld [vmem:[%s2274 + $0x178] sm:$0xff]
    %v2323 = vld [vmem:[%s2274 + $0x180] sm:$0xff]
    %v2324 = vld [vmem:[%s2274 + $0x188] sm:$0xff]
    %v2325 = vld [vmem:[%s2274 + $0x190] sm:$0xff]
    %v2326 = vld [vmem:[%s2274 + $0x198] sm:$0xff]
    %v2327 = vld [vmem:[%s2274 + $0x1a0] sm:$0xff]
    %v2328 = vld [vmem:[%s2274 + $0x1a8] sm:$0xff]
    %v2329 = vld [vmem:[%s2274 + $0x1b0] sm:$0xff]
    %v2330 = vld [vmem:[%s2274 + $0x1b8] sm:$0xff]
    %v2331 = vld [vmem:[%s2274 + $0x1c0] sm:$0xff]
    %v2332 = vld [vmem:[%s2274 + $0x1c8] sm:$0xff]
    %v2333 = vld [vmem:[%s2274 + $0x1d0] sm:$0xff]
    %v2334 = vld [vmem:[%s2274 + $0x1d8] sm:$0xff]
    %v2335 = vld [vmem:[%s2274 + $0x1e0] sm:$0xff]
    %v2336 = vld [vmem:[%s2274 + $0x1e8] sm:$0xff]
    %v2337 = vld [vmem:[%s2274 + $0x1f0] sm:$0xff]
    %v2338 = vld [vmem:[%s2274 + $0x1f8] sm:$0xff]
    %s2339 = scalar_lea.vmem %s5, 8
    %v2340 = vld [vmem:[%s2339] sm:$0xff]
    %s2341 = scalar_lea.vmem %s6, 8
    %v2342 = vld [vmem:[%s2341] sm:$0xff]
    %v2343 = vld [vmem:[%s490] sm:$0xff]
    %v2344 = vld [vmem:[%s490 + $0x8] sm:$0xff]
    %v2345 = vld [vmem:[%s490 + $0x10] sm:$0xff]
    %v2346 = vld [vmem:[%s490 + $0x18] sm:$0xff]
    %2347 = vmatprep.subr.mxu0 %v2276
    %2348 = vmatpush1.msra.mxu0 %v2275
    %2349 = vmatprep.subr.mxu0 %v2280
    %2350 = vmatpush1.msra.mxu0 %v2279
    %2351 = vmatprep.subr.mxu0 %v2284
    %2352 = vmatpush1.msra.mxu0 %v2283
    %2353 = vmatprep.subr.mxu0 %v2288
    %2354 = vmatpush1.msra.mxu0 %v2287
    %2355 = vmatprep.subr.mxu0 %v2292
    %2356 = vmatpush1.msra.mxu0 %v2291
    %2357 = vmatprep.subr.mxu0 %v2296
    %2358 = vmatpush1.msra.mxu0 %v2295
    %2359 = vmatprep.subr.mxu0 %v2300
    %2360 = vmatpush1.msra.mxu0 %v2299
    %2361 = vmatprep.subr.mxu0 %v2304
    %2362 = vmatpush1.msra.mxu0 %v2303
    %2363 = vmatprep.subr.mxu0 %v2308
    %2364 = vmatpush1.msra.mxu0 %v2307
    %2365 = vmatprep.subr.mxu0 %v2312
    %2366 = vmatpush1.msra.mxu0 %v2311
    %2367 = vmatprep.subr.mxu0 %v2316
    %2368 = vmatpush1.msra.mxu0 %v2315
    %2369 = vmatprep.subr.mxu0 %v2320
    %2370 = vmatpush1.msra.mxu0 %v2319
    %2371 = vmatprep.subr.mxu0 %v2324
    %2372 = vmatpush1.msra.mxu0 %v2323
    %2373 = vmatprep.subr.mxu0 %v2328
    %2374 = vmatpush1.msra.mxu0 %v2327
    %2375 = vmatprep.subr.mxu0 %v2332
    %2376 = vmatpush1.msra.mxu0 %v2331
    %2377 = vmatprep.subr.mxu0 %v2336
    %2378 = vmatpush1.msra.mxu0 %v2335
    %2379 = vmatprep.subr.mxu0 0.0
    %2380 = vmatpush1.msra.mxu0 0.0
    %2381 = vmatprep.subr.mxu0 0.0
    %2382 = vmatpush1.msra.mxu0 0.0
    %2383 = vmatprep.subr.mxu0 0.0
    %2384 = vmatpush1.msra.mxu0 0.0
    %2385 = vmatprep.subr.mxu0 0.0
    %2386 = vmatpush1.msra.mxu0 0.0
    %2387 = vmatprep.subr.mxu0 0.0
    %2388 = vmatpush1.msra.mxu0 0.0
    %2389 = vmatprep.subr.mxu0 0.0
    %2390 = vmatpush1.msra.mxu0 0.0
    %2391 = vmatprep.subr.mxu0 0.0
    %2392 = vmatpush1.msra.mxu0 0.0
    %2393 = vmatprep.subr.mxu0 0.0
    %2394 = vmatpush1.msra.mxu0 0.0
    %2395 = vmatprep.subr.mxu0 0.0
    %2396 = vmatpush1.msra.mxu0 0.0
    %2397 = vmatprep.subr.mxu0 0.0
    %2398 = vmatpush1.msra.mxu0 0.0
    %2399 = vmatprep.subr.mxu0 0.0
    %2400 = vmatpush1.msra.mxu0 0.0
    %2401 = vmatprep.subr.mxu0 0.0
    %2402 = vmatpush1.msra.mxu0 0.0
    %2403 = vmatprep.subr.mxu0 0.0
    %2404 = vmatpush1.msra.mxu0 0.0
    %2405 = vmatprep.subr.mxu0 0.0
    %2406 = vmatpush1.msra.mxu0 0.0
    %2407 = vmatprep.subr.mxu0 0.0
    %2408 = vmatpush1.msra.mxu0 0.0
    %2409 = vmatprep.subr.mxu0 0.0
    %2410 = vmatpush1.msra.mxu0 0.0
    %2411 = vmatprep.mubr.f32.mxu0 0.0
    %2412 = vmatmul.mubr.f32.gmra.mrb[0].mxu0 %v2340
    %v2413 = vpop.f32.mrb[0].mxu0
    %v2414 = vadd.f32 0.0, %v2413
    %v2415 = vpop.f32.mrb[0].mxu0
    %v2416 = vadd.f32 0.0, %v2415
    %2417 = vdwg.mxu0
    %2418 = vmatprep.subr.mxu0 %v2278
    %2419 = vmatpush1.msra.mxu0 %v2277
    %2420 = vmatprep.subr.mxu0 %v2282
    %2421 = vmatpush1.msra.mxu0 %v2281
    %2422 = vmatprep.subr.mxu0 %v2286
    %2423 = vmatpush1.msra.mxu0 %v2285
    %2424 = vmatprep.subr.mxu0 %v2290
    %2425 = vmatpush1.msra.mxu0 %v2289
    %2426 = vmatprep.subr.mxu0 %v2294
    %2427 = vmatpush1.msra.mxu0 %v2293
    %2428 = vmatprep.subr.mxu0 %v2298
    %2429 = vmatpush1.msra.mxu0 %v2297
    %2430 = vmatprep.subr.mxu0 %v2302
    %2431 = vmatpush1.msra.mxu0 %v2301
    %2432 = vmatprep.subr.mxu0 %v2306
    %2433 = vmatpush1.msra.mxu0 %v2305
    %2434 = vmatprep.subr.mxu0 %v2310
    %2435 = vmatpush1.msra.mxu0 %v2309
    %2436 = vmatprep.subr.mxu0 %v2314
    %2437 = vmatpush1.msra.mxu0 %v2313
    %2438 = vmatprep.subr.mxu0 %v2318
    %2439 = vmatpush1.msra.mxu0 %v2317
    %2440 = vmatprep.subr.mxu0 %v2322
    %2441 = vmatpush1.msra.mxu0 %v2321
    %2442 = vmatprep.subr.mxu0 %v2326
    %2443 = vmatpush1.msra.mxu0 %v2325
    %2444 = vmatprep.subr.mxu0 %v2330
    %2445 = vmatpush1.msra.mxu0 %v2329
    %2446 = vmatprep.subr.mxu0 %v2334
    %2447 = vmatpush1.msra.mxu0 %v2333
    %2448 = vmatprep.subr.mxu0 %v2338
    %2449 = vmatpush1.msra.mxu0 %v2337
    %2450 = vmatprep.subr.mxu0 0.0
    %2451 = vmatpush1.msra.mxu0 0.0
    %2452 = vmatprep.subr.mxu0 0.0
    %2453 = vmatpush1.msra.mxu0 0.0
    %2454 = vmatprep.subr.mxu0 0.0
    %2455 = vmatpush1.msra.mxu0 0.0
    %2456 = vmatprep.subr.mxu0 0.0
    %2457 = vmatpush1.msra.mxu0 0.0
    %2458 = vmatprep.subr.mxu0 0.0
    %2459 = vmatpush1.msra.mxu0 0.0
    %2460 = vmatprep.subr.mxu0 0.0
    %2461 = vmatpush1.msra.mxu0 0.0
    %2462 = vmatprep.subr.mxu0 0.0
    %2463 = vmatpush1.msra.mxu0 0.0
    %2464 = vmatprep.subr.mxu0 0.0
    %2465 = vmatpush1.msra.mxu0 0.0
    %2466 = vmatprep.subr.mxu0 0.0
    %2467 = vmatpush1.msra.mxu0 0.0
    %2468 = vmatprep.subr.mxu0 0.0
    %2469 = vmatpush1.msra.mxu0 0.0
    %2470 = vmatprep.subr.mxu0 0.0
    %2471 = vmatpush1.msra.mxu0 0.0
    %2472 = vmatprep.subr.mxu0 0.0
    %2473 = vmatpush1.msra.mxu0 0.0
    %2474 = vmatprep.subr.mxu0 0.0
    %2475 = vmatpush1.msra.mxu0 0.0
    %2476 = vmatprep.subr.mxu0 0.0
    %2477 = vmatpush1.msra.mxu0 0.0
    %2478 = vmatprep.subr.mxu0 0.0
    %2479 = vmatpush1.msra.mxu0 0.0
    %2480 = vmatprep.subr.mxu0 0.0
    %2481 = vmatpush1.msra.mxu0 0.0
    %2482 = vmatprep.mubr.f32.mxu0 0.0
    %2483 = vmatmul.mubr.f32.gmra.mrb[0].mxu0 %v2340
    %v2484 = vpop.f32.mrb[0].mxu0
    %v2485 = vadd.f32 0.0, %v2484
    %v2486 = vpop.f32.mrb[0].mxu0
    %v2487 = vadd.f32 0.0, %v2486
    %2488 = vdwg.mxu0
    %v2489 = vadd.f32 %v2343, %v2414
    %v2490 = vadd.f32 %v2344, %v2416
    %v2491 = vadd.f32 %v2345, %v2485
    %v2492 = vadd.f32 %v2346, %v2487
    %v2493 = vxor.u32 %v2489, 2147483648
    %v2494 = vmul.f32 %v2493, 1.442695
    %v2495 = vpow.pop %v2494
    %v2496 = vadd.f32 %v2495, 1.0
    %v2497 = vrcp.pop %v2496
    %v2498 = vmul.f32 1.0, %v2497
    %v2499 = vxor.u32 %v2490, 2147483648
    %v2500 = vmul.f32 %v2499, 1.442695
    %v2501 = vpow.pop %v2500
    %v2502 = vadd.f32 %v2501, 1.0
    %v2503 = vrcp.pop %v2502
    %v2504 = vmul.f32 1.0, %v2503
    %v2505 = vtanh.pop %v2491
    %v2506 = vxor.u32 %v2492, 2147483648
    %v2507 = vmul.f32 %v2506, 1.442695
    %v2508 = vpow.pop %v2507
    %v2509 = vadd.f32 %v2508, 1.0
    %v2510 = vrcp.pop %v2509
    %v2511 = vmul.f32 1.0, %v2510
    %v2512 = vmul.f32 %v2504, %v2342
    %v2513 = vmul.f32 %v2498, %v2505
    %v2514 = vadd.f32 %v2512, %v2513
    %v2515 = vtanh.pop %v2514
    %v2516 = vmul.f32 %v2511, %v2515
    %2517 = vst [vmem:[%s7] sm:$0xff] %v2516
    %v2518 = vld [vmem:[%s668] sm:$0xff]
    %v2519 = vld [vmem:[%s668 + $0x8] sm:$0xff]
    %v2520 = vld [vmem:[%s668 + $0x10] sm:$0xff]
    %v2521 = vld [vmem:[%s668 + $0x18] sm:$0xff]
    %2522 = vmatprep.subr.mxu0 %v2276
    %2523 = vmatpush1.msra.mxu0 %v2275
    %2524 = vmatprep.subr.mxu0 %v2280
    %2525 = vmatpush1.msra.mxu0 %v2279
    %2526 = vmatprep.subr.mxu0 %v2284
    %2527 = vmatpush1.msra.mxu0 %v2283
    %2528 = vmatprep.subr.mxu0 %v2288
    %2529 = vmatpush1.msra.mxu0 %v2287
    %2530 = vmatprep.subr.mxu0 %v2292
    %2531 = vmatpush1.msra.mxu0 %v2291
    %2532 = vmatprep.subr.mxu0 %v2296
    %2533 = vmatpush1.msra.mxu0 %v2295
    %2534 = vmatprep.subr.mxu0 %v2300
    %2535 = vmatpush1.msra.mxu0 %v2299
    %2536 = vmatprep.subr.mxu0 %v2304
    %2537 = vmatpush1.msra.mxu0 %v2303
    %2538 = vmatprep.subr.mxu0 %v2308
    %2539 = vmatpush1.msra.mxu0 %v2307
    %2540 = vmatprep.subr.mxu0 %v2312
    %2541 = vmatpush1.msra.mxu0 %v2311
    %2542 = vmatprep.subr.mxu0 %v2316
    %2543 = vmatpush1.msra.mxu0 %v2315
    %2544 = vmatprep.subr.mxu0 %v2320
    %2545 = vmatpush1.msra.mxu0 %v2319
    %2546 = vmatprep.subr.mxu0 %v2324
    %2547 = vmatpush1.msra.mxu0 %v2323
    %2548 = vmatprep.subr.mxu0 %v2328
    %2549 = vmatpush1.msra.mxu0 %v2327
    %2550 = vmatprep.subr.mxu0 %v2332
    %2551 = vmatpush1.msra.mxu0 %v2331
    %2552 = vmatprep.subr.mxu0 %v2336
    %2553 = vmatpush1.msra.mxu0 %v2335
    %2554 = vmatprep.subr.mxu0 0.0
    %2555 = vmatpush1.msra.mxu0 0.0
    %2556 = vmatprep.subr.mxu0 0.0
    %2557 = vmatpush1.msra.mxu0 0.0
    %2558 = vmatprep.subr.mxu0 0.0
    %2559 = vmatpush1.msra.mxu0 0.0
    %2560 = vmatprep.subr.mxu0 0.0
    %2561 = vmatpush1.msra.mxu0 0.0
    %2562 = vmatprep.subr.mxu0 0.0
    %2563 = vmatpush1.msra.mxu0 0.0
    %2564 = vmatprep.subr.mxu0 0.0
    %2565 = vmatpush1.msra.mxu0 0.0
    %2566 = vmatprep.subr.mxu0 0.0
    %2567 = vmatpush1.msra.mxu0 0.0
    %2568 = vmatprep.subr.mxu0 0.0
    %2569 = vmatpush1.msra.mxu0 0.0
    %2570 = vmatprep.subr.mxu0 0.0
    %2571 = vmatpush1.msra.mxu0 0.0
    %2572 = vmatprep.subr.mxu0 0.0
    %2573 = vmatpush1.msra.mxu0 0.0
    %2574 = vmatprep.subr.mxu0 0.0
    %2575 = vmatpush1.msra.mxu0 0.0
    %2576 = vmatprep.subr.mxu0 0.0
    %2577 = vmatpush1.msra.mxu0 0.0
    %2578 = vmatprep.subr.mxu0 0.0
    %2579 = vmatpush1.msra.mxu0 0.0
    %2580 = vmatprep.subr.mxu0 0.0
    %2581 = vmatpush1.msra.mxu0 0.0
    %2582 = vmatprep.subr.mxu0 0.0
    %2583 = vmatpush1.msra.mxu0 0.0
    %2584 = vmatprep.subr.mxu0 0.0
    %2585 = vmatpush1.msra.mxu0 0.0
    %2586 = vmatprep.mubr.f32.mxu0 0.0
    %2587 = vmatmul.mubr.f32.gmra.mrb[0].mxu0 %v2516
    %v2588 = vpop.f32.mrb[0].mxu0
    %v2589 = vadd.f32 0.0, %v2588
    %v2590 = vpop.f32.mrb[0].mxu0
    %v2591 = vadd.f32 0.0, %v2590
    %2592 = vdwg.mxu0
    %2593 = vmatprep.subr.mxu0 %v2278
    %2594 = vmatpush1.msra.mxu0 %v2277
    %2595 = vmatprep.subr.mxu0 %v2282
    %2596 = vmatpush1.msra.mxu0 %v2281
    %2597 = vmatprep.subr.mxu0 %v2286
    %2598 = vmatpush1.msra.mxu0 %v2285
    %2599 = vmatprep.subr.mxu0 %v2290
    %2600 = vmatpush1.msra.mxu0 %v2289
    %2601 = vmatprep.subr.mxu0 %v2294
    %2602 = vmatpush1.msra.mxu0 %v2293
    %2603 = vmatprep.subr.mxu0 %v2298
    %2604 = vmatpush1.msra.mxu0 %v2297
    %2605 = vmatprep.subr.mxu0 %v2302
    %2606 = vmatpush1.msra.mxu0 %v2301
    %2607 = vmatprep.subr.mxu0 %v2306
    %2608 = vmatpush1.msra.mxu0 %v2305
    %2609 = vmatprep.subr.mxu0 %v2310
    %2610 = vmatpush1.msra.mxu0 %v2309
    %2611 = vmatprep.subr.mxu0 %v2314
    %2612 = vmatpush1.msra.mxu0 %v2313
    %2613 = vmatprep.subr.mxu0 %v2318
    %2614 = vmatpush1.msra.mxu0 %v2317
    %2615 = vmatprep.subr.mxu0 %v2322
    %2616 = vmatpush1.msra.mxu0 %v2321
    %2617 = vmatprep.subr.mxu0 %v2326
    %2618 = vmatpush1.msra.mxu0 %v2325
    %2619 = vmatprep.subr.mxu0 %v2330
    %2620 = vmatpush1.msra.mxu0 %v2329
    %2621 = vmatprep.subr.mxu0 %v2334
    %2622 = vmatpush1.msra.mxu0 %v2333
    %2623 = vmatprep.subr.mxu0 %v2338
    %2624 = vmatpush1.msra.mxu0 %v2337
    %2625 = vmatprep.subr.mxu0 0.0
    %2626 = vmatpush1.msra.mxu0 0.0
    %2627 = vmatprep.subr.mxu0 0.0
    %2628 = vmatpush1.msra.mxu0 0.0
    %2629 = vmatprep.subr.mxu0 0.0
    %2630 = vmatpush1.msra.mxu0 0.0
    %2631 = vmatprep.subr.mxu0 0.0
    %2632 = vmatpush1.msra.mxu0 0.0
    %2633 = vmatprep.subr.mxu0 0.0
    %2634 = vmatpush1.msra.mxu0 0.0
    %2635 = vmatprep.subr.mxu0 0.0
    %2636 = vmatpush1.msra.mxu0 0.0
    %2637 = vmatprep.subr.mxu0 0.0
    %2638 = vmatpush1.msra.mxu0 0.0
    %2639 = vmatprep.subr.mxu0 0.0
    %2640 = vmatpush1.msra.mxu0 0.0
    %2641 = vmatprep.subr.mxu0 0.0
    %2642 = vmatpush1.msra.mxu0 0.0
    %2643 = vmatprep.subr.mxu0 0.0
    %2644 = vmatpush1.msra.mxu0 0.0
    %2645 = vmatprep.subr.mxu0 0.0
    %2646 = vmatpush1.msra.mxu0 0.0
    %2647 = vmatprep.subr.mxu0 0.0
    %2648 = vmatpush1.msra.mxu0 0.0
    %2649 = vmatprep.subr.mxu0 0.0
    %2650 = vmatpush1.msra.mxu0 0.0
    %2651 = vmatprep.subr.mxu0 0.0
    %2652 = vmatpush1.msra.mxu0 0.0
    %2653 = vmatprep.subr.mxu0 0.0
    %2654 = vmatpush1.msra.mxu0 0.0
    %2655 = vmatprep.subr.mxu0 0.0
    %2656 = vmatpush1.msra.mxu0 0.0
    %2657 = vmatprep.mubr.f32.mxu0 0.0
    %2658 = vmatmul.mubr.f32.gmra.mrb[0].mxu0 %v2516
    %v2659 = vpop.f32.mrb[0].mxu0
    %v2660 = vadd.f32 0.0, %v2659
    %v2661 = vpop.f32.mrb[0].mxu0
    %v2662 = vadd.f32 0.0, %v2661
    %2663 = vdwg.mxu0
    %v2664 = vadd.f32 %v2518, %v2589
    %v2665 = vadd.f32 %v2519, %v2591
    %v2666 = vadd.f32 %v2520, %v2660
    %v2667 = vadd.f32 %v2521, %v2662
    %v2668 = vxor.u32 %v2664, 2147483648
    %v2669 = vmul.f32 %v2668, 1.442695
    %v2670 = vpow.pop %v2669
    %v2671 = vadd.f32 %v2670, 1.0
    %v2672 = vrcp.pop %v2671
    %v2673 = vmul.f32 1.0, %v2672
    %v2674 = vxor.u32 %v2665, 2147483648
    %v2675 = vmul.f32 %v2674, 1.442695
    %v2676 = vpow.pop %v2675
    %v2677 = vadd.f32 %v2676, 1.0
    %v2678 = vrcp.pop %v2677
    %v2679 = vmul.f32 1.0, %v2678
    %v2680 = vtanh.pop %v2666
    %v2681 = vxor.u32 %v2667, 2147483648
    %v2682 = vmul.f32 %v2681, 1.442695
    %v2683 = vpow.pop %v2682
    %v2684 = vadd.f32 %v2683, 1.0
    %v2685 = vrcp.pop %v2684
    %v2686 = vmul.f32 1.0, %v2685
    %v2687 = vmul.f32 %v2679, %v2514
    %v2688 = vmul.f32 %v2673, %v2680
    %v2689 = vadd.f32 %v2687, %v2688
    %v2690 = vtanh.pop %v2689
    %v2691 = vmul.f32 %v2686, %v2690
    %2692 = vst [vmem:[%s843] sm:$0xff] %v2691
    %v2693 = vld [vmem:[%s847] sm:$0xff]
    %v2694 = vld [vmem:[%s847 + $0x8] sm:$0xff]
    %v2695 = vld [vmem:[%s847 + $0x10] sm:$0xff]
    %v2696 = vld [vmem:[%s847 + $0x18] sm:$0xff]
    %2697 = vmatprep.subr.mxu0 %v2276
    %2698 = vmatpush1.msra.mxu0 %v2275
    %2699 = vmatprep.subr.mxu0 %v2280
    %2700 = vmatpush1.msra.mxu0 %v2279
    %2701 = vmatprep.subr.mxu0 %v2284
    %2702 = vmatpush1.msra.mxu0 %v2283
    %2703 = vmatprep.subr.mxu0 %v2288
    %2704 = vmatpush1.msra.mxu0 %v2287
    %2705 = vmatprep.subr.mxu0 %v2292
    %2706 = vmatpush1.msra.mxu0 %v2291
    %2707 = vmatprep.subr.mxu0 %v2296
    %2708 = vmatpush1.msra.mxu0 %v2295
    %2709 = vmatprep.subr.mxu0 %v2300
    %2710 = vmatpush1.msra.mxu0 %v2299
    %2711 = vmatprep.subr.mxu0 %v2304
    %2712 = vmatpush1.msra.mxu0 %v2303
    %2713 = vmatprep.subr.mxu0 %v2308
    %2714 = vmatpush1.msra.mxu0 %v2307
    %2715 = vmatprep.subr.mxu0 %v2312
    %2716 = vmatpush1.msra.mxu0 %v2311
    %2717 = vmatprep.subr.mxu0 %v2316
    %2718 = vmatpush1.msra.mxu0 %v2315
    %2719 = vmatprep.subr.mxu0 %v2320
    %2720 = vmatpush1.msra.mxu0 %v2319
    %2721 = vmatprep.subr.mxu0 %v2324
    %2722 = vmatpush1.msra.mxu0 %v2323
    %2723 = vmatprep.subr.mxu0 %v2328
    %2724 = vmatpush1.msra.mxu0 %v2327
    %2725 = vmatprep.subr.mxu0 %v2332
    %2726 = vmatpush1.msra.mxu0 %v2331
    %2727 = vmatprep.subr.mxu0 %v2336
    %2728 = vmatpush1.msra.mxu0 %v2335
    %2729 = vmatprep.subr.mxu0 0.0
    %2730 = vmatpush1.msra.mxu0 0.0
    %2731 = vmatprep.subr.mxu0 0.0
    %2732 = vmatpush1.msra.mxu0 0.0
    %2733 = vmatprep.subr.mxu0 0.0
    %2734 = vmatpush1.msra.mxu0 0.0
    %2735 = vmatprep.subr.mxu0 0.0
    %2736 = vmatpush1.msra.mxu0 0.0
    %2737 = vmatprep.subr.mxu0 0.0
    %2738 = vmatpush1.msra.mxu0 0.0
    %2739 = vmatprep.subr.mxu0 0.0
    %2740 = vmatpush1.msra.mxu0 0.0
    %2741 = vmatprep.subr.mxu0 0.0
    %2742 = vmatpush1.msra.mxu0 0.0
    %2743 = vmatprep.subr.mxu0 0.0
    %2744 = vmatpush1.msra.mxu0 0.0
    %2745 = vmatprep.subr.mxu0 0.0
    %2746 = vmatpush1.msra.mxu0 0.0
    %2747 = vmatprep.subr.mxu0 0.0
    %2748 = vmatpush1.msra.mxu0 0.0
    %2749 = vmatprep.subr.mxu0 0.0
    %2750 = vmatpush1.msra.mxu0 0.0
    %2751 = vmatprep.subr.mxu0 0.0
    %2752 = vmatpush1.msra.mxu0 0.0
    %2753 = vmatprep.subr.mxu0 0.0
    %2754 = vmatpush1.msra.mxu0 0.0
    %2755 = vmatprep.subr.mxu0 0.0
    %2756 = vmatpush1.msra.mxu0 0.0
    %2757 = vmatprep.subr.mxu0 0.0
    %2758 = vmatpush1.msra.mxu0 0.0
    %2759 = vmatprep.subr.mxu0 0.0
    %2760 = vmatpush1.msra.mxu0 0.0
    %2761 = vmatprep.mubr.f32.mxu0 0.0
    %2762 = vmatmul.mubr.f32.gmra.mrb[0].mxu0 %v2691
    %v2763 = vpop.f32.mrb[0].mxu0
    %v2764 = vadd.f32 0.0, %v2763
    %v2765 = vpop.f32.mrb[0].mxu0
    %v2766 = vadd.f32 0.0, %v2765
    %2767 = vdwg.mxu0
    %2768 = vmatprep.subr.mxu0 %v2278
    %2769 = vmatpush1.msra.mxu0 %v2277
    %2770 = vmatprep.subr.mxu0 %v2282
    %2771 = vmatpush1.msra.mxu0 %v2281
    %2772 = vmatprep.subr.mxu0 %v2286
    %2773 = vmatpush1.msra.mxu0 %v2285
    %2774 = vmatprep.subr.mxu0 %v2290
    %2775 = vmatpush1.msra.mxu0 %v2289
    %2776 = vmatprep.subr.mxu0 %v2294
    %2777 = vmatpush1.msra.mxu0 %v2293
    %2778 = vmatprep.subr.mxu0 %v2298
    %2779 = vmatpush1.msra.mxu0 %v2297
    %2780 = vmatprep.subr.mxu0 %v2302
    %2781 = vmatpush1.msra.mxu0 %v2301
    %2782 = vmatprep.subr.mxu0 %v2306
    %2783 = vmatpush1.msra.mxu0 %v2305
    %2784 = vmatprep.subr.mxu0 %v2310
    %2785 = vmatpush1.msra.mxu0 %v2309
    %2786 = vmatprep.subr.mxu0 %v2314
    %2787 = vmatpush1.msra.mxu0 %v2313
    %2788 = vmatprep.subr.mxu0 %v2318
    %2789 = vmatpush1.msra.mxu0 %v2317
    %2790 = vmatprep.subr.mxu0 %v2322
    %2791 = vmatpush1.msra.mxu0 %v2321
    %2792 = vmatprep.subr.mxu0 %v2326
    %2793 = vmatpush1.msra.mxu0 %v2325
    %2794 = vmatprep.subr.mxu0 %v2330
    %2795 = vmatpush1.msra.mxu0 %v2329
    %2796 = vmatprep.subr.mxu0 %v2334
    %2797 = vmatpush1.msra.mxu0 %v2333
    %2798 = vmatprep.subr.mxu0 %v2338
    %2799 = vmatpush1.msra.mxu0 %v2337
    %2800 = vmatprep.subr.mxu0 0.0
    %2801 = vmatpush1.msra.mxu0 0.0
    %2802 = vmatprep.subr.mxu0 0.0
    %2803 = vmatpush1.msra.mxu0 0.0
    %2804 = vmatprep.subr.mxu0 0.0
    %2805 = vmatpush1.msra.mxu0 0.0
    %2806 = vmatprep.subr.mxu0 0.0
    %2807 = vmatpush1.msra.mxu0 0.0
    %2808 = vmatprep.subr.mxu0 0.0
    %2809 = vmatpush1.msra.mxu0 0.0
    %2810 = vmatprep.subr.mxu0 0.0
    %2811 = vmatpush1.msra.mxu0 0.0
    %2812 = vmatprep.subr.mxu0 0.0
    %2813 = vmatpush1.msra.mxu0 0.0
    %2814 = vmatprep.subr.mxu0 0.0
    %2815 = vmatpush1.msra.mxu0 0.0
    %2816 = vmatprep.subr.mxu0 0.0
    %2817 = vmatpush1.msra.mxu0 0.0
    %2818 = vmatprep.subr.mxu0 0.0
    %2819 = vmatpush1.msra.mxu0 0.0
    %2820 = vmatprep.subr.mxu0 0.0
    %2821 = vmatpush1.msra.mxu0 0.0
    %2822 = vmatprep.subr.mxu0 0.0
    %2823 = vmatpush1.msra.mxu0 0.0
    %2824 = vmatprep.subr.mxu0 0.0
    %2825 = vmatpush1.msra.mxu0 0.0
    %2826 = vmatprep.subr.mxu0 0.0
    %2827 = vmatpush1.msra.mxu0 0.0
    %2828 = vmatprep.subr.mxu0 0.0
    %2829 = vmatpush1.msra.mxu0 0.0
    %2830 = vmatprep.subr.mxu0 0.0
    %2831 = vmatpush1.msra.mxu0 0.0
    %2832 = vmatprep.mubr.f32.mxu0 0.0
    %2833 = vmatmul.mubr.f32.gmra.mrb[0].mxu0 %v2691
    %v2834 = vpop.f32.mrb[0].mxu0
    %v2835 = vadd.f32 0.0, %v2834
    %v2836 = vpop.f32.mrb[0].mxu0
    %v2837 = vadd.f32 0.0, %v2836
    %2838 = vdwg.mxu0
    %v2839 = vadd.f32 %v2693, %v2764
    %v2840 = vadd.f32 %v2694, %v2766
    %v2841 = vadd.f32 %v2695, %v2835
    %v2842 = vadd.f32 %v2696, %v2837
    %v2843 = vxor.u32 %v2839, 2147483648
    %v2844 = vmul.f32 %v2843, 1.442695
    %v2845 = vpow.pop %v2844
    %v2846 = vadd.f32 %v2845, 1.0
    %v2847 = vrcp.pop %v2846
    %v2848 = vmul.f32 1.0, %v2847
    %v2849 = vxor.u32 %v2840, 2147483648
    %v2850 = vmul.f32 %v2849, 1.442695
    %v2851 = vpow.pop %v2850
    %v2852 = vadd.f32 %v2851, 1.0
    %v2853 = vrcp.pop %v2852
    %v2854 = vmul.f32 1.0, %v2853
    %v2855 = vtanh.pop %v2841
    %v2856 = vxor.u32 %v2842, 2147483648
    %v2857 = vmul.f32 %v2856, 1.442695
    %v2858 = vpow.pop %v2857
    %v2859 = vadd.f32 %v2858, 1.0
    %v2860 = vrcp.pop %v2859
    %v2861 = vmul.f32 1.0, %v2860
    %v2862 = vmul.f32 %v2854, %v2689
    %v2863 = vmul.f32 %v2848, %v2855
    %v2864 = vadd.f32 %v2862, %v2863
    %v2865 = vtanh.pop %v2864
    %v2866 = vmul.f32 %v2861, %v2865
    %2867 = vst [vmem:[%s1022] sm:$0xff] %v2866
    %v2868 = vld [vmem:[%s1026] sm:$0xff]
    %v2869 = vld [vmem:[%s1026 + $0x8] sm:$0xff]
    %v2870 = vld [vmem:[%s1026 + $0x10] sm:$0xff]
    %v2871 = vld [vmem:[%s1026 + $0x18] sm:$0xff]
    %2872 = vmatprep.subr.mxu0 %v2276
    %2873 = vmatpush1.msra.mxu0 %v2275
    %2874 = vmatprep.subr.mxu0 %v2280
    %2875 = vmatpush1.msra.mxu0 %v2279
    %2876 = vmatprep.subr.mxu0 %v2284
    %2877 = vmatpush1.msra.mxu0 %v2283
    %2878 = vmatprep.subr.mxu0 %v2288
    %2879 = vmatpush1.msra.mxu0 %v2287
    %2880 = vmatprep.subr.mxu0 %v2292
    %2881 = vmatpush1.msra.mxu0 %v2291
    %2882 = vmatprep.subr.mxu0 %v2296
    %2883 = vmatpush1.msra.mxu0 %v2295
    %2884 = vmatprep.subr.mxu0 %v2300
    %2885 = vmatpush1.msra.mxu0 %v2299
    %2886 = vmatprep.subr.mxu0 %v2304
    %2887 = vmatpush1.msra.mxu0 %v2303
    %2888 = vmatprep.subr.mxu0 %v2308
    %2889 = vmatpush1.msra.mxu0 %v2307
    %2890 = vmatprep.subr.mxu0 %v2312
    %2891 = vmatpush1.msra.mxu0 %v2311
    %2892 = vmatprep.subr.mxu0 %v2316
    %2893 = vmatpush1.msra.mxu0 %v2315
    %2894 = vmatprep.subr.mxu0 %v2320
    %2895 = vmatpush1.msra.mxu0 %v2319
    %2896 = vmatprep.subr.mxu0 %v2324
    %2897 = vmatpush1.msra.mxu0 %v2323
    %2898 = vmatprep.subr.mxu0 %v2328
    %2899 = vmatpush1.msra.mxu0 %v2327
    %2900 = vmatprep.subr.mxu0 %v2332
    %2901 = vmatpush1.msra.mxu0 %v2331
    %2902 = vmatprep.subr.mxu0 %v2336
    %2903 = vmatpush1.msra.mxu0 %v2335
    %2904 = vmatprep.subr.mxu0 0.0
    %2905 = vmatpush1.msra.mxu0 0.0
    %2906 = vmatprep.subr.mxu0 0.0
    %2907 = vmatpush1.msra.mxu0 0.0
    %2908 = vmatprep.subr.mxu0 0.0
    %2909 = vmatpush1.msra.mxu0 0.0
    %2910 = vmatprep.subr.mxu0 0.0
    %2911 = vmatpush1.msra.mxu0 0.0
    %2912 = vmatprep.subr.mxu0 0.0
    %2913 = vmatpush1.msra.mxu0 0.0
    %2914 = vmatprep.subr.mxu0 0.0
    %2915 = vmatpush1.msra.mxu0 0.0
    %2916 = vmatprep.subr.mxu0 0.0
    %2917 = vmatpush1.msra.mxu0 0.0
    %2918 = vmatprep.subr.mxu0 0.0
    %2919 = vmatpush1.msra.mxu0 0.0
    %2920 = vmatprep.subr.mxu0 0.0
    %2921 = vmatpush1.msra.mxu0 0.0
    %2922 = vmatprep.subr.mxu0 0.0
    %2923 = vmatpush1.msra.mxu0 0.0
    %2924 = vmatprep.subr.mxu0 0.0
    %2925 = vmatpush1.msra.mxu0 0.0
    %2926 = vmatprep.subr.mxu0 0.0
    %2927 = vmatpush1.msra.mxu0 0.0
    %2928 = vmatprep.subr.mxu0 0.0
    %2929 = vmatpush1.msra.mxu0 0.0
    %2930 = vmatprep.subr.mxu0 0.0
    %2931 = vmatpush1.msra.mxu0 0.0
    %2932 = vmatprep.subr.mxu0 0.0
    %2933 = vmatpush1.msra.mxu0 0.0
    %2934 = vmatprep.subr.mxu0 0.0
    %2935 = vmatpush1.msra.mxu0 0.0
    %2936 = vmatprep.mubr.f32.mxu0 0.0
    %2937 = vmatmul.mubr.f32.gmra.mrb[0].mxu0 %v2866
    %v2938 = vpop.f32.mrb[0].mxu0
    %v2939 = vadd.f32 0.0, %v2938
    %v2940 = vpop.f32.mrb[0].mxu0
    %v2941 = vadd.f32 0.0, %v2940
    %2942 = vdwg.mxu0
    %2943 = vmatprep.subr.mxu0 %v2278
    %2944 = vmatpush1.msra.mxu0 %v2277
    %2945 = vmatprep.subr.mxu0 %v2282
    %2946 = vmatpush1.msra.mxu0 %v2281
    %2947 = vmatprep.subr.mxu0 %v2286
    %2948 = vmatpush1.msra.mxu0 %v2285
    %2949 = vmatprep.subr.mxu0 %v2290
    %2950 = vmatpush1.msra.mxu0 %v2289
    %2951 = vmatprep.subr.mxu0 %v2294
    %2952 = vmatpush1.msra.mxu0 %v2293
    %2953 = vmatprep.subr.mxu0 %v2298
    %2954 = vmatpush1.msra.mxu0 %v2297
    %2955 = vmatprep.subr.mxu0 %v2302
    %2956 = vmatpush1.msra.mxu0 %v2301
    %2957 = vmatprep.subr.mxu0 %v2306
    %2958 = vmatpush1.msra.mxu0 %v2305
    %2959 = vmatprep.subr.mxu0 %v2310
    %2960 = vmatpush1.msra.mxu0 %v2309
    %2961 = vmatprep.subr.mxu0 %v2314
    %2962 = vmatpush1.msra.mxu0 %v2313
    %2963 = vmatprep.subr.mxu0 %v2318
    %2964 = vmatpush1.msra.mxu0 %v2317
    %2965 = vmatprep.subr.mxu0 %v2322
    %2966 = vmatpush1.msra.mxu0 %v2321
    %2967 = vmatprep.subr.mxu0 %v2326
    %2968 = vmatpush1.msra.mxu0 %v2325
    %2969 = vmatprep.subr.mxu0 %v2330
    %2970 = vmatpush1.msra.mxu0 %v2329
    %2971 = vmatprep.subr.mxu0 %v2334
    %2972 = vmatpush1.msra.mxu0 %v2333
    %2973 = vmatprep.subr.mxu0 %v2338
    %2974 = vmatpush1.msra.mxu0 %v2337
    %2975 = vmatprep.subr.mxu0 0.0
    %2976 = vmatpush1.msra.mxu0 0.0
    %2977 = vmatprep.subr.mxu0 0.0
    %2978 = vmatpush1.msra.mxu0 0.0
    %2979 = vmatprep.subr.mxu0 0.0
    %2980 = vmatpush1.msra.mxu0 0.0
    %2981 = vmatprep.subr.mxu0 0.0
    %2982 = vmatpush1.msra.mxu0 0.0
    %2983 = vmatprep.subr.mxu0 0.0
    %2984 = vmatpush1.msra.mxu0 0.0
    %2985 = vmatprep.subr.mxu0 0.0
    %2986 = vmatpush1.msra.mxu0 0.0
    %2987 = vmatprep.subr.mxu0 0.0
    %2988 = vmatpush1.msra.mxu0 0.0
    %2989 = vmatprep.subr.mxu0 0.0
    %2990 = vmatpush1.msra.mxu0 0.0
    %2991 = vmatprep.subr.mxu0 0.0
    %2992 = vmatpush1.msra.mxu0 0.0
    %2993 = vmatprep.subr.mxu0 0.0
    %2994 = vmatpush1.msra.mxu0 0.0
    %2995 = vmatprep.subr.mxu0 0.0
    %2996 = vmatpush1.msra.mxu0 0.0
    %2997 = vmatprep.subr.mxu0 0.0
    %2998 = vmatpush1.msra.mxu0 0.0
    %2999 = vmatprep.subr.mxu0 0.0
    %3000 = vmatpush1.msra.mxu0 0.0
    %3001 = vmatprep.subr.mxu0 0.0
    %3002 = vmatpush1.msra.mxu0 0.0
    %3003 = vmatprep.subr.mxu0 0.0
    %3004 = vmatpush1.msra.mxu0 0.0
    %3005 = vmatprep.subr.mxu0 0.0
    %3006 = vmatpush1.msra.mxu0 0.0
    %3007 = vmatprep.mubr.f32.mxu0 0.0
    %3008 = vmatmul.mubr.f32.gmra.mrb[0].mxu0 %v2866
    %v3009 = vpop.f32.mrb[0].mxu0
    %v3010 = vadd.f32 0.0, %v3009
    %v3011 = vpop.f32.mrb[0].mxu0
    %v3012 = vadd.f32 0.0, %v3011
    %3013 = vdwg.mxu0
    %v3014 = vadd.f32 %v2868, %v2939
    %v3015 = vadd.f32 %v2869, %v2941
    %v3016 = vadd.f32 %v2870, %v3010
    %v3017 = vadd.f32 %v2871, %v3012
    %v3018 = vxor.u32 %v3014, 2147483648
    %v3019 = vmul.f32 %v3018, 1.442695
    %v3020 = vpow.pop %v3019
    %v3021 = vadd.f32 %v3020, 1.0
    %v3022 = vrcp.pop %v3021
    %v3023 = vmul.f32 1.0, %v3022
    %v3024 = vxor.u32 %v3015, 2147483648
    %v3025 = vmul.f32 %v3024, 1.442695
    %v3026 = vpow.pop %v3025
    %v3027 = vadd.f32 %v3026, 1.0
    %v3028 = vrcp.pop %v3027
    %v3029 = vmul.f32 1.0, %v3028
    %v3030 = vtanh.pop %v3016
    %v3031 = vxor.u32 %v3017, 2147483648
    %v3032 = vmul.f32 %v3031, 1.442695
    %v3033 = vpow.pop %v3032
    %v3034 = vadd.f32 %v3033, 1.0
    %v3035 = vrcp.pop %v3034
    %v3036 = vmul.f32 1.0, %v3035
    %v3037 = vmul.f32 %v3029, %v2864
    %v3038 = vmul.f32 %v3023, %v3030
    %v3039 = vadd.f32 %v3037, %v3038
    %v3040 = vtanh.pop %v3039
    %v3041 = vmul.f32 %v3036, %v3040
    %3042 = vst [vmem:[%s1201] sm:$0xff] %v3041
    %v3043 = vld [vmem:[%s1205] sm:$0xff]
    %v3044 = vld [vmem:[%s1205 + $0x8] sm:$0xff]
    %v3045 = vld [vmem:[%s1205 + $0x10] sm:$0xff]
    %v3046 = vld [vmem:[%s1205 + $0x18] sm:$0xff]
    %3047 = vmatprep.subr.mxu0 %v2276
    %3048 = vmatpush1.msra.mxu0 %v2275
    %3049 = vmatprep.subr.mxu0 %v2280
    %3050 = vmatpush1.msra.mxu0 %v2279
    %3051 = vmatprep.subr.mxu0 %v2284
    %3052 = vmatpush1.msra.mxu0 %v2283
    %3053 = vmatprep.subr.mxu0 %v2288
    %3054 = vmatpush1.msra.mxu0 %v2287
    %3055 = vmatprep.subr.mxu0 %v2292
    %3056 = vmatpush1.msra.mxu0 %v2291
    %3057 = vmatprep.subr.mxu0 %v2296
    %3058 = vmatpush1.msra.mxu0 %v2295
    %3059 = vmatprep.subr.mxu0 %v2300
    %3060 = vmatpush1.msra.mxu0 %v2299
    %3061 = vmatprep.subr.mxu0 %v2304
    %3062 = vmatpush1.msra.mxu0 %v2303
    %3063 = vmatprep.subr.mxu0 %v2308
    %3064 = vmatpush1.msra.mxu0 %v2307
    %3065 = vmatprep.subr.mxu0 %v2312
    %3066 = vmatpush1.msra.mxu0 %v2311
    %3067 = vmatprep.subr.mxu0 %v2316
    %3068 = vmatpush1.msra.mxu0 %v2315
    %3069 = vmatprep.subr.mxu0 %v2320
    %3070 = vmatpush1.msra.mxu0 %v2319
    %3071 = vmatprep.subr.mxu0 %v2324
    %3072 = vmatpush1.msra.mxu0 %v2323
    %3073 = vmatprep.subr.mxu0 %v2328
    %3074 = vmatpush1.msra.mxu0 %v2327
    %3075 = vmatprep.subr.mxu0 %v2332
    %3076 = vmatpush1.msra.mxu0 %v2331
    %3077 = vmatprep.subr.mxu0 %v2336
    %3078 = vmatpush1.msra.mxu0 %v2335
    %3079 = vmatprep.subr.mxu0 0.0
    %3080 = vmatpush1.msra.mxu0 0.0
    %3081 = vmatprep.subr.mxu0 0.0
    %3082 = vmatpush1.msra.mxu0 0.0
    %3083 = vmatprep.subr.mxu0 0.0
    %3084 = vmatpush1.msra.mxu0 0.0
    %3085 = vmatprep.subr.mxu0 0.0
    %3086 = vmatpush1.msra.mxu0 0.0
    %3087 = vmatprep.subr.mxu0 0.0
    %3088 = vmatpush1.msra.mxu0 0.0
    %3089 = vmatprep.subr.mxu0 0.0
    %3090 = vmatpush1.msra.mxu0 0.0
    %3091 = vmatprep.subr.mxu0 0.0
    %3092 = vmatpush1.msra.mxu0 0.0
    %3093 = vmatprep.subr.mxu0 0.0
    %3094 = vmatpush1.msra.mxu0 0.0
    %3095 = vmatprep.subr.mxu0 0.0
    %3096 = vmatpush1.msra.mxu0 0.0
    %3097 = vmatprep.subr.mxu0 0.0
    %3098 = vmatpush1.msra.mxu0 0.0
    %3099 = vmatprep.subr.mxu0 0.0
    %3100 = vmatpush1.msra.mxu0 0.0
    %3101 = vmatprep.subr.mxu0 0.0
    %3102 = vmatpush1.msra.mxu0 0.0
    %3103 = vmatprep.subr.mxu0 0.0
    %3104 = vmatpush1.msra.mxu0 0.0
    %3105 = vmatprep.subr.mxu0 0.0
    %3106 = vmatpush1.msra.mxu0 0.0
    %3107 = vmatprep.subr.mxu0 0.0
    %3108 = vmatpush1.msra.mxu0 0.0
    %3109 = vmatprep.subr.mxu0 0.0
    %3110 = vmatpush1.msra.mxu0 0.0
    %3111 = vmatprep.mubr.f32.mxu0 0.0
    %3112 = vmatmul.mubr.f32.gmra.mrb[0].mxu0 %v3041
    %v3113 = vpop.f32.mrb[0].mxu0
    %v3114 = vadd.f32 0.0, %v3113
    %v3115 = vpop.f32.mrb[0].mxu0
    %v3116 = vadd.f32 0.0, %v3115
    %3117 = vdwg.mxu0
    %3118 = vmatprep.subr.mxu0 %v2278
    %3119 = vmatpush1.msra.mxu0 %v2277
    %3120 = vmatprep.subr.mxu0 %v2282
    %3121 = vmatpush1.msra.mxu0 %v2281
    %3122 = vmatprep.subr.mxu0 %v2286
    %3123 = vmatpush1.msra.mxu0 %v2285
    %3124 = vmatprep.subr.mxu0 %v2290
    %3125 = vmatpush1.msra.mxu0 %v2289
    %3126 = vmatprep.subr.mxu0 %v2294
    %3127 = vmatpush1.msra.mxu0 %v2293
    %3128 = vmatprep.subr.mxu0 %v2298
    %3129 = vmatpush1.msra.mxu0 %v2297
    %3130 = vmatprep.subr.mxu0 %v2302
    %3131 = vmatpush1.msra.mxu0 %v2301
    %3132 = vmatprep.subr.mxu0 %v2306
    %3133 = vmatpush1.msra.mxu0 %v2305
    %3134 = vmatprep.subr.mxu0 %v2310
    %3135 = vmatpush1.msra.mxu0 %v2309
    %3136 = vmatprep.subr.mxu0 %v2314
    %3137 = vmatpush1.msra.mxu0 %v2313
    %3138 = vmatprep.subr.mxu0 %v2318
    %3139 = vmatpush1.msra.mxu0 %v2317
    %3140 = vmatprep.subr.mxu0 %v2322
    %3141 = vmatpush1.msra.mxu0 %v2321
    %3142 = vmatprep.subr.mxu0 %v2326
    %3143 = vmatpush1.msra.mxu0 %v2325
    %3144 = vmatprep.subr.mxu0 %v2330
    %3145 = vmatpush1.msra.mxu0 %v2329
    %3146 = vmatprep.subr.mxu0 %v2334
    %3147 = vmatpush1.msra.mxu0 %v2333
    %3148 = vmatprep.subr.mxu0 %v2338
    %3149 = vmatpush1.msra.mxu0 %v2337
    %3150 = vmatprep.subr.mxu0 0.0
    %3151 = vmatpush1.msra.mxu0 0.0
    %3152 = vmatprep.subr.mxu0 0.0
    %3153 = vmatpush1.msra.mxu0 0.0
    %3154 = vmatprep.subr.mxu0 0.0
    %3155 = vmatpush1.msra.mxu0 0.0
    %3156 = vmatprep.subr.mxu0 0.0
    %3157 = vmatpush1.msra.mxu0 0.0
    %3158 = vmatprep.subr.mxu0 0.0
    %3159 = vmatpush1.msra.mxu0 0.0
    %3160 = vmatprep.subr.mxu0 0.0
    %3161 = vmatpush1.msra.mxu0 0.0
    %3162 = vmatprep.subr.mxu0 0.0
    %3163 = vmatpush1.msra.mxu0 0.0
    %3164 = vmatprep.subr.mxu0 0.0
    %3165 = vmatpush1.msra.mxu0 0.0
    %3166 = vmatprep.subr.mxu0 0.0
    %3167 = vmatpush1.msra.mxu0 0.0
    %3168 = vmatprep.subr.mxu0 0.0
    %3169 = vmatpush1.msra.mxu0 0.0
    %3170 = vmatprep.subr.mxu0 0.0
    %3171 = vmatpush1.msra.mxu0 0.0
    %3172 = vmatprep.subr.mxu0 0.0
    %3173 = vmatpush1.msra.mxu0 0.0
    %3174 = vmatprep.subr.mxu0 0.0
    %3175 = vmatpush1.msra.mxu0 0.0
    %3176 = vmatprep.subr.mxu0 0.0
    %3177 = vmatpush1.msra.mxu0 0.0
    %3178 = vmatprep.subr.mxu0 0.0
    %3179 = vmatpush1.msra.mxu0 0.0
    %3180 = vmatprep.subr.mxu0 0.0
    %3181 = vmatpush1.msra.mxu0 0.0
    %3182 = vmatprep.mubr.f32.mxu0 0.0
    %3183 = vmatmul.mubr.f32.gmra.mrb[0].mxu0 %v3041
    %v3184 = vpop.f32.mrb[0].mxu0
    %v3185 = vadd.f32 0.0, %v3184
    %v3186 = vpop.f32.mrb[0].mxu0
    %v3187 = vadd.f32 0.0, %v3186
    %3188 = vdwg.mxu0
    %v3189 = vadd.f32 %v3043, %v3114
    %v3190 = vadd.f32 %v3044, %v3116
    %v3191 = vadd.f32 %v3045, %v3185
    %v3192 = vadd.f32 %v3046, %v3187
    %v3193 = vxor.u32 %v3189, 2147483648
    %v3194 = vmul.f32 %v3193, 1.442695
    %v3195 = vpow.pop %v3194
    %v3196 = vadd.f32 %v3195, 1.0
    %v3197 = vrcp.pop %v3196
    %v3198 = vmul.f32 1.0, %v3197
    %v3199 = vxor.u32 %v3190, 2147483648
    %v3200 = vmul.f32 %v3199, 1.442695
    %v3201 = vpow.pop %v3200
    %v3202 = vadd.f32 %v3201, 1.0
    %v3203 = vrcp.pop %v3202
    %v3204 = vmul.f32 1.0, %v3203
    %v3205 = vtanh.pop %v3191
    %v3206 = vxor.u32 %v3192, 2147483648
    %v3207 = vmul.f32 %v3206, 1.442695
    %v3208 = vpow.pop %v3207
    %v3209 = vadd.f32 %v3208, 1.0
    %v3210 = vrcp.pop %v3209
    %v3211 = vmul.f32 1.0, %v3210
    %v3212 = vmul.f32 %v3204, %v3039
    %v3213 = vmul.f32 %v3198, %v3205
    %v3214 = vadd.f32 %v3212, %v3213
    %v3215 = vtanh.pop %v3214
    %v3216 = vmul.f32 %v3211, %v3215
    %3217 = vst [vmem:[%s1380] sm:$0xff] %v3216
    %v3218 = vld [vmem:[%s1384] sm:$0xff]
    %v3219 = vld [vmem:[%s1384 + $0x8] sm:$0xff]
    %v3220 = vld [vmem:[%s1384 + $0x10] sm:$0xff]
    %v3221 = vld [vmem:[%s1384 + $0x18] sm:$0xff]
    %3222 = vmatprep.subr.mxu0 %v2276
    %3223 = vmatpush1.msra.mxu0 %v2275
    %3224 = vmatprep.subr.mxu0 %v2280
    %3225 = vmatpush1.msra.mxu0 %v2279
    %3226 = vmatprep.subr.mxu0 %v2284
    %3227 = vmatpush1.msra.mxu0 %v2283
    %3228 = vmatprep.subr.mxu0 %v2288
    %3229 = vmatpush1.msra.mxu0 %v2287
    %3230 = vmatprep.subr.mxu0 %v2292
    %3231 = vmatpush1.msra.mxu0 %v2291
    %3232 = vmatprep.subr.mxu0 %v2296
    %3233 = vmatpush1.msra.mxu0 %v2295
    %3234 = vmatprep.subr.mxu0 %v2300
    %3235 = vmatpush1.msra.mxu0 %v2299
    %3236 = vmatprep.subr.mxu0 %v2304
    %3237 = vmatpush1.msra.mxu0 %v2303
    %3238 = vmatprep.subr.mxu0 %v2308
    %3239 = vmatpush1.msra.mxu0 %v2307
    %3240 = vmatprep.subr.mxu0 %v2312
    %3241 = vmatpush1.msra.mxu0 %v2311
    %3242 = vmatprep.subr.mxu0 %v2316
    %3243 = vmatpush1.msra.mxu0 %v2315
    %3244 = vmatprep.subr.mxu0 %v2320
    %3245 = vmatpush1.msra.mxu0 %v2319
    %3246 = vmatprep.subr.mxu0 %v2324
    %3247 = vmatpush1.msra.mxu0 %v2323
    %3248 = vmatprep.subr.mxu0 %v2328
    %3249 = vmatpush1.msra.mxu0 %v2327
    %3250 = vmatprep.subr.mxu0 %v2332
    %3251 = vmatpush1.msra.mxu0 %v2331
    %3252 = vmatprep.subr.mxu0 %v2336
    %3253 = vmatpush1.msra.mxu0 %v2335
    %3254 = vmatprep.subr.mxu0 0.0
    %3255 = vmatpush1.msra.mxu0 0.0
    %3256 = vmatprep.subr.mxu0 0.0
    %3257 = vmatpush1.msra.mxu0 0.0
    %3258 = vmatprep.subr.mxu0 0.0
    %3259 = vmatpush1.msra.mxu0 0.0
    %3260 = vmatprep.subr.mxu0 0.0
    %3261 = vmatpush1.msra.mxu0 0.0
    %3262 = vmatprep.subr.mxu0 0.0
    %3263 = vmatpush1.msra.mxu0 0.0
    %3264 = vmatprep.subr.mxu0 0.0
    %3265 = vmatpush1.msra.mxu0 0.0
    %3266 = vmatprep.subr.mxu0 0.0
    %3267 = vmatpush1.msra.mxu0 0.0
    %3268 = vmatprep.subr.mxu0 0.0
    %3269 = vmatpush1.msra.mxu0 0.0
    %3270 = vmatprep.subr.mxu0 0.0
    %3271 = vmatpush1.msra.mxu0 0.0
    %3272 = vmatprep.subr.mxu0 0.0
    %3273 = vmatpush1.msra.mxu0 0.0
    %3274 = vmatprep.subr.mxu0 0.0
    %3275 = vmatpush1.msra.mxu0 0.0
    %3276 = vmatprep.subr.mxu0 0.0
    %3277 = vmatpush1.msra.mxu0 0.0
    %3278 = vmatprep.subr.mxu0 0.0
    %3279 = vmatpush1.msra.mxu0 0.0
    %3280 = vmatprep.subr.mxu0 0.0
    %3281 = vmatpush1.msra.mxu0 0.0
    %3282 = vmatprep.subr.mxu0 0.0
    %3283 = vmatpush1.msra.mxu0 0.0
    %3284 = vmatprep.subr.mxu0 0.0
    %3285 = vmatpush1.msra.mxu0 0.0
    %3286 = vmatprep.mubr.f32.mxu0 0.0
    %3287 = vmatmul.mubr.f32.gmra.mrb[0].mxu0 %v3216
    %v3288 = vpop.f32.mrb[0].mxu0
    %v3289 = vadd.f32 0.0, %v3288
    %v3290 = vpop.f32.mrb[0].mxu0
    %v3291 = vadd.f32 0.0, %v3290
    %3292 = vdwg.mxu0
    %3293 = vmatprep.subr.mxu0 %v2278
    %3294 = vmatpush1.msra.mxu0 %v2277
    %3295 = vmatprep.subr.mxu0 %v2282
    %3296 = vmatpush1.msra.mxu0 %v2281
    %3297 = vmatprep.subr.mxu0 %v2286
    %3298 = vmatpush1.msra.mxu0 %v2285
    %3299 = vmatprep.subr.mxu0 %v2290
    %3300 = vmatpush1.msra.mxu0 %v2289
    %3301 = vmatprep.subr.mxu0 %v2294
    %3302 = vmatpush1.msra.mxu0 %v2293
    %3303 = vmatprep.subr.mxu0 %v2298
    %3304 = vmatpush1.msra.mxu0 %v2297
    %3305 = vmatprep.subr.mxu0 %v2302
    %3306 = vmatpush1.msra.mxu0 %v2301
    %3307 = vmatprep.subr.mxu0 %v2306
    %3308 = vmatpush1.msra.mxu0 %v2305
    %3309 = vmatprep.subr.mxu0 %v2310
    %3310 = vmatpush1.msra.mxu0 %v2309
    %3311 = vmatprep.subr.mxu0 %v2314
    %3312 = vmatpush1.msra.mxu0 %v2313
    %3313 = vmatprep.subr.mxu0 %v2318
    %3314 = vmatpush1.msra.mxu0 %v2317
    %3315 = vmatprep.subr.mxu0 %v2322
    %3316 = vmatpush1.msra.mxu0 %v2321
    %3317 = vmatprep.subr.mxu0 %v2326
    %3318 = vmatpush1.msra.mxu0 %v2325
    %3319 = vmatprep.subr.mxu0 %v2330
    %3320 = vmatpush1.msra.mxu0 %v2329
    %3321 = vmatprep.subr.mxu0 %v2334
    %3322 = vmatpush1.msra.mxu0 %v2333
    %3323 = vmatprep.subr.mxu0 %v2338
    %3324 = vmatpush1.msra.mxu0 %v2337
    %3325 = vmatprep.subr.mxu0 0.0
    %3326 = vmatpush1.msra.mxu0 0.0
    %3327 = vmatprep.subr.mxu0 0.0
    %3328 = vmatpush1.msra.mxu0 0.0
    %3329 = vmatprep.subr.mxu0 0.0
    %3330 = vmatpush1.msra.mxu0 0.0
    %3331 = vmatprep.subr.mxu0 0.0
    %3332 = vmatpush1.msra.mxu0 0.0
    %3333 = vmatprep.subr.mxu0 0.0
    %3334 = vmatpush1.msra.mxu0 0.0
    %3335 = vmatprep.subr.mxu0 0.0
    %3336 = vmatpush1.msra.mxu0 0.0
    %3337 = vmatprep.subr.mxu0 0.0
    %3338 = vmatpush1.msra.mxu0 0.0
    %3339 = vmatprep.subr.mxu0 0.0
    %3340 = vmatpush1.msra.mxu0 0.0
    %3341 = vmatprep.subr.mxu0 0.0
    %3342 = vmatpush1.msra.mxu0 0.0
    %3343 = vmatprep.subr.mxu0 0.0
    %3344 = vmatpush1.msra.mxu0 0.0
    %3345 = vmatprep.subr.mxu0 0.0
    %3346 = vmatpush1.msra.mxu0 0.0
    %3347 = vmatprep.subr.mxu0 0.0
    %3348 = vmatpush1.msra.mxu0 0.0
    %3349 = vmatprep.subr.mxu0 0.0
    %3350 = vmatpush1.msra.mxu0 0.0
    %3351 = vmatprep.subr.mxu0 0.0
    %3352 = vmatpush1.msra.mxu0 0.0
    %3353 = vmatprep.subr.mxu0 0.0
    %3354 = vmatpush1.msra.mxu0 0.0
    %3355 = vmatprep.subr.mxu0 0.0
    %3356 = vmatpush1.msra.mxu0 0.0
    %3357 = vmatprep.mubr.f32.mxu0 0.0
    %3358 = vmatmul.mubr.f32.gmra.mrb[0].mxu0 %v3216
    %v3359 = vpop.f32.mrb[0].mxu0
    %v3360 = vadd.f32 0.0, %v3359
    %v3361 = vpop.f32.mrb[0].mxu0
    %v3362 = vadd.f32 0.0, %v3361
    %3363 = vdwg.mxu0
    %v3364 = vadd.f32 %v3218, %v3289
    %v3365 = vadd.f32 %v3219, %v3291
    %v3366 = vadd.f32 %v3220, %v3360
    %v3367 = vadd.f32 %v3221, %v3362
    %v3368 = vxor.u32 %v3364, 2147483648
    %v3369 = vmul.f32 %v3368, 1.442695
    %v3370 = vpow.pop %v3369
    %v3371 = vadd.f32 %v3370, 1.0
    %v3372 = vrcp.pop %v3371
    %v3373 = vmul.f32 1.0, %v3372
    %v3374 = vxor.u32 %v3365, 2147483648
    %v3375 = vmul.f32 %v3374, 1.442695
    %v3376 = vpow.pop %v3375
    %v3377 = vadd.f32 %v3376, 1.0
    %v3378 = vrcp.pop %v3377
    %v3379 = vmul.f32 1.0, %v3378
    %v3380 = vtanh.pop %v3366
    %v3381 = vxor.u32 %v3367, 2147483648
    %v3382 = vmul.f32 %v3381, 1.442695
    %v3383 = vpow.pop %v3382
    %v3384 = vadd.f32 %v3383, 1.0
    %v3385 = vrcp.pop %v3384
    %v3386 = vmul.f32 1.0, %v3385
    %v3387 = vmul.f32 %v3379, %v3214
    %v3388 = vmul.f32 %v3373, %v3380
    %v3389 = vadd.f32 %v3387, %v3388
    %v3390 = vtanh.pop %v3389
    %v3391 = vmul.f32 %v3386, %v3390
    %3392 = vst [vmem:[%s1559] sm:$0xff] %v3391
    %v3393 = vld [vmem:[%s1563] sm:$0xff]
    %v3394 = vld [vmem:[%s1563 + $0x8] sm:$0xff]
    %v3395 = vld [vmem:[%s1563 + $0x10] sm:$0xff]
    %v3396 = vld [vmem:[%s1563 + $0x18] sm:$0xff]
    %3397 = vmatprep.subr.mxu0 %v2276
    %3398 = vmatpush1.msra.mxu0 %v2275
    %3399 = vmatprep.subr.mxu0 %v2280
    %3400 = vmatpush1.msra.mxu0 %v2279
    %3401 = vmatprep.subr.mxu0 %v2284
    %3402 = vmatpush1.msra.mxu0 %v2283
    %3403 = vmatprep.subr.mxu0 %v2288
    %3404 = vmatpush1.msra.mxu0 %v2287
    %3405 = vmatprep.subr.mxu0 %v2292
    %3406 = vmatpush1.msra.mxu0 %v2291
    %3407 = vmatprep.subr.mxu0 %v2296
    %3408 = vmatpush1.msra.mxu0 %v2295
    %3409 = vmatprep.subr.mxu0 %v2300
    %3410 = vmatpush1.msra.mxu0 %v2299
    %3411 = vmatprep.subr.mxu0 %v2304
    %3412 = vmatpush1.msra.mxu0 %v2303
    %3413 = vmatprep.subr.mxu0 %v2308
    %3414 = vmatpush1.msra.mxu0 %v2307
    %3415 = vmatprep.subr.mxu0 %v2312
    %3416 = vmatpush1.msra.mxu0 %v2311
    %3417 = vmatprep.subr.mxu0 %v2316
    %3418 = vmatpush1.msra.mxu0 %v2315
    %3419 = vmatprep.subr.mxu0 %v2320
    %3420 = vmatpush1.msra.mxu0 %v2319
    %3421 = vmatprep.subr.mxu0 %v2324
    %3422 = vmatpush1.msra.mxu0 %v2323
    %3423 = vmatprep.subr.mxu0 %v2328
    %3424 = vmatpush1.msra.mxu0 %v2327
    %3425 = vmatprep.subr.mxu0 %v2332
    %3426 = vmatpush1.msra.mxu0 %v2331
    %3427 = vmatprep.subr.mxu0 %v2336
    %3428 = vmatpush1.msra.mxu0 %v2335
    %3429 = vmatprep.subr.mxu0 0.0
    %3430 = vmatpush1.msra.mxu0 0.0
    %3431 = vmatprep.subr.mxu0 0.0
    %3432 = vmatpush1.msra.mxu0 0.0
    %3433 = vmatprep.subr.mxu0 0.0
    %3434 = vmatpush1.msra.mxu0 0.0
    %3435 = vmatprep.subr.mxu0 0.0
    %3436 = vmatpush1.msra.mxu0 0.0
    %3437 = vmatprep.subr.mxu0 0.0
    %3438 = vmatpush1.msra.mxu0 0.0
    %3439 = vmatprep.subr.mxu0 0.0
    %3440 = vmatpush1.msra.mxu0 0.0
    %3441 = vmatprep.subr.mxu0 0.0
    %3442 = vmatpush1.msra.mxu0 0.0
    %3443 = vmatprep.subr.mxu0 0.0
    %3444 = vmatpush1.msra.mxu0 0.0
    %3445 = vmatprep.subr.mxu0 0.0
    %3446 = vmatpush1.msra.mxu0 0.0
    %3447 = vmatprep.subr.mxu0 0.0
    %3448 = vmatpush1.msra.mxu0 0.0
    %3449 = vmatprep.subr.mxu0 0.0
    %3450 = vmatpush1.msra.mxu0 0.0
    %3451 = vmatprep.subr.mxu0 0.0
    %3452 = vmatpush1.msra.mxu0 0.0
    %3453 = vmatprep.subr.mxu0 0.0
    %3454 = vmatpush1.msra.mxu0 0.0
    %3455 = vmatprep.subr.mxu0 0.0
    %3456 = vmatpush1.msra.mxu0 0.0
    %3457 = vmatprep.subr.mxu0 0.0
    %3458 = vmatpush1.msra.mxu0 0.0
    %3459 = vmatprep.subr.mxu0 0.0
    %3460 = vmatpush1.msra.mxu0 0.0
    %3461 = vmatprep.mubr.f32.mxu0 0.0
    %3462 = vmatmul.mubr.f32.gmra.mrb[0].mxu0 %v3391
    %v3463 = vpop.f32.mrb[0].mxu0
    %v3464 = vadd.f32 0.0, %v3463
    %v3465 = vpop.f32.mrb[0].mxu0
    %v3466 = vadd.f32 0.0, %v3465
    %3467 = vdwg.mxu0
    %3468 = vmatprep.subr.mxu0 %v2278
    %3469 = vmatpush1.msra.mxu0 %v2277
    %3470 = vmatprep.subr.mxu0 %v2282
    %3471 = vmatpush1.msra.mxu0 %v2281
    %3472 = vmatprep.subr.mxu0 %v2286
    %3473 = vmatpush1.msra.mxu0 %v2285
    %3474 = vmatprep.subr.mxu0 %v2290
    %3475 = vmatpush1.msra.mxu0 %v2289
    %3476 = vmatprep.subr.mxu0 %v2294
    %3477 = vmatpush1.msra.mxu0 %v2293
    %3478 = vmatprep.subr.mxu0 %v2298
    %3479 = vmatpush1.msra.mxu0 %v2297
    %3480 = vmatprep.subr.mxu0 %v2302
    %3481 = vmatpush1.msra.mxu0 %v2301
    %3482 = vmatprep.subr.mxu0 %v2306
    %3483 = vmatpush1.msra.mxu0 %v2305
    %3484 = vmatprep.subr.mxu0 %v2310
    %3485 = vmatpush1.msra.mxu0 %v2309
    %3486 = vmatprep.subr.mxu0 %v2314
    %3487 = vmatpush1.msra.mxu0 %v2313
    %3488 = vmatprep.subr.mxu0 %v2318
    %3489 = vmatpush1.msra.mxu0 %v2317
    %3490 = vmatprep.subr.mxu0 %v2322
    %3491 = vmatpush1.msra.mxu0 %v2321
    %3492 = vmatprep.subr.mxu0 %v2326
    %3493 = vmatpush1.msra.mxu0 %v2325
    %3494 = vmatprep.subr.mxu0 %v2330
    %3495 = vmatpush1.msra.mxu0 %v2329
    %3496 = vmatprep.subr.mxu0 %v2334
    %3497 = vmatpush1.msra.mxu0 %v2333
    %3498 = vmatprep.subr.mxu0 %v2338
    %3499 = vmatpush1.msra.mxu0 %v2337
    %3500 = vmatprep.subr.mxu0 0.0
    %3501 = vmatpush1.msra.mxu0 0.0
    %3502 = vmatprep.subr.mxu0 0.0
    %3503 = vmatpush1.msra.mxu0 0.0
    %3504 = vmatprep.subr.mxu0 0.0
    %3505 = vmatpush1.msra.mxu0 0.0
    %3506 = vmatprep.subr.mxu0 0.0
    %3507 = vmatpush1.msra.mxu0 0.0
    %3508 = vmatprep.subr.mxu0 0.0
    %3509 = vmatpush1.msra.mxu0 0.0
    %3510 = vmatprep.subr.mxu0 0.0
    %3511 = vmatpush1.msra.mxu0 0.0
    %3512 = vmatprep.subr.mxu0 0.0
    %3513 = vmatpush1.msra.mxu0 0.0
    %3514 = vmatprep.subr.mxu0 0.0
    %3515 = vmatpush1.msra.mxu0 0.0
    %3516 = vmatprep.subr.mxu0 0.0
    %3517 = vmatpush1.msra.mxu0 0.0
    %3518 = vmatprep.subr.mxu0 0.0
    %3519 = vmatpush1.msra.mxu0 0.0
    %3520 = vmatprep.subr.mxu0 0.0
    %3521 = vmatpush1.msra.mxu0 0.0
    %3522 = vmatprep.subr.mxu0 0.0
    %3523 = vmatpush1.msra.mxu0 0.0
    %3524 = vmatprep.subr.mxu0 0.0
    %3525 = vmatpush1.msra.mxu0 0.0
    %3526 = vmatprep.subr.mxu0 0.0
    %3527 = vmatpush1.msra.mxu0 0.0
    %3528 = vmatprep.subr.mxu0 0.0
    %3529 = vmatpush1.msra.mxu0 0.0
    %3530 = vmatprep.subr.mxu0 0.0
    %3531 = vmatpush1.msra.mxu0 0.0
    %3532 = vmatprep.mubr.f32.mxu0 0.0
    %3533 = vmatmul.mubr.f32.gmra.mrb[0].mxu0 %v3391
    %v3534 = vpop.f32.mrb[0].mxu0
    %v3535 = vadd.f32 0.0, %v3534
    %v3536 = vpop.f32.mrb[0].mxu0
    %v3537 = vadd.f32 0.0, %v3536
    %3538 = vdwg.mxu0
    %v3539 = vadd.f32 %v3393, %v3464
    %v3540 = vadd.f32 %v3394, %v3466
    %v3541 = vadd.f32 %v3395, %v3535
    %v3542 = vadd.f32 %v3396, %v3537
    %v3543 = vxor.u32 %v3539, 2147483648
    %v3544 = vmul.f32 %v3543, 1.442695
    %v3545 = vpow.pop %v3544
    %v3546 = vadd.f32 %v3545, 1.0
    %v3547 = vrcp.pop %v3546
    %v3548 = vmul.f32 1.0, %v3547
    %v3549 = vxor.u32 %v3540, 2147483648
    %v3550 = vmul.f32 %v3549, 1.442695
    %v3551 = vpow.pop %v3550
    %v3552 = vadd.f32 %v3551, 1.0
    %v3553 = vrcp.pop %v3552
    %v3554 = vmul.f32 1.0, %v3553
    %v3555 = vtanh.pop %v3541
    %v3556 = vxor.u32 %v3542, 2147483648
    %v3557 = vmul.f32 %v3556, 1.442695
    %v3558 = vpow.pop %v3557
    %v3559 = vadd.f32 %v3558, 1.0
    %v3560 = vrcp.pop %v3559
    %v3561 = vmul.f32 1.0, %v3560
    %v3562 = vmul.f32 %v3554, %v3389
    %v3563 = vmul.f32 %v3548, %v3555
    %v3564 = vadd.f32 %v3562, %v3563
    %v3565 = vtanh.pop %v3564
    %v3566 = vmul.f32 %v3561, %v3565
    %3567 = vst [vmem:[%s1738] sm:$0xff] %v3566
    %v3568 = vld [vmem:[%s1742] sm:$0xff]
    %v3569 = vld [vmem:[%s1742 + $0x8] sm:$0xff]
    %v3570 = vld [vmem:[%s1742 + $0x10] sm:$0xff]
    %v3571 = vld [vmem:[%s1742 + $0x18] sm:$0xff]
    %3572 = vmatprep.subr.mxu0 %v2276
    %3573 = vmatpush1.msra.mxu0 %v2275
    %3574 = vmatprep.subr.mxu0 %v2280
    %3575 = vmatpush1.msra.mxu0 %v2279
    %3576 = vmatprep.subr.mxu0 %v2284
    %3577 = vmatpush1.msra.mxu0 %v2283
    %3578 = vmatprep.subr.mxu0 %v2288
    %3579 = vmatpush1.msra.mxu0 %v2287
    %3580 = vmatprep.subr.mxu0 %v2292
    %3581 = vmatpush1.msra.mxu0 %v2291
    %3582 = vmatprep.subr.mxu0 %v2296
    %3583 = vmatpush1.msra.mxu0 %v2295
    %3584 = vmatprep.subr.mxu0 %v2300
    %3585 = vmatpush1.msra.mxu0 %v2299
    %3586 = vmatprep.subr.mxu0 %v2304
    %3587 = vmatpush1.msra.mxu0 %v2303
    %3588 = vmatprep.subr.mxu0 %v2308
    %3589 = vmatpush1.msra.mxu0 %v2307
    %3590 = vmatprep.subr.mxu0 %v2312
    %3591 = vmatpush1.msra.mxu0 %v2311
    %3592 = vmatprep.subr.mxu0 %v2316
    %3593 = vmatpush1.msra.mxu0 %v2315
    %3594 = vmatprep.subr.mxu0 %v2320
    %3595 = vmatpush1.msra.mxu0 %v2319
    %3596 = vmatprep.subr.mxu0 %v2324
    %3597 = vmatpush1.msra.mxu0 %v2323
    %3598 = vmatprep.subr.mxu0 %v2328
    %3599 = vmatpush1.msra.mxu0 %v2327
    %3600 = vmatprep.subr.mxu0 %v2332
    %3601 = vmatpush1.msra.mxu0 %v2331
    %3602 = vmatprep.subr.mxu0 %v2336
    %3603 = vmatpush1.msra.mxu0 %v2335
    %3604 = vmatprep.subr.mxu0 0.0
    %3605 = vmatpush1.msra.mxu0 0.0
    %3606 = vmatprep.subr.mxu0 0.0
    %3607 = vmatpush1.msra.mxu0 0.0
    %3608 = vmatprep.subr.mxu0 0.0
    %3609 = vmatpush1.msra.mxu0 0.0
    %3610 = vmatprep.subr.mxu0 0.0
    %3611 = vmatpush1.msra.mxu0 0.0
    %3612 = vmatprep.subr.mxu0 0.0
    %3613 = vmatpush1.msra.mxu0 0.0
    %3614 = vmatprep.subr.mxu0 0.0
    %3615 = vmatpush1.msra.mxu0 0.0
    %3616 = vmatprep.subr.mxu0 0.0
    %3617 = vmatpush1.msra.mxu0 0.0
    %3618 = vmatprep.subr.mxu0 0.0
    %3619 = vmatpush1.msra.mxu0 0.0
    %3620 = vmatprep.subr.mxu0 0.0
    %3621 = vmatpush1.msra.mxu0 0.0
    %3622 = vmatprep.subr.mxu0 0.0
    %3623 = vmatpush1.msra.mxu0 0.0
    %3624 = vmatprep.subr.mxu0 0.0
    %3625 = vmatpush1.msra.mxu0 0.0
    %3626 = vmatprep.subr.mxu0 0.0
    %3627 = vmatpush1.msra.mxu0 0.0
    %3628 = vmatprep.subr.mxu0 0.0
    %3629 = vmatpush1.msra.mxu0 0.0
    %3630 = vmatprep.subr.mxu0 0.0
    %3631 = vmatpush1.msra.mxu0 0.0
    %3632 = vmatprep.subr.mxu0 0.0
    %3633 = vmatpush1.msra.mxu0 0.0
    %3634 = vmatprep.subr.mxu0 0.0
    %3635 = vmatpush1.msra.mxu0 0.0
    %3636 = vmatprep.mubr.f32.mxu0 0.0
    %3637 = vmatmul.mubr.f32.gmra.mrb[0].mxu0 %v3566
    %v3638 = vpop.f32.mrb[0].mxu0
    %v3639 = vadd.f32 0.0, %v3638
    %v3640 = vpop.f32.mrb[0].mxu0
    %v3641 = vadd.f32 0.0, %v3640
    %3642 = vdwg.mxu0
    %3643 = vmatprep.subr.mxu0 %v2278
    %3644 = vmatpush1.msra.mxu0 %v2277
    %3645 = vmatprep.subr.mxu0 %v2282
    %3646 = vmatpush1.msra.mxu0 %v2281
    %3647 = vmatprep.subr.mxu0 %v2286
    %3648 = vmatpush1.msra.mxu0 %v2285
    %3649 = vmatprep.subr.mxu0 %v2290
    %3650 = vmatpush1.msra.mxu0 %v2289
    %3651 = vmatprep.subr.mxu0 %v2294
    %3652 = vmatpush1.msra.mxu0 %v2293
    %3653 = vmatprep.subr.mxu0 %v2298
    %3654 = vmatpush1.msra.mxu0 %v2297
    %3655 = vmatprep.subr.mxu0 %v2302
    %3656 = vmatpush1.msra.mxu0 %v2301
    %3657 = vmatprep.subr.mxu0 %v2306
    %3658 = vmatpush1.msra.mxu0 %v2305
    %3659 = vmatprep.subr.mxu0 %v2310
    %3660 = vmatpush1.msra.mxu0 %v2309
    %3661 = vmatprep.subr.mxu0 %v2314
    %3662 = vmatpush1.msra.mxu0 %v2313
    %3663 = vmatprep.subr.mxu0 %v2318
    %3664 = vmatpush1.msra.mxu0 %v2317
    %3665 = vmatprep.subr.mxu0 %v2322
    %3666 = vmatpush1.msra.mxu0 %v2321
    %3667 = vmatprep.subr.mxu0 %v2326
    %3668 = vmatpush1.msra.mxu0 %v2325
    %3669 = vmatprep.subr.mxu0 %v2330
    %3670 = vmatpush1.msra.mxu0 %v2329
    %3671 = vmatprep.subr.mxu0 %v2334
    %3672 = vmatpush1.msra.mxu0 %v2333
    %3673 = vmatprep.subr.mxu0 %v2338
    %3674 = vmatpush1.msra.mxu0 %v2337
    %3675 = vmatprep.subr.mxu0 0.0
    %3676 = vmatpush1.msra.mxu0 0.0
    %3677 = vmatprep.subr.mxu0 0.0
    %3678 = vmatpush1.msra.mxu0 0.0
    %3679 = vmatprep.subr.mxu0 0.0
    %3680 = vmatpush1.msra.mxu0 0.0
    %3681 = vmatprep.subr.mxu0 0.0
    %3682 = vmatpush1.msra.mxu0 0.0
    %3683 = vmatprep.subr.mxu0 0.0
    %3684 = vmatpush1.msra.mxu0 0.0
    %3685 = vmatprep.subr.mxu0 0.0
    %3686 = vmatpush1.msra.mxu0 0.0
    %3687 = vmatprep.subr.mxu0 0.0
    %3688 = vmatpush1.msra.mxu0 0.0
    %3689 = vmatprep.subr.mxu0 0.0
    %3690 = vmatpush1.msra.mxu0 0.0
    %3691 = vmatprep.subr.mxu0 0.0
    %3692 = vmatpush1.msra.mxu0 0.0
    %3693 = vmatprep.subr.mxu0 0.0
    %3694 = vmatpush1.msra.mxu0 0.0
    %3695 = vmatprep.subr.mxu0 0.0
    %3696 = vmatpush1.msra.mxu0 0.0
    %3697 = vmatprep.subr.mxu0 0.0
    %3698 = vmatpush1.msra.mxu0 0.0
    %3699 = vmatprep.subr.mxu0 0.0
    %3700 = vmatpush1.msra.mxu0 0.0
    %3701 = vmatprep.subr.mxu0 0.0
    %3702 = vmatpush1.msra.mxu0 0.0
    %3703 = vmatprep.subr.mxu0 0.0
    %3704 = vmatpush1.msra.mxu0 0.0
    %3705 = vmatprep.subr.mxu0 0.0
    %3706 = vmatpush1.msra.mxu0 0.0
    %3707 = vmatprep.mubr.f32.mxu0 0.0
    %3708 = vmatmul.mubr.f32.gmra.mrb[0].mxu0 %v3566
    %v3709 = vpop.f32.mrb[0].mxu0
    %v3710 = vadd.f32 0.0, %v3709
    %v3711 = vpop.f32.mrb[0].mxu0
    %v3712 = vadd.f32 0.0, %v3711
    %3713 = vdwg.mxu0
    %v3714 = vadd.f32 %v3568, %v3639
    %v3715 = vadd.f32 %v3569, %v3641
    %v3716 = vadd.f32 %v3570, %v3710
    %v3717 = vadd.f32 %v3571, %v3712
    %v3718 = vxor.u32 %v3714, 2147483648
    %v3719 = vmul.f32 %v3718, 1.442695
    %v3720 = vpow.pop %v3719
    %v3721 = vadd.f32 %v3720, 1.0
    %v3722 = vrcp.pop %v3721
    %v3723 = vmul.f32 1.0, %v3722
    %v3724 = vxor.u32 %v3715, 2147483648
    %v3725 = vmul.f32 %v3724, 1.442695
    %v3726 = vpow.pop %v3725
    %v3727 = vadd.f32 %v3726, 1.0
    %v3728 = vrcp.pop %v3727
    %v3729 = vmul.f32 1.0, %v3728
    %v3730 = vtanh.pop %v3716
    %v3731 = vxor.u32 %v3717, 2147483648
    %v3732 = vmul.f32 %v3731, 1.442695
    %v3733 = vpow.pop %v3732
    %v3734 = vadd.f32 %v3733, 1.0
    %v3735 = vrcp.pop %v3734
    %v3736 = vmul.f32 1.0, %v3735
    %v3737 = vmul.f32 %v3729, %v3564
    %v3738 = vmul.f32 %v3723, %v3730
    %v3739 = vadd.f32 %v3737, %v3738
    %v3740 = vtanh.pop %v3739
    %v3741 = vmul.f32 %v3736, %v3740
    %3742 = vst [vmem:[%s1917] sm:$0xff] %v3741
    %s3743 = scalar_lea.vmem %s8, 8
    %3744 = vst [vmem:[%s3743] sm:$0xff] %v3741
    %s3745 = scalar_lea.vmem %s9, 8
    %3746 = vst [vmem:[%s3745] sm:$0xff] %v3739
    // Predicated region
    $region42: #{decoder_forward.2} parent=1 // pred_check
      _
    $region43: #{decoder_forward.2} parent=1 // pred_check_branch
      %3748 = sbr.rel (0) target = $region45
    $region44: #{decoder_forward.2} parent=1 // pred_region
      _
    $region45: #{decoder_forward.2} parent=1 // pred_fallthru
      _
    // Predicated region
    $region46: #{decoder_forward.2} parent=1 // pred_check
      _
    $region47: #{decoder_forward.2} parent=1 // pred_check_branch
      %3750 = sbr.rel (0) target = $region49
    $region48: #{decoder_forward.2} parent=1 // pred_region
      _
    $region49: #{decoder_forward.2} parent=1 // pred_fallthru
      _
    // Predicated region
    $region50: #{decoder_forward.2} parent=1 // pred_check
      _
    $region51: #{decoder_forward.2} parent=1 // pred_check_branch
      %3752 = sbr.rel (0) target = $region53
    $region52: #{decoder_forward.2} parent=1 // pred_region
      _
    $region53: #{decoder_forward.2} parent=1 // pred_fallthru
      _
    // Predicated region
    $region54: #{decoder_forward.2} parent=1 // pred_check
      _
    $region55: #{decoder_forward.2} parent=1 // pred_check_branch
      %3754 = sbr.rel (0) target = $region57
    $region56: #{decoder_forward.2} parent=1 // pred_region
      _
    $region57: #{decoder_forward.2} parent=1 // pred_fallthru
      _
    // Predicated region
    $region58: #{decoder_forward.2} parent=1 // pred_check
      _
    $region59: #{decoder_forward.2} parent=1 // pred_check_branch
      %3756 = sbr.rel (0) target = $region61
    $region60: #{decoder_forward.2} parent=1 // pred_region
      _
    $region61: #{decoder_forward.2} parent=1 // pred_fallthru
      _
    // Predicated region
    $region62: #{decoder_forward.2} parent=1 // pred_check
      _
    $region63: #{decoder_forward.2} parent=1 // pred_check_branch
      %3758 = sbr.rel (0) target = $region65
    $region64: #{decoder_forward.2} parent=1 // pred_region
      _
    $region65: #{decoder_forward.2} parent=1 // pred_fallthru
      _
    %3759 = vsyncpa [#allocation4], 1
    %3760 = vsyncpa [#allocation6], 1

</llo_original>
